<compile_context>
chip_gen: v7x
topology: tpu7x:2x2x1
jax: 0.10.0
libtpu: 0.0.40
codegen_flags: <defaults>
</compile_context>

<pallas_src>
import functools

import jax
import jax.numpy as jnp
from jax.experimental import pallas as pl
from jax.experimental.pallas import tpu as pltpu


# ---------------------------------------------------------------------------
# Fused encoder kernel: both LSTM stacks, all layers, single grid step.
# ---------------------------------------------------------------------------
def _encoder_kernel(x_ref, *refs, n_layers, seq_len, seq_num, batch, hidden_dim):
    H = hidden_dim
    nw = 3 * n_layers
    seq_w = refs[:nw]                      # sequence_rnn weights (w_ih, w_hh, b) per layer
    ctx_w = refs[nw:2 * nw]                # context_rnn  weights (w_ih, w_hh, b) per layer
    h_out_ref = refs[2 * nw]               # (n_layers*batch, H)
    c_out_ref = refs[2 * nw + 1]           # (n_layers*batch, H)
    seq_scr = refs[2 * nw + 2]             # (seq_len*seq_num*batch, H) inter-layer buffer

    def run_stack(x2d, w_refs, T, Bp):
        """Multi-layer LSTM. x2d: (T*Bp, D) time-major-flattened input value.
        Returns lists of final (h, c) per layer, each (Bp, H)."""
        hs, cs = [], []
        for layer in range(n_layers):
            w_ih = w_refs[3 * layer][...]                     # (D, 4H)
            w_hh = w_refs[3 * layer + 1][...]                 # (H, 4H)
            b = w_refs[3 * layer + 2][...]                    # (1, 4H)
            last = layer == n_layers - 1

            # Hoisted input projection: one large MXU matmul for all T steps.
            pre = jnp.dot(x2d, w_ih, preferred_element_type=jnp.float32) + b

            h = jnp.zeros((Bp, H), jnp.float32)
            c = jnp.zeros((Bp, H), jnp.float32)
            for t in range(T):                                # fully unrolled
                gates = pre[t * Bp:(t + 1) * Bp, :] + jnp.dot(
                    h, w_hh, preferred_element_type=jnp.float32)
                i_g = jax.nn.sigmoid(gates[:, 0 * H:1 * H])
                f_g = jax.nn.sigmoid(gates[:, 1 * H:2 * H])
                g_g = jnp.tanh(gates[:, 2 * H:3 * H])
                o_g = jax.nn.sigmoid(gates[:, 3 * H:4 * H])
                c = f_g * c + i_g * g_g
                h = o_g * jnp.tanh(c)
                if not last:                                  # feed next layer only
                    seq_scr[t * Bp:(t + 1) * Bp, :] = h
            hs.append(h)
            cs.append(c)
            if not last:
                x2d = seq_scr[0:T * Bp, :]
        return hs, cs

    # --- sequence RNN over tokens: T = seq_len, "batch" = seq_num*batch rows
    #     (rows ordered s*B + b).
    seq_h, _ = run_stack(x_ref[...], seq_w, seq_len, seq_num * batch)

    # Last layer's final hidden == seq_out[:, -1, :], already laid out as the
    # time-major-flattened (seq_num, batch, H) input of the context RNN.
    ctx_h, ctx_c = run_stack(seq_h[-1], ctx_w, seq_num, batch)

    for layer in range(n_layers):
        h_out_ref[layer * batch:(layer + 1) * batch, :] = ctx_h[layer]
        c_out_ref[layer * batch:(layer + 1) * batch, :] = ctx_c[layer]


def encoder_forward_pallas(params, x, *, emb_dim, hidden_dim, n_layers):
    """x: (B, S, L) int32 token ids. Returns (h_n, c_n): (n_layers, B, H) each."""
    B, S, L = x.shape
    H = hidden_dim

    emb = jnp.take(params["embedding"], x, axis=0)            # (B, S, L, E) glue: gather
    # Time-major over tokens with rows ordered (s*B + b): the sequence stack's
    # final hidden then directly equals the context stack's flattened input.
    x2d = jnp.transpose(emb, (2, 1, 0, 3)).reshape(L * S * B, emb_dim)

    flat_w = []
    for stack in ("sequence_rnn", "context_rnn"):
        for w_ih, w_hh, b in params[stack]:
            flat_w += [w_ih, w_hh, b.reshape(1, 4 * H)]

    kernel = functools.partial(
        _encoder_kernel, n_layers=n_layers, seq_len=L, seq_num=S,
        batch=B, hidden_dim=H)

    vmem = pl.BlockSpec(memory_space=pltpu.MemorySpace.VMEM)
    h2d, c2d = pl.pallas_call(
        kernel,
        out_shape=(jax.ShapeDtypeStruct((n_layers * B, H), jnp.float32),
                   jax.ShapeDtypeStruct((n_layers * B, H), jnp.float32)),
        in_specs=[vmem] * (1 + len(flat_w)),
        out_specs=(vmem, vmem),
        scratch_shapes=[pltpu.VMEM((L * S * B, H), jnp.float32)],
    )(x2d, *flat_w)

    return h2d.reshape(n_layers, B, H), c2d.reshape(n_layers, B, H)


# ---------------------------------------------------------------------------
# Parameter construction (deterministic, PyTorch-LSTM-equivalent shapes)
# ---------------------------------------------------------------------------
def init_params(key, vocab_size, emb_dim, hidden_dim, n_layers):
    def uni(k, shape, scale):
        return jax.random.uniform(k, shape, jnp.float32, -scale, scale)

    keys = jax.random.split(key, 64)
    ki = iter(keys)
    s = 1.0 / jnp.sqrt(hidden_dim)

    params = {"embedding": jax.random.normal(next(ki), (vocab_size, emb_dim),
                                             jnp.float32) * 0.1}

    def make_stack(in_dim0):
        stack = []
        for layer in range(n_layers):
            d_in = in_dim0 if layer == 0 else hidden_dim
            w_ih = uni(next(ki), (d_in, 4 * hidden_dim), s)          # (D, 4H)
            w_hh = uni(next(ki), (hidden_dim, 4 * hidden_dim), s)    # (H, 4H)
            b = (uni(next(ki), (4 * hidden_dim,), s)
                 + uni(next(ki), (4 * hidden_dim,), s))              # b_ih + b_hh
            stack.append((w_ih, w_hh, b))
        return stack

    params["sequence_rnn"] = make_stack(emb_dim)
    params["context_rnn"] = make_stack(hidden_dim)
    return params


# ---------------------------------------------------------------------------
# Pure-JAX reference (mirrors the PyTorch module, layout-independent check)
# ---------------------------------------------------------------------------
def _lstm_layer_ref(x_tbd, w_ih, w_hh, b):
    H = w_hh.shape[0]

    def step(carry, x_t):
        h, c = carry
        gates = x_t @ w_ih + h @ w_hh + b
        i = jax.nn.sigmoid(gates[:, 0 * H:1 * H])
        f = jax.nn.sigmoid(gates[:, 1 * H:2 * H])
        g = jnp.tanh(gates[:, 2 * H:3 * H])
        o = jax.nn.sigmoid(gates[:, 3 * H:4 * H])
        c = f * c + i * g
        h = o * jnp.tanh(c)
        return (h, c), h

    B = x_tbd.shape[1]
    init = (jnp.zeros((B, H), jnp.float32), jnp.zeros((B, H), jnp.float32))
    (h, c), seq = jax.lax.scan(step, init, x_tbd)
    return seq, h, c


def encoder_forward_ref(params, x, *, emb_dim, hidden_dim, n_layers):
    B, S, L = x.shape
    emb = jnp.take(params["embedding"], x, axis=0).reshape(B * S, L, emb_dim)
    seq = jnp.transpose(emb, (1, 0, 2))                       # (L, B*S, E)
    for w_ih, w_hh, b in params["sequence_rnn"]:
        seq, _, _ = _lstm_layer_ref(seq, w_ih, w_hh, b)
    seq_last = seq[-1]                                        # (B*S, H)
    ctx = jnp.transpose(seq_last.reshape(B, S, hidden_dim), (1, 0, 2))  # (S, B, H)
    hs, cs = [], []
    for w_ih, w_hh, b in params["context_rnn"]:
        ctx, h, c = _lstm_layer_ref(ctx, w_ih, w_hh, b)
        hs.append(h)
        cs.append(c)
    return jnp.stack(hs), jnp.stack(cs)


if __name__ == "__main__":
    # config (small, consistent with the module)
    vocab_size, emb_dim, hidden_dim, n_layers = 50, 32, 32, 2
    batch, seq_num, seq_len = 2, 4, 8

    key = jax.random.PRNGKey(0)
    k_param, k_x = jax.random.split(key)
    params = init_params(k_param, vocab_size, emb_dim, hidden_dim, n_layers)
    x = jax.random.randint(k_x, (batch, seq_num, seq_len), 0, vocab_size, jnp.int32)

    h_n, c_n = encoder_forward_pallas(params, x, emb_dim=emb_dim,
                                      hidden_dim=hidden_dim, n_layers=n_layers)
    jax.block_until_ready((h_n, c_n))

    # sanity-check against pure-JAX reference
    h_ref, c_ref = encoder_forward_ref(params, x, emb_dim=emb_dim,
                                       hidden_dim=hidden_dim, n_layers=n_layers)
    assert h_n.shape == (n_layers, batch, hidden_dim)
    assert c_n.shape == (n_layers, batch, hidden_dim)
    assert jnp.allclose(h_n, h_ref, rtol=1e-5, atol=1e-5)
    assert jnp.allclose(c_n, c_ref, rtol=1e-5, atol=1e-5)

    print("KERNEL_OK")
</pallas_src>

<mosaic_0001>
module attributes {stable_mosaic.version = 11 : i64} {
  func.func @_encoder_kernel(%arg0: memref<64x32xf32, #tpu.memory_space<vmem>>, %arg1: memref<32x128xf32, #tpu.memory_space<vmem>>, %arg2: memref<32x128xf32, #tpu.memory_space<vmem>>, %arg3: memref<1x128xf32, #tpu.memory_space<vmem>>, %arg4: memref<32x128xf32, #tpu.memory_space<vmem>>, %arg5: memref<32x128xf32, #tpu.memory_space<vmem>>, %arg6: memref<1x128xf32, #tpu.memory_space<vmem>>, %arg7: memref<32x128xf32, #tpu.memory_space<vmem>>, %arg8: memref<32x128xf32, #tpu.memory_space<vmem>>, %arg9: memref<1x128xf32, #tpu.memory_space<vmem>>, %arg10: memref<32x128xf32, #tpu.memory_space<vmem>>, %arg11: memref<32x128xf32, #tpu.memory_space<vmem>>, %arg12: memref<1x128xf32, #tpu.memory_space<vmem>>, %arg13: memref<4x32xf32, #tpu.memory_space<vmem>>, %arg14: memref<4x32xf32, #tpu.memory_space<vmem>>, %arg15: memref<64x32xf32, #tpu.memory_space<vmem>>) attributes {dimension_semantics = [], scalar_prefetch = 0 : i64, scratch_operands = 1 : i64, tpu.core_type = #tpu.core_type<tc>} {
    %c0 = arith.constant 0 : index
    %c0_0 = arith.constant 0 : index
    %0 = vector.load %arg0[%c0, %c0_0] : memref<64x32xf32, #tpu.memory_space<vmem>>, vector<64x32xf32>
    %c0_1 = arith.constant 0 : index
    %c0_2 = arith.constant 0 : index
    %1 = vector.load %arg1[%c0_1, %c0_2] : memref<32x128xf32, #tpu.memory_space<vmem>>, vector<32x128xf32>
    %c0_3 = arith.constant 0 : index
    %c0_4 = arith.constant 0 : index
    %2 = vector.load %arg2[%c0_3, %c0_4] : memref<32x128xf32, #tpu.memory_space<vmem>>, vector<32x128xf32>
    %c0_5 = arith.constant 0 : index
    %c0_6 = arith.constant 0 : index
    %3 = vector.load %arg3[%c0_5, %c0_6] : memref<1x128xf32, #tpu.memory_space<vmem>>, vector<1x128xf32>
    %cst = arith.constant dense<0.000000e+00> : vector<64x128xf32>
    %4 = tpu.matmul %0, %1, %cst {dimension_numbers = #tpu.dot_dimension_numbers<[1], [0], [0], [1], [0, 0, 1, 1], [], []>} : vector<64x32xf32>, vector<32x128xf32>, vector<64x128xf32> -> vector<64x128xf32>
    %5 = vector.broadcast %3 : vector<1x128xf32> to vector<64x128xf32>
    %6 = arith.addf %4, %5 : vector<64x128xf32>
    %cst_7 = arith.constant 0.000000e+00 : f32
    %7 = vector.broadcast %cst_7 : f32 to vector<8x32xf32>
    %cst_8 = arith.constant 0.000000e+00 : f32
    %8 = vector.broadcast %cst_8 : f32 to vector<8x32xf32>
    %9 = vector.extract_strided_slice %6 {offsets = [0, 0], sizes = [8, 128], strides = [1, 1]} : vector<64x128xf32> to vector<8x128xf32>
    %cst_9 = arith.constant dense<0.000000e+00> : vector<8x128xf32>
    %10 = tpu.matmul %7, %2, %cst_9 {dimension_numbers = #tpu.dot_dimension_numbers<[1], [0], [0], [1], [0, 0, 1, 1], [], []>} : vector<8x32xf32>, vector<32x128xf32>, vector<8x128xf32> -> vector<8x128xf32>
    %11 = arith.addf %9, %10 : vector<8x128xf32>
    %12 = vector.extract_strided_slice %11 {offsets = [0, 0], sizes = [8, 32], strides = [1, 1]} : vector<8x128xf32> to vector<8x32xf32>
    %13 = arith.negf %12 : vector<8x32xf32>
    %14 = math.exp %13 : vector<8x32xf32>
    %cst_10 = arith.constant 1.000000e+00 : f32
    %15 = vector.broadcast %cst_10 : f32 to vector<8x32xf32>
    %16 = arith.addf %15, %14 : vector<8x32xf32>
    %17 = arith.divf %15, %16 : vector<8x32xf32>
    %18 = vector.extract_strided_slice %11 {offsets = [0, 32], sizes = [8, 32], strides = [1, 1]} : vector<8x128xf32> to vector<8x32xf32>
    %19 = arith.negf %18 : vector<8x32xf32>
    %20 = math.exp %19 : vector<8x32xf32>
    %cst_11 = arith.constant 1.000000e+00 : f32
    %21 = vector.broadcast %cst_11 : f32 to vector<8x32xf32>
    %22 = arith.addf %21, %20 : vector<8x32xf32>
    %23 = arith.divf %21, %22 : vector<8x32xf32>
    %24 = vector.extract_strided_slice %11 {offsets = [0, 64], sizes = [8, 32], strides = [1, 1]} : vector<8x128xf32> to vector<8x32xf32>
    %25 = math.tanh %24 : vector<8x32xf32>
    %26 = vector.extract_strided_slice %11 {offsets = [0, 96], sizes = [8, 32], strides = [1, 1]} : vector<8x128xf32> to vector<8x32xf32>
    %27 = arith.negf %26 : vector<8x32xf32>
    %28 = math.exp %27 : vector<8x32xf32>
    %cst_12 = arith.constant 1.000000e+00 : f32
    %29 = vector.broadcast %cst_12 : f32 to vector<8x32xf32>
    %30 = arith.addf %29, %28 : vector<8x32xf32>
    %31 = arith.divf %29, %30 : vector<8x32xf32>
    %32 = arith.mulf %23, %8 : vector<8x32xf32>
    %33 = arith.mulf %17, %25 : vector<8x32xf32>
    %34 = arith.addf %32, %33 : vector<8x32xf32>
    %35 = math.tanh %34 : vector<8x32xf32>
    %36 = arith.mulf %31, %35 : vector<8x32xf32>
    %c0_13 = arith.constant 0 : index
    %c0_14 = arith.constant 0 : index
    %37 = vector.load %arg15[%c0_13, %c0_14] : memref<64x32xf32, #tpu.memory_space<vmem>>, vector<8x32xf32>
    tpu.vector_store %arg15[%c0_13, %c0_14], %36 {strides = array<i32>} : memref<64x32xf32, #tpu.memory_space<vmem>>, vector<8x32xf32>,
    %38 = vector.extract_strided_slice %6 {offsets = [8, 0], sizes = [8, 128], strides = [1, 1]} : vector<64x128xf32> to vector<8x128xf32>
    %cst_15 = arith.constant dense<0.000000e+00> : vector<8x128xf32>
    %39 = tpu.matmul %36, %2, %cst_15 {dimension_numbers = #tpu.dot_dimension_numbers<[1], [0], [0], [1], [0, 0, 1, 1], [], []>} : vector<8x32xf32>, vector<32x128xf32>, vector<8x128xf32> -> vector<8x128xf32>
    %40 = arith.addf %38, %39 : vector<8x128xf32>
    %41 = vector.extract_strided_slice %40 {offsets = [0, 0], sizes = [8, 32], strides = [1, 1]} : vector<8x128xf32> to vector<8x32xf32>
    %42 = arith.negf %41 : vector<8x32xf32>
    %43 = math.exp %42 : vector<8x32xf32>
    %cst_16 = arith.constant 1.000000e+00 : f32
    %44 = vector.broadcast %cst_16 : f32 to vector<8x32xf32>
    %45 = arith.addf %44, %43 : vector<8x32xf32>
    %46 = arith.divf %44, %45 : vector<8x32xf32>
    %47 = vector.extract_strided_slice %40 {offsets = [0, 32], sizes = [8, 32], strides = [1, 1]} : vector<8x128xf32> to vector<8x32xf32>
    %48 = arith.negf %47 : vector<8x32xf32>
    %49 = math.exp %48 : vector<8x32xf32>
    %cst_17 = arith.constant 1.000000e+00 : f32
    %50 = vector.broadcast %cst_17 : f32 to vector<8x32xf32>
    %51 = arith.addf %50, %49 : vector<8x32xf32>
    %52 = arith.divf %50, %51 : vector<8x32xf32>
    %53 = vector.extract_strided_slice %40 {offsets = [0, 64], sizes = [8, 32], strides = [1, 1]} : vector<8x128xf32> to vector<8x32xf32>
    %54 = math.tanh %53 : vector<8x32xf32>
    %55 = vector.extract_strided_slice %40 {offsets = [0, 96], sizes = [8, 32], strides = [1, 1]} : vector<8x128xf32> to vector<8x32xf32>
    %56 = arith.negf %55 : vector<8x32xf32>
    %57 = math.exp %56 : vector<8x32xf32>
    %cst_18 = arith.constant 1.000000e+00 : f32
    %58 = vector.broadcast %cst_18 : f32 to vector<8x32xf32>
    %59 = arith.addf %58, %57 : vector<8x32xf32>
    %60 = arith.divf %58, %59 : vector<8x32xf32>
    %61 = arith.mulf %52, %34 : vector<8x32xf32>
    %62 = arith.mulf %46, %54 : vector<8x32xf32>
    %63 = arith.addf %61, %62 : vector<8x32xf32>
    %64 = math.tanh %63 : vector<8x32xf32>
    %65 = arith.mulf %60, %64 : vector<8x32xf32>
    %c8 = arith.constant 8 : index
    %c0_19 = arith.constant 0 : index
    %66 = vector.load %arg15[%c8, %c0_19] : memref<64x32xf32, #tpu.memory_space<vmem>>, vector<8x32xf32>
    tpu.vector_store %arg15[%c8, %c0_19], %65 {strides = array<i32>} : memref<64x32xf32, #tpu.memory_space<vmem>>, vector<8x32xf32>,
    %67 = vector.extract_strided_slice %6 {offsets = [16, 0], sizes = [8, 128], strides = [1, 1]} : vector<64x128xf32> to vector<8x128xf32>
    %cst_20 = arith.constant dense<0.000000e+00> : vector<8x128xf32>
    %68 = tpu.matmul %65, %2, %cst_20 {dimension_numbers = #tpu.dot_dimension_numbers<[1], [0], [0], [1], [0, 0, 1, 1], [], []>} : vector<8x32xf32>, vector<32x128xf32>, vector<8x128xf32> -> vector<8x128xf32>
    %69 = arith.addf %67, %68 : vector<8x128xf32>
    %70 = vector.extract_strided_slice %69 {offsets = [0, 0], sizes = [8, 32], strides = [1, 1]} : vector<8x128xf32> to vector<8x32xf32>
    %71 = arith.negf %70 : vector<8x32xf32>
    %72 = math.exp %71 : vector<8x32xf32>
    %cst_21 = arith.constant 1.000000e+00 : f32
    %73 = vector.broadcast %cst_21 : f32 to vector<8x32xf32>
    %74 = arith.addf %73, %72 : vector<8x32xf32>
    %75 = arith.divf %73, %74 : vector<8x32xf32>
    %76 = vector.extract_strided_slice %69 {offsets = [0, 32], sizes = [8, 32], strides = [1, 1]} : vector<8x128xf32> to vector<8x32xf32>
    %77 = arith.negf %76 : vector<8x32xf32>
    %78 = math.exp %77 : vector<8x32xf32>
    %cst_22 = arith.constant 1.000000e+00 : f32
    %79 = vector.broadcast %cst_22 : f32 to vector<8x32xf32>
    %80 = arith.addf %79, %78 : vector<8x32xf32>
    %81 = arith.divf %79, %80 : vector<8x32xf32>
    %82 = vector.extract_strided_slice %69 {offsets = [0, 64], sizes = [8, 32], strides = [1, 1]} : vector<8x128xf32> to vector<8x32xf32>
    %83 = math.tanh %82 : vector<8x32xf32>
    %84 = vector.extract_strided_slice %69 {offsets = [0, 96], sizes = [8, 32], strides = [1, 1]} : vector<8x128xf32> to vector<8x32xf32>
    %85 = arith.negf %84 : vector<8x32xf32>
    %86 = math.exp %85 : vector<8x32xf32>
    %cst_23 = arith.constant 1.000000e+00 : f32
    %87 = vector.broadcast %cst_23 : f32 to vector<8x32xf32>
    %88 = arith.addf %87, %86 : vector<8x32xf32>
    %89 = arith.divf %87, %88 : vector<8x32xf32>
    %90 = arith.mulf %81, %63 : vector<8x32xf32>
    %91 = arith.mulf %75, %83 : vector<8x32xf32>
    %92 = arith.addf %90, %91 : vector<8x32xf32>
    %93 = math.tanh %92 : vector<8x32xf32>
    %94 = arith.mulf %89, %93 : vector<8x32xf32>
    %c16 = arith.constant 16 : index
    %c0_24 = arith.constant 0 : index
    %95 = vector.load %arg15[%c16, %c0_24] : memref<64x32xf32, #tpu.memory_space<vmem>>, vector<8x32xf32>
    tpu.vector_store %arg15[%c16, %c0_24], %94 {strides = array<i32>} : memref<64x32xf32, #tpu.memory_space<vmem>>, vector<8x32xf32>,
    %96 = vector.extract_strided_slice %6 {offsets = [24, 0], sizes = [8, 128], strides = [1, 1]} : vector<64x128xf32> to vector<8x128xf32>
    %cst_25 = arith.constant dense<0.000000e+00> : vector<8x128xf32>
    %97 = tpu.matmul %94, %2, %cst_25 {dimension_numbers = #tpu.dot_dimension_numbers<[1], [0], [0], [1], [0, 0, 1, 1], [], []>} : vector<8x32xf32>, vector<32x128xf32>, vector<8x128xf32> -> vector<8x128xf32>
    %98 = arith.addf %96, %97 : vector<8x128xf32>
    %99 = vector.extract_strided_slice %98 {offsets = [0, 0], sizes = [8, 32], strides = [1, 1]} : vector<8x128xf32> to vector<8x32xf32>
    %100 = arith.negf %99 : vector<8x32xf32>
    %101 = math.exp %100 : vector<8x32xf32>
    %cst_26 = arith.constant 1.000000e+00 : f32
    %102 = vector.broadcast %cst_26 : f32 to vector<8x32xf32>
    %103 = arith.addf %102, %101 : vector<8x32xf32>
    %104 = arith.divf %102, %103 : vector<8x32xf32>
    %105 = vector.extract_strided_slice %98 {offsets = [0, 32], sizes = [8, 32], strides = [1, 1]} : vector<8x128xf32> to vector<8x32xf32>
    %106 = arith.negf %105 : vector<8x32xf32>
    %107 = math.exp %106 : vector<8x32xf32>
    %cst_27 = arith.constant 1.000000e+00 : f32
    %108 = vector.broadcast %cst_27 : f32 to vector<8x32xf32>
    %109 = arith.addf %108, %107 : vector<8x32xf32>
    %110 = arith.divf %108, %109 : vector<8x32xf32>
    %111 = vector.extract_strided_slice %98 {offsets = [0, 64], sizes = [8, 32], strides = [1, 1]} : vector<8x128xf32> to vector<8x32xf32>
    %112 = math.tanh %111 : vector<8x32xf32>
    %113 = vector.extract_strided_slice %98 {offsets = [0, 96], sizes = [8, 32], strides = [1, 1]} : vector<8x128xf32> to vector<8x32xf32>
    %114 = arith.negf %113 : vector<8x32xf32>
    %115 = math.exp %114 : vector<8x32xf32>
    %cst_28 = arith.constant 1.000000e+00 : f32
    %116 = vector.broadcast %cst_28 : f32 to vector<8x32xf32>
    %117 = arith.addf %116, %115 : vector<8x32xf32>
    %118 = arith.divf %116, %117 : vector<8x32xf32>
    %119 = arith.mulf %110, %92 : vector<8x32xf32>
    %120 = arith.mulf %104, %112 : vector<8x32xf32>
    %121 = arith.addf %119, %120 : vector<8x32xf32>
    %122 = math.tanh %121 : vector<8x32xf32>
    %123 = arith.mulf %118, %122 : vector<8x32xf32>
    %c24 = arith.constant 24 : index
    %c0_29 = arith.constant 0 : index
    %124 = vector.load %arg15[%c24, %c0_29] : memref<64x32xf32, #tpu.memory_space<vmem>>, vector<8x32xf32>
    tpu.vector_store %arg15[%c24, %c0_29], %123 {strides = array<i32>} : memref<64x32xf32, #tpu.memory_space<vmem>>, vector<8x32xf32>,
    %125 = vector.extract_strided_slice %6 {offsets = [32, 0], sizes = [8, 128], strides = [1, 1]} : vector<64x128xf32> to vector<8x128xf32>
    %cst_30 = arith.constant dense<0.000000e+00> : vector<8x128xf32>
    %126 = tpu.matmul %123, %2, %cst_30 {dimension_numbers = #tpu.dot_dimension_numbers<[1], [0], [0], [1], [0, 0, 1, 1], [], []>} : vector<8x32xf32>, vector<32x128xf32>, vector<8x128xf32> -> vector<8x128xf32>
    %127 = arith.addf %125, %126 : vector<8x128xf32>
    %128 = vector.extract_strided_slice %127 {offsets = [0, 0], sizes = [8, 32], strides = [1, 1]} : vector<8x128xf32> to vector<8x32xf32>
    %129 = arith.negf %128 : vector<8x32xf32>
    %130 = math.exp %129 : vector<8x32xf32>
    %cst_31 = arith.constant 1.000000e+00 : f32
    %131 = vector.broadcast %cst_31 : f32 to vector<8x32xf32>
    %132 = arith.addf %131, %130 : vector<8x32xf32>
    %133 = arith.divf %131, %132 : vector<8x32xf32>
    %134 = vector.extract_strided_slice %127 {offsets = [0, 32], sizes = [8, 32], strides = [1, 1]} : vector<8x128xf32> to vector<8x32xf32>
    %135 = arith.negf %134 : vector<8x32xf32>
    %136 = math.exp %135 : vector<8x32xf32>
    %cst_32 = arith.constant 1.000000e+00 : f32
    %137 = vector.broadcast %cst_32 : f32 to vector<8x32xf32>
    %138 = arith.addf %137, %136 : vector<8x32xf32>
    %139 = arith.divf %137, %138 : vector<8x32xf32>
    %140 = vector.extract_strided_slice %127 {offsets = [0, 64], sizes = [8, 32], strides = [1, 1]} : vector<8x128xf32> to vector<8x32xf32>
    %141 = math.tanh %140 : vector<8x32xf32>
    %142 = vector.extract_strided_slice %127 {offsets = [0, 96], sizes = [8, 32], strides = [1, 1]} : vector<8x128xf32> to vector<8x32xf32>
    %143 = arith.negf %142 : vector<8x32xf32>
    %144 = math.exp %143 : vector<8x32xf32>
    %cst_33 = arith.constant 1.000000e+00 : f32
    %145 = vector.broadcast %cst_33 : f32 to vector<8x32xf32>
    %146 = arith.addf %145, %144 : vector<8x32xf32>
    %147 = arith.divf %145, %146 : vector<8x32xf32>
    %148 = arith.mulf %139, %121 : vector<8x32xf32>
    %149 = arith.mulf %133, %141 : vector<8x32xf32>
    %150 = arith.addf %148, %149 : vector<8x32xf32>
    %151 = math.tanh %150 : vector<8x32xf32>
    %152 = arith.mulf %147, %151 : vector<8x32xf32>
    %c32 = arith.constant 32 : index
    %c0_34 = arith.constant 0 : index
    %153 = vector.load %arg15[%c32, %c0_34] : memref<64x32xf32, #tpu.memory_space<vmem>>, vector<8x32xf32>
    tpu.vector_store %arg15[%c32, %c0_34], %152 {strides = array<i32>} : memref<64x32xf32, #tpu.memory_space<vmem>>, vector<8x32xf32>,
    %154 = vector.extract_strided_slice %6 {offsets = [40, 0], sizes = [8, 128], strides = [1, 1]} : vector<64x128xf32> to vector<8x128xf32>
    %cst_35 = arith.constant dense<0.000000e+00> : vector<8x128xf32>
    %155 = tpu.matmul %152, %2, %cst_35 {dimension_numbers = #tpu.dot_dimension_numbers<[1], [0], [0], [1], [0, 0, 1, 1], [], []>} : vector<8x32xf32>, vector<32x128xf32>, vector<8x128xf32> -> vector<8x128xf32>
    %156 = arith.addf %154, %155 : vector<8x128xf32>
    %157 = vector.extract_strided_slice %156 {offsets = [0, 0], sizes = [8, 32], strides = [1, 1]} : vector<8x128xf32> to vector<8x32xf32>
    %158 = arith.negf %157 : vector<8x32xf32>
    %159 = math.exp %158 : vector<8x32xf32>
    %cst_36 = arith.constant 1.000000e+00 : f32
    %160 = vector.broadcast %cst_36 : f32 to vector<8x32xf32>
    %161 = arith.addf %160, %159 : vector<8x32xf32>
    %162 = arith.divf %160, %161 : vector<8x32xf32>
    %163 = vector.extract_strided_slice %156 {offsets = [0, 32], sizes = [8, 32], strides = [1, 1]} : vector<8x128xf32> to vector<8x32xf32>
    %164 = arith.negf %163 : vector<8x32xf32>
    %165 = math.exp %164 : vector<8x32xf32>
    %cst_37 = arith.constant 1.000000e+00 : f32
    %166 = vector.broadcast %cst_37 : f32 to vector<8x32xf32>
    %167 = arith.addf %166, %165 : vector<8x32xf32>
    %168 = arith.divf %166, %167 : vector<8x32xf32>
    %169 = vector.extract_strided_slice %156 {offsets = [0, 64], sizes = [8, 32], strides = [1, 1]} : vector<8x128xf32> to vector<8x32xf32>
    %170 = math.tanh %169 : vector<8x32xf32>
    %171 = vector.extract_strided_slice %156 {offsets = [0, 96], sizes = [8, 32], strides = [1, 1]} : vector<8x128xf32> to vector<8x32xf32>
    %172 = arith.negf %171 : vector<8x32xf32>
    %173 = math.exp %172 : vector<8x32xf32>
    %cst_38 = arith.constant 1.000000e+00 : f32
    %174 = vector.broadcast %cst_38 : f32 to vector<8x32xf32>
    %175 = arith.addf %174, %173 : vector<8x32xf32>
    %176 = arith.divf %174, %175 : vector<8x32xf32>
    %177 = arith.mulf %168, %150 : vector<8x32xf32>
    %178 = arith.mulf %162, %170 : vector<8x32xf32>
    %179 = arith.addf %177, %178 : vector<8x32xf32>
    %180 = math.tanh %179 : vector<8x32xf32>
    %181 = arith.mulf %176, %180 : vector<8x32xf32>
    %c40 = arith.constant 40 : index
    %c0_39 = arith.constant 0 : index
    %182 = vector.load %arg15[%c40, %c0_39] : memref<64x32xf32, #tpu.memory_space<vmem>>, vector<8x32xf32>
    tpu.vector_store %arg15[%c40, %c0_39], %181 {strides = array<i32>} : memref<64x32xf32, #tpu.memory_space<vmem>>, vector<8x32xf32>,
    %183 = vector.extract_strided_slice %6 {offsets = [48, 0], sizes = [8, 128], strides = [1, 1]} : vector<64x128xf32> to vector<8x128xf32>
    %cst_40 = arith.constant dense<0.000000e+00> : vector<8x128xf32>
    %184 = tpu.matmul %181, %2, %cst_40 {dimension_numbers = #tpu.dot_dimension_numbers<[1], [0], [0], [1], [0, 0, 1, 1], [], []>} : vector<8x32xf32>, vector<32x128xf32>, vector<8x128xf32> -> vector<8x128xf32>
    %185 = arith.addf %183, %184 : vector<8x128xf32>
    %186 = vector.extract_strided_slice %185 {offsets = [0, 0], sizes = [8, 32], strides = [1, 1]} : vector<8x128xf32> to vector<8x32xf32>
    %187 = arith.negf %186 : vector<8x32xf32>
    %188 = math.exp %187 : vector<8x32xf32>
    %cst_41 = arith.constant 1.000000e+00 : f32
    %189 = vector.broadcast %cst_41 : f32 to vector<8x32xf32>
    %190 = arith.addf %189, %188 : vector<8x32xf32>
    %191 = arith.divf %189, %190 : vector<8x32xf32>
    %192 = vector.extract_strided_slice %185 {offsets = [0, 32], sizes = [8, 32], strides = [1, 1]} : vector<8x128xf32> to vector<8x32xf32>
    %193 = arith.negf %192 : vector<8x32xf32>
    %194 = math.exp %193 : vector<8x32xf32>
    %cst_42 = arith.constant 1.000000e+00 : f32
    %195 = vector.broadcast %cst_42 : f32 to vector<8x32xf32>
    %196 = arith.addf %195, %194 : vector<8x32xf32>
    %197 = arith.divf %195, %196 : vector<8x32xf32>
    %198 = vector.extract_strided_slice %185 {offsets = [0, 64], sizes = [8, 32], strides = [1, 1]} : vector<8x128xf32> to vector<8x32xf32>
    %199 = math.tanh %198 : vector<8x32xf32>
    %200 = vector.extract_strided_slice %185 {offsets = [0, 96], sizes = [8, 32], strides = [1, 1]} : vector<8x128xf32> to vector<8x32xf32>
    %201 = arith.negf %200 : vector<8x32xf32>
    %202 = math.exp %201 : vector<8x32xf32>
    %cst_43 = arith.constant 1.000000e+00 : f32
    %203 = vector.broadcast %cst_43 : f32 to vector<8x32xf32>
    %204 = arith.addf %203, %202 : vector<8x32xf32>
    %205 = arith.divf %203, %204 : vector<8x32xf32>
    %206 = arith.mulf %197, %179 : vector<8x32xf32>
    %207 = arith.mulf %191, %199 : vector<8x32xf32>
    %208 = arith.addf %206, %207 : vector<8x32xf32>
    %209 = math.tanh %208 : vector<8x32xf32>
    %210 = arith.mulf %205, %209 : vector<8x32xf32>
    %c48 = arith.constant 48 : index
    %c0_44 = arith.constant 0 : index
    %211 = vector.load %arg15[%c48, %c0_44] : memref<64x32xf32, #tpu.memory_space<vmem>>, vector<8x32xf32>
    tpu.vector_store %arg15[%c48, %c0_44], %210 {strides = array<i32>} : memref<64x32xf32, #tpu.memory_space<vmem>>, vector<8x32xf32>,
    %212 = vector.extract_strided_slice %6 {offsets = [56, 0], sizes = [8, 128], strides = [1, 1]} : vector<64x128xf32> to vector<8x128xf32>
    %cst_45 = arith.constant dense<0.000000e+00> : vector<8x128xf32>
    %213 = tpu.matmul %210, %2, %cst_45 {dimension_numbers = #tpu.dot_dimension_numbers<[1], [0], [0], [1], [0, 0, 1, 1], [], []>} : vector<8x32xf32>, vector<32x128xf32>, vector<8x128xf32> -> vector<8x128xf32>
    %214 = arith.addf %212, %213 : vector<8x128xf32>
    %215 = vector.extract_strided_slice %214 {offsets = [0, 0], sizes = [8, 32], strides = [1, 1]} : vector<8x128xf32> to vector<8x32xf32>
    %216 = arith.negf %215 : vector<8x32xf32>
    %217 = math.exp %216 : vector<8x32xf32>
    %cst_46 = arith.constant 1.000000e+00 : f32
    %218 = vector.broadcast %cst_46 : f32 to vector<8x32xf32>
    %219 = arith.addf %218, %217 : vector<8x32xf32>
    %220 = arith.divf %218, %219 : vector<8x32xf32>
    %221 = vector.extract_strided_slice %214 {offsets = [0, 32], sizes = [8, 32], strides = [1, 1]} : vector<8x128xf32> to vector<8x32xf32>
    %222 = arith.negf %221 : vector<8x32xf32>
    %223 = math.exp %222 : vector<8x32xf32>
    %cst_47 = arith.constant 1.000000e+00 : f32
    %224 = vector.broadcast %cst_47 : f32 to vector<8x32xf32>
    %225 = arith.addf %224, %223 : vector<8x32xf32>
    %226 = arith.divf %224, %225 : vector<8x32xf32>
    %227 = vector.extract_strided_slice %214 {offsets = [0, 64], sizes = [8, 32], strides = [1, 1]} : vector<8x128xf32> to vector<8x32xf32>
    %228 = math.tanh %227 : vector<8x32xf32>
    %229 = vector.extract_strided_slice %214 {offsets = [0, 96], sizes = [8, 32], strides = [1, 1]} : vector<8x128xf32> to vector<8x32xf32>
    %230 = arith.negf %229 : vector<8x32xf32>
    %231 = math.exp %230 : vector<8x32xf32>
    %cst_48 = arith.constant 1.000000e+00 : f32
    %232 = vector.broadcast %cst_48 : f32 to vector<8x32xf32>
    %233 = arith.addf %232, %231 : vector<8x32xf32>
    %234 = arith.divf %232, %233 : vector<8x32xf32>
    %235 = arith.mulf %226, %208 : vector<8x32xf32>
    %236 = arith.mulf %220, %228 : vector<8x32xf32>
    %237 = arith.addf %235, %236 : vector<8x32xf32>
    %238 = math.tanh %237 : vector<8x32xf32>
    %239 = arith.mulf %234, %238 : vector<8x32xf32>
    %c56 = arith.constant 56 : index
    %c0_49 = arith.constant 0 : index
    %240 = vector.load %arg15[%c56, %c0_49] : memref<64x32xf32, #tpu.memory_space<vmem>>, vector<8x32xf32>
    tpu.vector_store %arg15[%c56, %c0_49], %239 {strides = array<i32>} : memref<64x32xf32, #tpu.memory_space<vmem>>, vector<8x32xf32>,
    %c0_50 = arith.constant 0 : index
    %c0_51 = arith.constant 0 : index
    %241 = vector.load %arg15[%c0_50, %c0_51] : memref<64x32xf32, #tpu.memory_space<vmem>>, vector<64x32xf32>
    %c0_52 = arith.constant 0 : index
    %c0_53 = arith.constant 0 : index
    %242 = vector.load %arg4[%c0_52, %c0_53] : memref<32x128xf32, #tpu.memory_space<vmem>>, vector<32x128xf32>
    %c0_54 = arith.constant 0 : index
    %c0_55 = arith.constant 0 : index
    %243 = vector.load %arg5[%c0_54, %c0_55] : memref<32x128xf32, #tpu.memory_space<vmem>>, vector<32x128xf32>
    %c0_56 = arith.constant 0 : index
    %c0_57 = arith.constant 0 : index
    %244 = vector.load %arg6[%c0_56, %c0_57] : memref<1x128xf32, #tpu.memory_space<vmem>>, vector<1x128xf32>
    %cst_58 = arith.constant dense<0.000000e+00> : vector<64x128xf32>
    %245 = tpu.matmul %241, %242, %cst_58 {dimension_numbers = #tpu.dot_dimension_numbers<[1], [0], [0], [1], [0, 0, 1, 1], [], []>} : vector<64x32xf32>, vector<32x128xf32>, vector<64x128xf32> -> vector<64x128xf32>
    %246 = vector.broadcast %244 : vector<1x128xf32> to vector<64x128xf32>
    %247 = arith.addf %245, %246 : vector<64x128xf32>
    %cst_59 = arith.constant 0.000000e+00 : f32
    %248 = vector.broadcast %cst_59 : f32 to vector<8x32xf32>
    %cst_60 = arith.constant 0.000000e+00 : f32
    %249 = vector.broadcast %cst_60 : f32 to vector<8x32xf32>
    %250 = vector.extract_strided_slice %247 {offsets = [0, 0], sizes = [8, 128], strides = [1, 1]} : vector<64x128xf32> to vector<8x128xf32>
    %cst_61 = arith.constant dense<0.000000e+00> : vector<8x128xf32>
    %251 = tpu.matmul %248, %243, %cst_61 {dimension_numbers = #tpu.dot_dimension_numbers<[1], [0], [0], [1], [0, 0, 1, 1], [], []>} : vector<8x32xf32>, vector<32x128xf32>, vector<8x128xf32> -> vector<8x128xf32>
    %252 = arith.addf %250, %251 : vector<8x128xf32>
    %253 = vector.extract_strided_slice %252 {offsets = [0, 0], sizes = [8, 32], strides = [1, 1]} : vector<8x128xf32> to vector<8x32xf32>
    %254 = arith.negf %253 : vector<8x32xf32>
    %255 = math.exp %254 : vector<8x32xf32>
    %cst_62 = arith.constant 1.000000e+00 : f32
    %256 = vector.broadcast %cst_62 : f32 to vector<8x32xf32>
    %257 = arith.addf %256, %255 : vector<8x32xf32>
    %258 = arith.divf %256, %257 : vector<8x32xf32>
    %259 = vector.extract_strided_slice %252 {offsets = [0, 32], sizes = [8, 32], strides = [1, 1]} : vector<8x128xf32> to vector<8x32xf32>
    %260 = arith.negf %259 : vector<8x32xf32>
    %261 = math.exp %260 : vector<8x32xf32>
    %cst_63 = arith.constant 1.000000e+00 : f32
    %262 = vector.broadcast %cst_63 : f32 to vector<8x32xf32>
    %263 = arith.addf %262, %261 : vector<8x32xf32>
    %264 = arith.divf %262, %263 : vector<8x32xf32>
    %265 = vector.extract_strided_slice %252 {offsets = [0, 64], sizes = [8, 32], strides = [1, 1]} : vector<8x128xf32> to vector<8x32xf32>
    %266 = math.tanh %265 : vector<8x32xf32>
    %267 = vector.extract_strided_slice %252 {offsets = [0, 96], sizes = [8, 32], strides = [1, 1]} : vector<8x128xf32> to vector<8x32xf32>
    %268 = arith.negf %267 : vector<8x32xf32>
    %269 = math.exp %268 : vector<8x32xf32>
    %cst_64 = arith.constant 1.000000e+00 : f32
    %270 = vector.broadcast %cst_64 : f32 to vector<8x32xf32>
    %271 = arith.addf %270, %269 : vector<8x32xf32>
    %272 = arith.divf %270, %271 : vector<8x32xf32>
    %273 = arith.mulf %264, %249 : vector<8x32xf32>
    %274 = arith.mulf %258, %266 : vector<8x32xf32>
    %275 = arith.addf %273, %274 : vector<8x32xf32>
    %276 = math.tanh %275 : vector<8x32xf32>
    %277 = arith.mulf %272, %276 : vector<8x32xf32>
    %278 = vector.extract_strided_slice %247 {offsets = [8, 0], sizes = [8, 128], strides = [1, 1]} : vector<64x128xf32> to vector<8x128xf32>
    %cst_65 = arith.constant dense<0.000000e+00> : vector<8x128xf32>
    %279 = tpu.matmul %277, %243, %cst_65 {dimension_numbers = #tpu.dot_dimension_numbers<[1], [0], [0], [1], [0, 0, 1, 1], [], []>} : vector<8x32xf32>, vector<32x128xf32>, vector<8x128xf32> -> vector<8x128xf32>
    %280 = arith.addf %278, %279 : vector<8x128xf32>
    %281 = vector.extract_strided_slice %280 {offsets = [0, 0], sizes = [8, 32], strides = [1, 1]} : vector<8x128xf32> to vector<8x32xf32>
    %282 = arith.negf %281 : vector<8x32xf32>
    %283 = math.exp %282 : vector<8x32xf32>
    %cst_66 = arith.constant 1.000000e+00 : f32
    %284 = vector.broadcast %cst_66 : f32 to vector<8x32xf32>
    %285 = arith.addf %284, %283 : vector<8x32xf32>
    %286 = arith.divf %284, %285 : vector<8x32xf32>
    %287 = vector.extract_strided_slice %280 {offsets = [0, 32], sizes = [8, 32], strides = [1, 1]} : vector<8x128xf32> to vector<8x32xf32>
    %288 = arith.negf %287 : vector<8x32xf32>
    %289 = math.exp %288 : vector<8x32xf32>
    %cst_67 = arith.constant 1.000000e+00 : f32
    %290 = vector.broadcast %cst_67 : f32 to vector<8x32xf32>
    %291 = arith.addf %290, %289 : vector<8x32xf32>
    %292 = arith.divf %290, %291 : vector<8x32xf32>
    %293 = vector.extract_strided_slice %280 {offsets = [0, 64], sizes = [8, 32], strides = [1, 1]} : vector<8x128xf32> to vector<8x32xf32>
    %294 = math.tanh %293 : vector<8x32xf32>
    %295 = vector.extract_strided_slice %280 {offsets = [0, 96], sizes = [8, 32], strides = [1, 1]} : vector<8x128xf32> to vector<8x32xf32>
    %296 = arith.negf %295 : vector<8x32xf32>
    %297 = math.exp %296 : vector<8x32xf32>
    %cst_68 = arith.constant 1.000000e+00 : f32
    %298 = vector.broadcast %cst_68 : f32 to vector<8x32xf32>
    %299 = arith.addf %298, %297 : vector<8x32xf32>
    %300 = arith.divf %298, %299 : vector<8x32xf32>
    %301 = arith.mulf %292, %275 : vector<8x32xf32>
    %302 = arith.mulf %286, %294 : vector<8x32xf32>
    %303 = arith.addf %301, %302 : vector<8x32xf32>
    %304 = math.tanh %303 : vector<8x32xf32>
    %305 = arith.mulf %300, %304 : vector<8x32xf32>
    %306 = vector.extract_strided_slice %247 {offsets = [16, 0], sizes = [8, 128], strides = [1, 1]} : vector<64x128xf32> to vector<8x128xf32>
    %cst_69 = arith.constant dense<0.000000e+00> : vector<8x128xf32>
    %307 = tpu.matmul %305, %243, %cst_69 {dimension_numbers = #tpu.dot_dimension_numbers<[1], [0], [0], [1], [0, 0, 1, 1], [], []>} : vector<8x32xf32>, vector<32x128xf32>, vector<8x128xf32> -> vector<8x128xf32>
    %308 = arith.addf %306, %307 : vector<8x128xf32>
    %309 = vector.extract_strided_slice %308 {offsets = [0, 0], sizes = [8, 32], strides = [1, 1]} : vector<8x128xf32> to vector<8x32xf32>
    %310 = arith.negf %309 : vector<8x32xf32>
    %311 = math.exp %310 : vector<8x32xf32>
    %cst_70 = arith.constant 1.000000e+00 : f32
    %312 = vector.broadcast %cst_70 : f32 to vector<8x32xf32>
    %313 = arith.addf %312, %311 : vector<8x32xf32>
    %314 = arith.divf %312, %313 : vector<8x32xf32>
    %315 = vector.extract_strided_slice %308 {offsets = [0, 32], sizes = [8, 32], strides = [1, 1]} : vector<8x128xf32> to vector<8x32xf32>
    %316 = arith.negf %315 : vector<8x32xf32>
    %317 = math.exp %316 : vector<8x32xf32>
    %cst_71 = arith.constant 1.000000e+00 : f32
    %318 = vector.broadcast %cst_71 : f32 to vector<8x32xf32>
    %319 = arith.addf %318, %317 : vector<8x32xf32>
    %320 = arith.divf %318, %319 : vector<8x32xf32>
    %321 = vector.extract_strided_slice %308 {offsets = [0, 64], sizes = [8, 32], strides = [1, 1]} : vector<8x128xf32> to vector<8x32xf32>
    %322 = math.tanh %321 : vector<8x32xf32>
    %323 = vector.extract_strided_slice %308 {offsets = [0, 96], sizes = [8, 32], strides = [1, 1]} : vector<8x128xf32> to vector<8x32xf32>
    %324 = arith.negf %323 : vector<8x32xf32>
    %325 = math.exp %324 : vector<8x32xf32>
    %cst_72 = arith.constant 1.000000e+00 : f32
    %326 = vector.broadcast %cst_72 : f32 to vector<8x32xf32>
    %327 = arith.addf %326, %325 : vector<8x32xf32>
    %328 = arith.divf %326, %327 : vector<8x32xf32>
    %329 = arith.mulf %320, %303 : vector<8x32xf32>
    %330 = arith.mulf %314, %322 : vector<8x32xf32>
    %331 = arith.addf %329, %330 : vector<8x32xf32>
    %332 = math.tanh %331 : vector<8x32xf32>
    %333 = arith.mulf %328, %332 : vector<8x32xf32>
    %334 = vector.extract_strided_slice %247 {offsets = [24, 0], sizes = [8, 128], strides = [1, 1]} : vector<64x128xf32> to vector<8x128xf32>
    %cst_73 = arith.constant dense<0.000000e+00> : vector<8x128xf32>
    %335 = tpu.matmul %333, %243, %cst_73 {dimension_numbers = #tpu.dot_dimension_numbers<[1], [0], [0], [1], [0, 0, 1, 1], [], []>} : vector<8x32xf32>, vector<32x128xf32>, vector<8x128xf32> -> vector<8x128xf32>
    %336 = arith.addf %334, %335 : vector<8x128xf32>
    %337 = vector.extract_strided_slice %336 {offsets = [0, 0], sizes = [8, 32], strides = [1, 1]} : vector<8x128xf32> to vector<8x32xf32>
    %338 = arith.negf %337 : vector<8x32xf32>
    %339 = math.exp %338 : vector<8x32xf32>
    %cst_74 = arith.constant 1.000000e+00 : f32
    %340 = vector.broadcast %cst_74 : f32 to vector<8x32xf32>
    %341 = arith.addf %340, %339 : vector<8x32xf32>
    %342 = arith.divf %340, %341 : vector<8x32xf32>
    %343 = vector.extract_strided_slice %336 {offsets = [0, 32], sizes = [8, 32], strides = [1, 1]} : vector<8x128xf32> to vector<8x32xf32>
    %344 = arith.negf %343 : vector<8x32xf32>
    %345 = math.exp %344 : vector<8x32xf32>
    %cst_75 = arith.constant 1.000000e+00 : f32
    %346 = vector.broadcast %cst_75 : f32 to vector<8x32xf32>
    %347 = arith.addf %346, %345 : vector<8x32xf32>
    %348 = arith.divf %346, %347 : vector<8x32xf32>
    %349 = vector.extract_strided_slice %336 {offsets = [0, 64], sizes = [8, 32], strides = [1, 1]} : vector<8x128xf32> to vector<8x32xf32>
    %350 = math.tanh %349 : vector<8x32xf32>
    %351 = vector.extract_strided_slice %336 {offsets = [0, 96], sizes = [8, 32], strides = [1, 1]} : vector<8x128xf32> to vector<8x32xf32>
    %352 = arith.negf %351 : vector<8x32xf32>
    %353 = math.exp %352 : vector<8x32xf32>
    %cst_76 = arith.constant 1.000000e+00 : f32
    %354 = vector.broadcast %cst_76 : f32 to vector<8x32xf32>
    %355 = arith.addf %354, %353 : vector<8x32xf32>
    %356 = arith.divf %354, %355 : vector<8x32xf32>
    %357 = arith.mulf %348, %331 : vector<8x32xf32>
    %358 = arith.mulf %342, %350 : vector<8x32xf32>
    %359 = arith.addf %357, %358 : vector<8x32xf32>
    %360 = math.tanh %359 : vector<8x32xf32>
    %361 = arith.mulf %356, %360 : vector<8x32xf32>
    %362 = vector.extract_strided_slice %247 {offsets = [32, 0], sizes = [8, 128], strides = [1, 1]} : vector<64x128xf32> to vector<8x128xf32>
    %cst_77 = arith.constant dense<0.000000e+00> : vector<8x128xf32>
    %363 = tpu.matmul %361, %243, %cst_77 {dimension_numbers = #tpu.dot_dimension_numbers<[1], [0], [0], [1], [0, 0, 1, 1], [], []>} : vector<8x32xf32>, vector<32x128xf32>, vector<8x128xf32> -> vector<8x128xf32>
    %364 = arith.addf %362, %363 : vector<8x128xf32>
    %365 = vector.extract_strided_slice %364 {offsets = [0, 0], sizes = [8, 32], strides = [1, 1]} : vector<8x128xf32> to vector<8x32xf32>
    %366 = arith.negf %365 : vector<8x32xf32>
    %367 = math.exp %366 : vector<8x32xf32>
    %cst_78 = arith.constant 1.000000e+00 : f32
    %368 = vector.broadcast %cst_78 : f32 to vector<8x32xf32>
    %369 = arith.addf %368, %367 : vector<8x32xf32>
    %370 = arith.divf %368, %369 : vector<8x32xf32>
    %371 = vector.extract_strided_slice %364 {offsets = [0, 32], sizes = [8, 32], strides = [1, 1]} : vector<8x128xf32> to vector<8x32xf32>
    %372 = arith.negf %371 : vector<8x32xf32>
    %373 = math.exp %372 : vector<8x32xf32>
    %cst_79 = arith.constant 1.000000e+00 : f32
    %374 = vector.broadcast %cst_79 : f32 to vector<8x32xf32>
    %375 = arith.addf %374, %373 : vector<8x32xf32>
    %376 = arith.divf %374, %375 : vector<8x32xf32>
    %377 = vector.extract_strided_slice %364 {offsets = [0, 64], sizes = [8, 32], strides = [1, 1]} : vector<8x128xf32> to vector<8x32xf32>
    %378 = math.tanh %377 : vector<8x32xf32>
    %379 = vector.extract_strided_slice %364 {offsets = [0, 96], sizes = [8, 32], strides = [1, 1]} : vector<8x128xf32> to vector<8x32xf32>
    %380 = arith.negf %379 : vector<8x32xf32>
    %381 = math.exp %380 : vector<8x32xf32>
    %cst_80 = arith.constant 1.000000e+00 : f32
    %382 = vector.broadcast %cst_80 : f32 to vector<8x32xf32>
    %383 = arith.addf %382, %381 : vector<8x32xf32>
    %384 = arith.divf %382, %383 : vector<8x32xf32>
    %385 = arith.mulf %376, %359 : vector<8x32xf32>
    %386 = arith.mulf %370, %378 : vector<8x32xf32>
    %387 = arith.addf %385, %386 : vector<8x32xf32>
    %388 = math.tanh %387 : vector<8x32xf32>
    %389 = arith.mulf %384, %388 : vector<8x32xf32>
    %390 = vector.extract_strided_slice %247 {offsets = [40, 0], sizes = [8, 128], strides = [1, 1]} : vector<64x128xf32> to vector<8x128xf32>
    %cst_81 = arith.constant dense<0.000000e+00> : vector<8x128xf32>
    %391 = tpu.matmul %389, %243, %cst_81 {dimension_numbers = #tpu.dot_dimension_numbers<[1], [0], [0], [1], [0, 0, 1, 1], [], []>} : vector<8x32xf32>, vector<32x128xf32>, vector<8x128xf32> -> vector<8x128xf32>
    %392 = arith.addf %390, %391 : vector<8x128xf32>
    %393 = vector.extract_strided_slice %392 {offsets = [0, 0], sizes = [8, 32], strides = [1, 1]} : vector<8x128xf32> to vector<8x32xf32>
    %394 = arith.negf %393 : vector<8x32xf32>
    %395 = math.exp %394 : vector<8x32xf32>
    %cst_82 = arith.constant 1.000000e+00 : f32
    %396 = vector.broadcast %cst_82 : f32 to vector<8x32xf32>
    %397 = arith.addf %396, %395 : vector<8x32xf32>
    %398 = arith.divf %396, %397 : vector<8x32xf32>
    %399 = vector.extract_strided_slice %392 {offsets = [0, 32], sizes = [8, 32], strides = [1, 1]} : vector<8x128xf32> to vector<8x32xf32>
    %400 = arith.negf %399 : vector<8x32xf32>
    %401 = math.exp %400 : vector<8x32xf32>
    %cst_83 = arith.constant 1.000000e+00 : f32
    %402 = vector.broadcast %cst_83 : f32 to vector<8x32xf32>
    %403 = arith.addf %402, %401 : vector<8x32xf32>
    %404 = arith.divf %402, %403 : vector<8x32xf32>
    %405 = vector.extract_strided_slice %392 {offsets = [0, 64], sizes = [8, 32], strides = [1, 1]} : vector<8x128xf32> to vector<8x32xf32>
    %406 = math.tanh %405 : vector<8x32xf32>
    %407 = vector.extract_strided_slice %392 {offsets = [0, 96], sizes = [8, 32], strides = [1, 1]} : vector<8x128xf32> to vector<8x32xf32>
    %408 = arith.negf %407 : vector<8x32xf32>
    %409 = math.exp %408 : vector<8x32xf32>
    %cst_84 = arith.constant 1.000000e+00 : f32
    %410 = vector.broadcast %cst_84 : f32 to vector<8x32xf32>
    %411 = arith.addf %410, %409 : vector<8x32xf32>
    %412 = arith.divf %410, %411 : vector<8x32xf32>
    %413 = arith.mulf %404, %387 : vector<8x32xf32>
    %414 = arith.mulf %398, %406 : vector<8x32xf32>
    %415 = arith.addf %413, %414 : vector<8x32xf32>
    %416 = math.tanh %415 : vector<8x32xf32>
    %417 = arith.mulf %412, %416 : vector<8x32xf32>
    %418 = vector.extract_strided_slice %247 {offsets = [48, 0], sizes = [8, 128], strides = [1, 1]} : vector<64x128xf32> to vector<8x128xf32>
    %cst_85 = arith.constant dense<0.000000e+00> : vector<8x128xf32>
    %419 = tpu.matmul %417, %243, %cst_85 {dimension_numbers = #tpu.dot_dimension_numbers<[1], [0], [0], [1], [0, 0, 1, 1], [], []>} : vector<8x32xf32>, vector<32x128xf32>, vector<8x128xf32> -> vector<8x128xf32>
    %420 = arith.addf %418, %419 : vector<8x128xf32>
    %421 = vector.extract_strided_slice %420 {offsets = [0, 0], sizes = [8, 32], strides = [1, 1]} : vector<8x128xf32> to vector<8x32xf32>
    %422 = arith.negf %421 : vector<8x32xf32>
    %423 = math.exp %422 : vector<8x32xf32>
    %cst_86 = arith.constant 1.000000e+00 : f32
    %424 = vector.broadcast %cst_86 : f32 to vector<8x32xf32>
    %425 = arith.addf %424, %423 : vector<8x32xf32>
    %426 = arith.divf %424, %425 : vector<8x32xf32>
    %427 = vector.extract_strided_slice %420 {offsets = [0, 32], sizes = [8, 32], strides = [1, 1]} : vector<8x128xf32> to vector<8x32xf32>
    %428 = arith.negf %427 : vector<8x32xf32>
    %429 = math.exp %428 : vector<8x32xf32>
    %cst_87 = arith.constant 1.000000e+00 : f32
    %430 = vector.broadcast %cst_87 : f32 to vector<8x32xf32>
    %431 = arith.addf %430, %429 : vector<8x32xf32>
    %432 = arith.divf %430, %431 : vector<8x32xf32>
    %433 = vector.extract_strided_slice %420 {offsets = [0, 64], sizes = [8, 32], strides = [1, 1]} : vector<8x128xf32> to vector<8x32xf32>
    %434 = math.tanh %433 : vector<8x32xf32>
    %435 = vector.extract_strided_slice %420 {offsets = [0, 96], sizes = [8, 32], strides = [1, 1]} : vector<8x128xf32> to vector<8x32xf32>
    %436 = arith.negf %435 : vector<8x32xf32>
    %437 = math.exp %436 : vector<8x32xf32>
    %cst_88 = arith.constant 1.000000e+00 : f32
    %438 = vector.broadcast %cst_88 : f32 to vector<8x32xf32>
    %439 = arith.addf %438, %437 : vector<8x32xf32>
    %440 = arith.divf %438, %439 : vector<8x32xf32>
    %441 = arith.mulf %432, %415 : vector<8x32xf32>
    %442 = arith.mulf %426, %434 : vector<8x32xf32>
    %443 = arith.addf %441, %442 : vector<8x32xf32>
    %444 = math.tanh %443 : vector<8x32xf32>
    %445 = arith.mulf %440, %444 : vector<8x32xf32>
    %446 = vector.extract_strided_slice %247 {offsets = [56, 0], sizes = [8, 128], strides = [1, 1]} : vector<64x128xf32> to vector<8x128xf32>
    %cst_89 = arith.constant dense<0.000000e+00> : vector<8x128xf32>
    %447 = tpu.matmul %445, %243, %cst_89 {dimension_numbers = #tpu.dot_dimension_numbers<[1], [0], [0], [1], [0, 0, 1, 1], [], []>} : vector<8x32xf32>, vector<32x128xf32>, vector<8x128xf32> -> vector<8x128xf32>
    %448 = arith.addf %446, %447 : vector<8x128xf32>
    %449 = vector.extract_strided_slice %448 {offsets = [0, 0], sizes = [8, 32], strides = [1, 1]} : vector<8x128xf32> to vector<8x32xf32>
    %450 = arith.negf %449 : vector<8x32xf32>
    %451 = math.exp %450 : vector<8x32xf32>
    %cst_90 = arith.constant 1.000000e+00 : f32
    %452 = vector.broadcast %cst_90 : f32 to vector<8x32xf32>
    %453 = arith.addf %452, %451 : vector<8x32xf32>
    %454 = arith.divf %452, %453 : vector<8x32xf32>
    %455 = vector.extract_strided_slice %448 {offsets = [0, 32], sizes = [8, 32], strides = [1, 1]} : vector<8x128xf32> to vector<8x32xf32>
    %456 = arith.negf %455 : vector<8x32xf32>
    %457 = math.exp %456 : vector<8x32xf32>
    %cst_91 = arith.constant 1.000000e+00 : f32
    %458 = vector.broadcast %cst_91 : f32 to vector<8x32xf32>
    %459 = arith.addf %458, %457 : vector<8x32xf32>
    %460 = arith.divf %458, %459 : vector<8x32xf32>
    %461 = vector.extract_strided_slice %448 {offsets = [0, 64], sizes = [8, 32], strides = [1, 1]} : vector<8x128xf32> to vector<8x32xf32>
    %462 = math.tanh %461 : vector<8x32xf32>
    %463 = vector.extract_strided_slice %448 {offsets = [0, 96], sizes = [8, 32], strides = [1, 1]} : vector<8x128xf32> to vector<8x32xf32>
    %464 = arith.negf %463 : vector<8x32xf32>
    %465 = math.exp %464 : vector<8x32xf32>
    %cst_92 = arith.constant 1.000000e+00 : f32
    %466 = vector.broadcast %cst_92 : f32 to vector<8x32xf32>
    %467 = arith.addf %466, %465 : vector<8x32xf32>
    %468 = arith.divf %466, %467 : vector<8x32xf32>
    %469 = arith.mulf %460, %443 : vector<8x32xf32>
    %470 = arith.mulf %454, %462 : vector<8x32xf32>
    %471 = arith.addf %469, %470 : vector<8x32xf32>
    %472 = math.tanh %471 : vector<8x32xf32>
    %473 = arith.mulf %468, %472 : vector<8x32xf32>
    %c0_93 = arith.constant 0 : index
    %c0_94 = arith.constant 0 : index
    %474 = vector.load %arg7[%c0_93, %c0_94] : memref<32x128xf32, #tpu.memory_space<vmem>>, vector<32x128xf32>
    %c0_95 = arith.constant 0 : index
    %c0_96 = arith.constant 0 : index
    %475 = vector.load %arg8[%c0_95, %c0_96] : memref<32x128xf32, #tpu.memory_space<vmem>>, vector<32x128xf32>
    %c0_97 = arith.constant 0 : index
    %c0_98 = arith.constant 0 : index
    %476 = vector.load %arg9[%c0_97, %c0_98] : memref<1x128xf32, #tpu.memory_space<vmem>>, vector<1x128xf32>
    %cst_99 = arith.constant dense<0.000000e+00> : vector<8x128xf32>
    %477 = tpu.matmul %473, %474, %cst_99 {dimension_numbers = #tpu.dot_dimension_numbers<[1], [0], [0], [1], [0, 0, 1, 1], [], []>} : vector<8x32xf32>, vector<32x128xf32>, vector<8x128xf32> -> vector<8x128xf32>
    %478 = vector.broadcast %476 : vector<1x128xf32> to vector<8x128xf32>
    %479 = arith.addf %477, %478 : vector<8x128xf32>
    %cst_100 = arith.constant 0.000000e+00 : f32
    %480 = vector.broadcast %cst_100 : f32 to vector<2x32xf32>
    %cst_101 = arith.constant 0.000000e+00 : f32
    %481 = vector.broadcast %cst_101 : f32 to vector<2x32xf32>
    %482 = vector.extract_strided_slice %479 {offsets = [0, 0], sizes = [2, 128], strides = [1, 1]} : vector<8x128xf32> to vector<2x128xf32>
    %cst_102 = arith.constant dense<0.000000e+00> : vector<2x128xf32>
    %483 = tpu.matmul %480, %475, %cst_102 {dimension_numbers = #tpu.dot_dimension_numbers<[1], [0], [0], [1], [0, 0, 1, 1], [], []>} : vector<2x32xf32>, vector<32x128xf32>, vector<2x128xf32> -> vector<2x128xf32>
    %484 = arith.addf %482, %483 : vector<2x128xf32>
    %485 = vector.extract_strided_slice %484 {offsets = [0, 0], sizes = [2, 32], strides = [1, 1]} : vector<2x128xf32> to vector<2x32xf32>
    %486 = arith.negf %485 : vector<2x32xf32>
    %487 = math.exp %486 : vector<2x32xf32>
    %cst_103 = arith.constant 1.000000e+00 : f32
    %488 = vector.broadcast %cst_103 : f32 to vector<2x32xf32>
    %489 = arith.addf %488, %487 : vector<2x32xf32>
    %490 = arith.divf %488, %489 : vector<2x32xf32>
    %491 = vector.extract_strided_slice %484 {offsets = [0, 32], sizes = [2, 32], strides = [1, 1]} : vector<2x128xf32> to vector<2x32xf32>
    %492 = arith.negf %491 : vector<2x32xf32>
    %493 = math.exp %492 : vector<2x32xf32>
    %cst_104 = arith.constant 1.000000e+00 : f32
    %494 = vector.broadcast %cst_104 : f32 to vector<2x32xf32>
    %495 = arith.addf %494, %493 : vector<2x32xf32>
    %496 = arith.divf %494, %495 : vector<2x32xf32>
    %497 = vector.extract_strided_slice %484 {offsets = [0, 64], sizes = [2, 32], strides = [1, 1]} : vector<2x128xf32> to vector<2x32xf32>
    %498 = math.tanh %497 : vector<2x32xf32>
    %499 = vector.extract_strided_slice %484 {offsets = [0, 96], sizes = [2, 32], strides = [1, 1]} : vector<2x128xf32> to vector<2x32xf32>
    %500 = arith.negf %499 : vector<2x32xf32>
    %501 = math.exp %500 : vector<2x32xf32>
    %cst_105 = arith.constant 1.000000e+00 : f32
    %502 = vector.broadcast %cst_105 : f32 to vector<2x32xf32>
    %503 = arith.addf %502, %501 : vector<2x32xf32>
    %504 = arith.divf %502, %503 : vector<2x32xf32>
    %505 = arith.mulf %496, %481 : vector<2x32xf32>
    %506 = arith.mulf %490, %498 : vector<2x32xf32>
    %507 = arith.addf %505, %506 : vector<2x32xf32>
    %508 = math.tanh %507 : vector<2x32xf32>
    %509 = arith.mulf %504, %508 : vector<2x32xf32>
    %c0_106 = arith.constant 0 : index
    %c0_107 = arith.constant 0 : index
    %510 = vector.load %arg15[%c0_106, %c0_107] : memref<64x32xf32, #tpu.memory_space<vmem>>, vector<2x32xf32>
    tpu.vector_store %arg15[%c0_106, %c0_107], %509 {strides = array<i32>} : memref<64x32xf32, #tpu.memory_space<vmem>>, vector<2x32xf32>,
    %511 = vector.extract_strided_slice %479 {offsets = [2, 0], sizes = [2, 128], strides = [1, 1]} : vector<8x128xf32> to vector<2x128xf32>
    %cst_108 = arith.constant dense<0.000000e+00> : vector<2x128xf32>
    %512 = tpu.matmul %509, %475, %cst_108 {dimension_numbers = #tpu.dot_dimension_numbers<[1], [0], [0], [1], [0, 0, 1, 1], [], []>} : vector<2x32xf32>, vector<32x128xf32>, vector<2x128xf32> -> vector<2x128xf32>
    %513 = arith.addf %511, %512 : vector<2x128xf32>
    %514 = vector.extract_strided_slice %513 {offsets = [0, 0], sizes = [2, 32], strides = [1, 1]} : vector<2x128xf32> to vector<2x32xf32>
    %515 = arith.negf %514 : vector<2x32xf32>
    %516 = math.exp %515 : vector<2x32xf32>
    %cst_109 = arith.constant 1.000000e+00 : f32
    %517 = vector.broadcast %cst_109 : f32 to vector<2x32xf32>
    %518 = arith.addf %517, %516 : vector<2x32xf32>
    %519 = arith.divf %517, %518 : vector<2x32xf32>
    %520 = vector.extract_strided_slice %513 {offsets = [0, 32], sizes = [2, 32], strides = [1, 1]} : vector<2x128xf32> to vector<2x32xf32>
    %521 = arith.negf %520 : vector<2x32xf32>
    %522 = math.exp %521 : vector<2x32xf32>
    %cst_110 = arith.constant 1.000000e+00 : f32
    %523 = vector.broadcast %cst_110 : f32 to vector<2x32xf32>
    %524 = arith.addf %523, %522 : vector<2x32xf32>
    %525 = arith.divf %523, %524 : vector<2x32xf32>
    %526 = vector.extract_strided_slice %513 {offsets = [0, 64], sizes = [2, 32], strides = [1, 1]} : vector<2x128xf32> to vector<2x32xf32>
    %527 = math.tanh %526 : vector<2x32xf32>
    %528 = vector.extract_strided_slice %513 {offsets = [0, 96], sizes = [2, 32], strides = [1, 1]} : vector<2x128xf32> to vector<2x32xf32>
    %529 = arith.negf %528 : vector<2x32xf32>
    %530 = math.exp %529 : vector<2x32xf32>
    %cst_111 = arith.constant 1.000000e+00 : f32
    %531 = vector.broadcast %cst_111 : f32 to vector<2x32xf32>
    %532 = arith.addf %531, %530 : vector<2x32xf32>
    %533 = arith.divf %531, %532 : vector<2x32xf32>
    %534 = arith.mulf %525, %507 : vector<2x32xf32>
    %535 = arith.mulf %519, %527 : vector<2x32xf32>
    %536 = arith.addf %534, %535 : vector<2x32xf32>
    %537 = math.tanh %536 : vector<2x32xf32>
    %538 = arith.mulf %533, %537 : vector<2x32xf32>
    %c2 = arith.constant 2 : index
    %c0_112 = arith.constant 0 : index
    %539 = vector.load %arg15[%c2, %c0_112] : memref<64x32xf32, #tpu.memory_space<vmem>>, vector<2x32xf32>
    tpu.vector_store %arg15[%c2, %c0_112], %538 {strides = array<i32>} : memref<64x32xf32, #tpu.memory_space<vmem>>, vector<2x32xf32>,
    %540 = vector.extract_strided_slice %479 {offsets = [4, 0], sizes = [2, 128], strides = [1, 1]} : vector<8x128xf32> to vector<2x128xf32>
    %cst_113 = arith.constant dense<0.000000e+00> : vector<2x128xf32>
    %541 = tpu.matmul %538, %475, %cst_113 {dimension_numbers = #tpu.dot_dimension_numbers<[1], [0], [0], [1], [0, 0, 1, 1], [], []>} : vector<2x32xf32>, vector<32x128xf32>, vector<2x128xf32> -> vector<2x128xf32>
    %542 = arith.addf %540, %541 : vector<2x128xf32>
    %543 = vector.extract_strided_slice %542 {offsets = [0, 0], sizes = [2, 32], strides = [1, 1]} : vector<2x128xf32> to vector<2x32xf32>
    %544 = arith.negf %543 : vector<2x32xf32>
    %545 = math.exp %544 : vector<2x32xf32>
    %cst_114 = arith.constant 1.000000e+00 : f32
    %546 = vector.broadcast %cst_114 : f32 to vector<2x32xf32>
    %547 = arith.addf %546, %545 : vector<2x32xf32>
    %548 = arith.divf %546, %547 : vector<2x32xf32>
    %549 = vector.extract_strided_slice %542 {offsets = [0, 32], sizes = [2, 32], strides = [1, 1]} : vector<2x128xf32> to vector<2x32xf32>
    %550 = arith.negf %549 : vector<2x32xf32>
    %551 = math.exp %550 : vector<2x32xf32>
    %cst_115 = arith.constant 1.000000e+00 : f32
    %552 = vector.broadcast %cst_115 : f32 to vector<2x32xf32>
    %553 = arith.addf %552, %551 : vector<2x32xf32>
    %554 = arith.divf %552, %553 : vector<2x32xf32>
    %555 = vector.extract_strided_slice %542 {offsets = [0, 64], sizes = [2, 32], strides = [1, 1]} : vector<2x128xf32> to vector<2x32xf32>
    %556 = math.tanh %555 : vector<2x32xf32>
    %557 = vector.extract_strided_slice %542 {offsets = [0, 96], sizes = [2, 32], strides = [1, 1]} : vector<2x128xf32> to vector<2x32xf32>
    %558 = arith.negf %557 : vector<2x32xf32>
    %559 = math.exp %558 : vector<2x32xf32>
    %cst_116 = arith.constant 1.000000e+00 : f32
    %560 = vector.broadcast %cst_116 : f32 to vector<2x32xf32>
    %561 = arith.addf %560, %559 : vector<2x32xf32>
    %562 = arith.divf %560, %561 : vector<2x32xf32>
    %563 = arith.mulf %554, %536 : vector<2x32xf32>
    %564 = arith.mulf %548, %556 : vector<2x32xf32>
    %565 = arith.addf %563, %564 : vector<2x32xf32>
    %566 = math.tanh %565 : vector<2x32xf32>
    %567 = arith.mulf %562, %566 : vector<2x32xf32>
    %c4 = arith.constant 4 : index
    %c0_117 = arith.constant 0 : index
    %568 = vector.load %arg15[%c4, %c0_117] : memref<64x32xf32, #tpu.memory_space<vmem>>, vector<2x32xf32>
    tpu.vector_store %arg15[%c4, %c0_117], %567 {strides = array<i32>} : memref<64x32xf32, #tpu.memory_space<vmem>>, vector<2x32xf32>,
    %569 = vector.extract_strided_slice %479 {offsets = [6, 0], sizes = [2, 128], strides = [1, 1]} : vector<8x128xf32> to vector<2x128xf32>
    %cst_118 = arith.constant dense<0.000000e+00> : vector<2x128xf32>
    %570 = tpu.matmul %567, %475, %cst_118 {dimension_numbers = #tpu.dot_dimension_numbers<[1], [0], [0], [1], [0, 0, 1, 1], [], []>} : vector<2x32xf32>, vector<32x128xf32>, vector<2x128xf32> -> vector<2x128xf32>
    %571 = arith.addf %569, %570 : vector<2x128xf32>
    %572 = vector.extract_strided_slice %571 {offsets = [0, 0], sizes = [2, 32], strides = [1, 1]} : vector<2x128xf32> to vector<2x32xf32>
    %573 = arith.negf %572 : vector<2x32xf32>
    %574 = math.exp %573 : vector<2x32xf32>
    %cst_119 = arith.constant 1.000000e+00 : f32
    %575 = vector.broadcast %cst_119 : f32 to vector<2x32xf32>
    %576 = arith.addf %575, %574 : vector<2x32xf32>
    %577 = arith.divf %575, %576 : vector<2x32xf32>
    %578 = vector.extract_strided_slice %571 {offsets = [0, 32], sizes = [2, 32], strides = [1, 1]} : vector<2x128xf32> to vector<2x32xf32>
    %579 = arith.negf %578 : vector<2x32xf32>
    %580 = math.exp %579 : vector<2x32xf32>
    %cst_120 = arith.constant 1.000000e+00 : f32
    %581 = vector.broadcast %cst_120 : f32 to vector<2x32xf32>
    %582 = arith.addf %581, %580 : vector<2x32xf32>
    %583 = arith.divf %581, %582 : vector<2x32xf32>
    %584 = vector.extract_strided_slice %571 {offsets = [0, 64], sizes = [2, 32], strides = [1, 1]} : vector<2x128xf32> to vector<2x32xf32>
    %585 = math.tanh %584 : vector<2x32xf32>
    %586 = vector.extract_strided_slice %571 {offsets = [0, 96], sizes = [2, 32], strides = [1, 1]} : vector<2x128xf32> to vector<2x32xf32>
    %587 = arith.negf %586 : vector<2x32xf32>
    %588 = math.exp %587 : vector<2x32xf32>
    %cst_121 = arith.constant 1.000000e+00 : f32
    %589 = vector.broadcast %cst_121 : f32 to vector<2x32xf32>
    %590 = arith.addf %589, %588 : vector<2x32xf32>
    %591 = arith.divf %589, %590 : vector<2x32xf32>
    %592 = arith.mulf %583, %565 : vector<2x32xf32>
    %593 = arith.mulf %577, %585 : vector<2x32xf32>
    %594 = arith.addf %592, %593 : vector<2x32xf32>
    %595 = math.tanh %594 : vector<2x32xf32>
    %596 = arith.mulf %591, %595 : vector<2x32xf32>
    %c6 = arith.constant 6 : index
    %c0_122 = arith.constant 0 : index
    %597 = vector.load %arg15[%c6, %c0_122] : memref<64x32xf32, #tpu.memory_space<vmem>>, vector<2x32xf32>
    tpu.vector_store %arg15[%c6, %c0_122], %596 {strides = array<i32>} : memref<64x32xf32, #tpu.memory_space<vmem>>, vector<2x32xf32>,
    %c0_123 = arith.constant 0 : index
    %c0_124 = arith.constant 0 : index
    %598 = vector.load %arg15[%c0_123, %c0_124] : memref<64x32xf32, #tpu.memory_space<vmem>>, vector<8x32xf32>
    %c0_125 = arith.constant 0 : index
    %c0_126 = arith.constant 0 : index
    %599 = vector.load %arg10[%c0_125, %c0_126] : memref<32x128xf32, #tpu.memory_space<vmem>>, vector<32x128xf32>
    %c0_127 = arith.constant 0 : index
    %c0_128 = arith.constant 0 : index
    %600 = vector.load %arg11[%c0_127, %c0_128] : memref<32x128xf32, #tpu.memory_space<vmem>>, vector<32x128xf32>
    %c0_129 = arith.constant 0 : index
    %c0_130 = arith.constant 0 : index
    %601 = vector.load %arg12[%c0_129, %c0_130] : memref<1x128xf32, #tpu.memory_space<vmem>>, vector<1x128xf32>
    %cst_131 = arith.constant dense<0.000000e+00> : vector<8x128xf32>
    %602 = tpu.matmul %598, %599, %cst_131 {dimension_numbers = #tpu.dot_dimension_numbers<[1], [0], [0], [1], [0, 0, 1, 1], [], []>} : vector<8x32xf32>, vector<32x128xf32>, vector<8x128xf32> -> vector<8x128xf32>
    %603 = vector.broadcast %601 : vector<1x128xf32> to vector<8x128xf32>
    %604 = arith.addf %602, %603 : vector<8x128xf32>
    %cst_132 = arith.constant 0.000000e+00 : f32
    %605 = vector.broadcast %cst_132 : f32 to vector<2x32xf32>
    %cst_133 = arith.constant 0.000000e+00 : f32
    %606 = vector.broadcast %cst_133 : f32 to vector<2x32xf32>
    %607 = vector.extract_strided_slice %604 {offsets = [0, 0], sizes = [2, 128], strides = [1, 1]} : vector<8x128xf32> to vector<2x128xf32>
    %cst_134 = arith.constant dense<0.000000e+00> : vector<2x128xf32>
    %608 = tpu.matmul %605, %600, %cst_134 {dimension_numbers = #tpu.dot_dimension_numbers<[1], [0], [0], [1], [0, 0, 1, 1], [], []>} : vector<2x32xf32>, vector<32x128xf32>, vector<2x128xf32> -> vector<2x128xf32>
    %609 = arith.addf %607, %608 : vector<2x128xf32>
    %610 = vector.extract_strided_slice %609 {offsets = [0, 0], sizes = [2, 32], strides = [1, 1]} : vector<2x128xf32> to vector<2x32xf32>
    %611 = arith.negf %610 : vector<2x32xf32>
    %612 = math.exp %611 : vector<2x32xf32>
    %cst_135 = arith.constant 1.000000e+00 : f32
    %613 = vector.broadcast %cst_135 : f32 to vector<2x32xf32>
    %614 = arith.addf %613, %612 : vector<2x32xf32>
    %615 = arith.divf %613, %614 : vector<2x32xf32>
    %616 = vector.extract_strided_slice %609 {offsets = [0, 32], sizes = [2, 32], strides = [1, 1]} : vector<2x128xf32> to vector<2x32xf32>
    %617 = arith.negf %616 : vector<2x32xf32>
    %618 = math.exp %617 : vector<2x32xf32>
    %cst_136 = arith.constant 1.000000e+00 : f32
    %619 = vector.broadcast %cst_136 : f32 to vector<2x32xf32>
    %620 = arith.addf %619, %618 : vector<2x32xf32>
    %621 = arith.divf %619, %620 : vector<2x32xf32>
    %622 = vector.extract_strided_slice %609 {offsets = [0, 64], sizes = [2, 32], strides = [1, 1]} : vector<2x128xf32> to vector<2x32xf32>
    %623 = math.tanh %622 : vector<2x32xf32>
    %624 = vector.extract_strided_slice %609 {offsets = [0, 96], sizes = [2, 32], strides = [1, 1]} : vector<2x128xf32> to vector<2x32xf32>
    %625 = arith.negf %624 : vector<2x32xf32>
    %626 = math.exp %625 : vector<2x32xf32>
    %cst_137 = arith.constant 1.000000e+00 : f32
    %627 = vector.broadcast %cst_137 : f32 to vector<2x32xf32>
    %628 = arith.addf %627, %626 : vector<2x32xf32>
    %629 = arith.divf %627, %628 : vector<2x32xf32>
    %630 = arith.mulf %621, %606 : vector<2x32xf32>
    %631 = arith.mulf %615, %623 : vector<2x32xf32>
    %632 = arith.addf %630, %631 : vector<2x32xf32>
    %633 = math.tanh %632 : vector<2x32xf32>
    %634 = arith.mulf %629, %633 : vector<2x32xf32>
    %635 = vector.extract_strided_slice %604 {offsets = [2, 0], sizes = [2, 128], strides = [1, 1]} : vector<8x128xf32> to vector<2x128xf32>
    %cst_138 = arith.constant dense<0.000000e+00> : vector<2x128xf32>
    %636 = tpu.matmul %634, %600, %cst_138 {dimension_numbers = #tpu.dot_dimension_numbers<[1], [0], [0], [1], [0, 0, 1, 1], [], []>} : vector<2x32xf32>, vector<32x128xf32>, vector<2x128xf32> -> vector<2x128xf32>
    %637 = arith.addf %635, %636 : vector<2x128xf32>
    %638 = vector.extract_strided_slice %637 {offsets = [0, 0], sizes = [2, 32], strides = [1, 1]} : vector<2x128xf32> to vector<2x32xf32>
    %639 = arith.negf %638 : vector<2x32xf32>
    %640 = math.exp %639 : vector<2x32xf32>
    %cst_139 = arith.constant 1.000000e+00 : f32
    %641 = vector.broadcast %cst_139 : f32 to vector<2x32xf32>
    %642 = arith.addf %641, %640 : vector<2x32xf32>
    %643 = arith.divf %641, %642 : vector<2x32xf32>
    %644 = vector.extract_strided_slice %637 {offsets = [0, 32], sizes = [2, 32], strides = [1, 1]} : vector<2x128xf32> to vector<2x32xf32>
    %645 = arith.negf %644 : vector<2x32xf32>
    %646 = math.exp %645 : vector<2x32xf32>
    %cst_140 = arith.constant 1.000000e+00 : f32
    %647 = vector.broadcast %cst_140 : f32 to vector<2x32xf32>
    %648 = arith.addf %647, %646 : vector<2x32xf32>
    %649 = arith.divf %647, %648 : vector<2x32xf32>
    %650 = vector.extract_strided_slice %637 {offsets = [0, 64], sizes = [2, 32], strides = [1, 1]} : vector<2x128xf32> to vector<2x32xf32>
    %651 = math.tanh %650 : vector<2x32xf32>
    %652 = vector.extract_strided_slice %637 {offsets = [0, 96], sizes = [2, 32], strides = [1, 1]} : vector<2x128xf32> to vector<2x32xf32>
    %653 = arith.negf %652 : vector<2x32xf32>
    %654 = math.exp %653 : vector<2x32xf32>
    %cst_141 = arith.constant 1.000000e+00 : f32
    %655 = vector.broadcast %cst_141 : f32 to vector<2x32xf32>
    %656 = arith.addf %655, %654 : vector<2x32xf32>
    %657 = arith.divf %655, %656 : vector<2x32xf32>
    %658 = arith.mulf %649, %632 : vector<2x32xf32>
    %659 = arith.mulf %643, %651 : vector<2x32xf32>
    %660 = arith.addf %658, %659 : vector<2x32xf32>
    %661 = math.tanh %660 : vector<2x32xf32>
    %662 = arith.mulf %657, %661 : vector<2x32xf32>
    %663 = vector.extract_strided_slice %604 {offsets = [4, 0], sizes = [2, 128], strides = [1, 1]} : vector<8x128xf32> to vector<2x128xf32>
    %cst_142 = arith.constant dense<0.000000e+00> : vector<2x128xf32>
    %664 = tpu.matmul %662, %600, %cst_142 {dimension_numbers = #tpu.dot_dimension_numbers<[1], [0], [0], [1], [0, 0, 1, 1], [], []>} : vector<2x32xf32>, vector<32x128xf32>, vector<2x128xf32> -> vector<2x128xf32>
    %665 = arith.addf %663, %664 : vector<2x128xf32>
    %666 = vector.extract_strided_slice %665 {offsets = [0, 0], sizes = [2, 32], strides = [1, 1]} : vector<2x128xf32> to vector<2x32xf32>
    %667 = arith.negf %666 : vector<2x32xf32>
    %668 = math.exp %667 : vector<2x32xf32>
    %cst_143 = arith.constant 1.000000e+00 : f32
    %669 = vector.broadcast %cst_143 : f32 to vector<2x32xf32>
    %670 = arith.addf %669, %668 : vector<2x32xf32>
    %671 = arith.divf %669, %670 : vector<2x32xf32>
    %672 = vector.extract_strided_slice %665 {offsets = [0, 32], sizes = [2, 32], strides = [1, 1]} : vector<2x128xf32> to vector<2x32xf32>
    %673 = arith.negf %672 : vector<2x32xf32>
    %674 = math.exp %673 : vector<2x32xf32>
    %cst_144 = arith.constant 1.000000e+00 : f32
    %675 = vector.broadcast %cst_144 : f32 to vector<2x32xf32>
    %676 = arith.addf %675, %674 : vector<2x32xf32>
    %677 = arith.divf %675, %676 : vector<2x32xf32>
    %678 = vector.extract_strided_slice %665 {offsets = [0, 64], sizes = [2, 32], strides = [1, 1]} : vector<2x128xf32> to vector<2x32xf32>
    %679 = math.tanh %678 : vector<2x32xf32>
    %680 = vector.extract_strided_slice %665 {offsets = [0, 96], sizes = [2, 32], strides = [1, 1]} : vector<2x128xf32> to vector<2x32xf32>
    %681 = arith.negf %680 : vector<2x32xf32>
    %682 = math.exp %681 : vector<2x32xf32>
    %cst_145 = arith.constant 1.000000e+00 : f32
    %683 = vector.broadcast %cst_145 : f32 to vector<2x32xf32>
    %684 = arith.addf %683, %682 : vector<2x32xf32>
    %685 = arith.divf %683, %684 : vector<2x32xf32>
    %686 = arith.mulf %677, %660 : vector<2x32xf32>
    %687 = arith.mulf %671, %679 : vector<2x32xf32>
    %688 = arith.addf %686, %687 : vector<2x32xf32>
    %689 = math.tanh %688 : vector<2x32xf32>
    %690 = arith.mulf %685, %689 : vector<2x32xf32>
    %691 = vector.extract_strided_slice %604 {offsets = [6, 0], sizes = [2, 128], strides = [1, 1]} : vector<8x128xf32> to vector<2x128xf32>
    %cst_146 = arith.constant dense<0.000000e+00> : vector<2x128xf32>
    %692 = tpu.matmul %690, %600, %cst_146 {dimension_numbers = #tpu.dot_dimension_numbers<[1], [0], [0], [1], [0, 0, 1, 1], [], []>} : vector<2x32xf32>, vector<32x128xf32>, vector<2x128xf32> -> vector<2x128xf32>
    %693 = arith.addf %691, %692 : vector<2x128xf32>
    %694 = vector.extract_strided_slice %693 {offsets = [0, 0], sizes = [2, 32], strides = [1, 1]} : vector<2x128xf32> to vector<2x32xf32>
    %695 = arith.negf %694 : vector<2x32xf32>
    %696 = math.exp %695 : vector<2x32xf32>
    %cst_147 = arith.constant 1.000000e+00 : f32
    %697 = vector.broadcast %cst_147 : f32 to vector<2x32xf32>
    %698 = arith.addf %697, %696 : vector<2x32xf32>
    %699 = arith.divf %697, %698 : vector<2x32xf32>
    %700 = vector.extract_strided_slice %693 {offsets = [0, 32], sizes = [2, 32], strides = [1, 1]} : vector<2x128xf32> to vector<2x32xf32>
    %701 = arith.negf %700 : vector<2x32xf32>
    %702 = math.exp %701 : vector<2x32xf32>
    %cst_148 = arith.constant 1.000000e+00 : f32
    %703 = vector.broadcast %cst_148 : f32 to vector<2x32xf32>
    %704 = arith.addf %703, %702 : vector<2x32xf32>
    %705 = arith.divf %703, %704 : vector<2x32xf32>
    %706 = vector.extract_strided_slice %693 {offsets = [0, 64], sizes = [2, 32], strides = [1, 1]} : vector<2x128xf32> to vector<2x32xf32>
    %707 = math.tanh %706 : vector<2x32xf32>
    %708 = vector.extract_strided_slice %693 {offsets = [0, 96], sizes = [2, 32], strides = [1, 1]} : vector<2x128xf32> to vector<2x32xf32>
    %709 = arith.negf %708 : vector<2x32xf32>
    %710 = math.exp %709 : vector<2x32xf32>
    %cst_149 = arith.constant 1.000000e+00 : f32
    %711 = vector.broadcast %cst_149 : f32 to vector<2x32xf32>
    %712 = arith.addf %711, %710 : vector<2x32xf32>
    %713 = arith.divf %711, %712 : vector<2x32xf32>
    %714 = arith.mulf %705, %688 : vector<2x32xf32>
    %715 = arith.mulf %699, %707 : vector<2x32xf32>
    %716 = arith.addf %714, %715 : vector<2x32xf32>
    %717 = math.tanh %716 : vector<2x32xf32>
    %718 = arith.mulf %713, %717 : vector<2x32xf32>
    %c0_150 = arith.constant 0 : index
    %c0_151 = arith.constant 0 : index
    %719 = vector.load %arg13[%c0_150, %c0_151] : memref<4x32xf32, #tpu.memory_space<vmem>>, vector<2x32xf32>
    tpu.vector_store %arg13[%c0_150, %c0_151], %596 {strides = array<i32>} : memref<4x32xf32, #tpu.memory_space<vmem>>, vector<2x32xf32>,
    %c0_152 = arith.constant 0 : index
    %c0_153 = arith.constant 0 : index
    %720 = vector.load %arg14[%c0_152, %c0_153] : memref<4x32xf32, #tpu.memory_space<vmem>>, vector<2x32xf32>
    tpu.vector_store %arg14[%c0_152, %c0_153], %594 {strides = array<i32>} : memref<4x32xf32, #tpu.memory_space<vmem>>, vector<2x32xf32>,
    %c2_154 = arith.constant 2 : index
    %c0_155 = arith.constant 0 : index
    %721 = vector.load %arg13[%c2_154, %c0_155] : memref<4x32xf32, #tpu.memory_space<vmem>>, vector<2x32xf32>
    tpu.vector_store %arg13[%c2_154, %c0_155], %718 {strides = array<i32>} : memref<4x32xf32, #tpu.memory_space<vmem>>, vector<2x32xf32>,
    %c2_156 = arith.constant 2 : index
    %c0_157 = arith.constant 0 : index
    %722 = vector.load %arg14[%c2_156, %c0_157] : memref<4x32xf32, #tpu.memory_space<vmem>>, vector<2x32xf32>
    tpu.vector_store %arg14[%c2_156, %c0_157], %716 {strides = array<i32>} : memref<4x32xf32, #tpu.memory_space<vmem>>, vector<2x32xf32>,
    return
  }
}

</mosaic_0001>

<llo_original>
// kernel: tpu_custom_call.1
$region0: #{tpu_custom_call.1}
  #allocation0 [shape = 'u32[]', space=smem, size = 0x4, offset = 0x4, fixed_abs, tag = 'smem constant byte address 0x4 - core index']
  #allocation1 [shape = 'u32[144,128]{1,0:T(1,128)}', space=vmem, size = 0x12000, scoped, tag = 'internal scratch']
  #allocation2 [shape = 'f32[64,32]{1,0:T(8,128)}', space=vmem, size = 0x8000, scoped, tag = 'scratch operand']
  %s0 = inlined_call_operand.vmem [shape: f32[64,32], index: 0, kind: input, shape index: {}]
  %s1 = inlined_call_operand.vmem [shape: f32[32,128], index: 1, kind: input, shape index: {}]
  %s2 = inlined_call_operand.vmem [shape: f32[32,128], index: 2, kind: input, shape index: {}]
  %s3 = inlined_call_operand.vmem [shape: f32[1,128], index: 3, kind: input, shape index: {}]
  %s4 = inlined_call_operand.vmem [shape: f32[32,128], index: 4, kind: input, shape index: {}]
  %s5 = inlined_call_operand.hbm [shape: f32[32,128], index: 5, kind: input, shape index: {}]
  %s6 = inlined_call_operand.vmem [shape: f32[1,128], index: 6, kind: input, shape index: {}]
  %s7 = inlined_call_operand.hbm [shape: f32[32,128], index: 7, kind: input, shape index: {}]
  %s8 = inlined_call_operand.hbm [shape: f32[32,128], index: 8, kind: input, shape index: {}]
  %s9 = inlined_call_operand.hbm [shape: f32[1,128], index: 9, kind: input, shape index: {}]
  %s10 = inlined_call_operand.vmem [shape: f32[32,128], index: 10, kind: input, shape index: {}]
  %s11 = inlined_call_operand.hbm [shape: f32[32,128], index: 11, kind: input, shape index: {}]
  %s12 = inlined_call_operand.vmem [shape: f32[1,128], index: 12, kind: input, shape index: {}]
  %s13 = inlined_call_operand.hbm [shape: f32[4,32], index: 13, kind: output, shape index: {0}]
  %s14 = inlined_call_operand.hbm [shape: f32[4,32], index: 14, kind: output, shape index: {1}]
  %15 = xla_tuple %s13, %s14
  %s16 = sld [smem:[#allocation0]]
  $region90: #{tpu_custom_call.1} parent=0
    _
  %s18 = ssub.s32 1, %s16
  %s19 = scalar_select 0, %s18, %s16
  $region1: #{tpu_custom_call.1} parent=0
    #allocation3 [shape = 'u8[16384]{0}', space=vmem, size = 0x4000, scoped, tag = 'input window, operand 5, single buffered']
    #allocation4 [shape = 's32[1]{0}', space=sflag, size = 0x4, scoped, tag = 'scoped memory for tpu_custom_call.1']
    #allocation5 [shape = 's32[1]{0}', space=sflag, size = 0x4, scoped, tag = 'scoped memory for tpu_custom_call.1']
    #allocation6 [shape = 'u8[16384]{0}', space=vmem, size = 0x4000, scoped, tag = 'input window, operand 7, single buffered']
    #allocation7 [shape = 's32[1]{0}', space=sflag, size = 0x4, scoped, tag = 'scoped memory for tpu_custom_call.1']
    #allocation8 [shape = 'u8[16384]{0}', space=vmem, size = 0x4000, scoped, tag = 'input window, operand 8, single buffered']
    #allocation9 [shape = 'u8[512]{0}', space=vmem, size = 0x400, scoped, tag = 'input window, operand 9, single buffered']
    #allocation10 [shape = 's32[1]{0}', space=sflag, size = 0x4, scoped, tag = 'scoped memory for tpu_custom_call.1']
    #allocation11 [shape = 'u8[16384]{0}', space=vmem, size = 0x4000, scoped, tag = 'input window, operand 11, single buffered']
    #allocation12 [shape = 'u8[2048]{0}', space=vmem, size = 0x800, scoped, tag = 'output window, operand 0, single buffered']
    #allocation13 [shape = 'u8[2048]{0}', space=vmem, size = 0x800, scoped, tag = 'output window, operand 1, single buffered']
    #allocation14 [shape = 's32[1]{0}', space=sflag, size = 0x4, scoped, tag = 'scoped memory for tpu_custom_call.1']
    %20 = vsyncpa [#allocation4], 0
    %21 = vsyncpa [#allocation7], 0
    %22 = vsyncpa [#allocation10], 0
    %23 = vsyncpa [#allocation5], 0
    %24 = vsyncpa [#allocation14], 0
    // Predicated region
    $region2: #{tpu_custom_call.1} parent=1 // pred_check
      _
    $region3: #{tpu_custom_call.1} parent=1 // pred_check_branch
      %26 = sbr.rel (0) target = $region5
    $region4: #{tpu_custom_call.1} parent=1 // pred_region
      _
    $region5: #{tpu_custom_call.1} parent=1 // pred_fallthru
      _
    // Predicated region
    $region6: #{tpu_custom_call.1} parent=1 // pred_check
      _
    $region7: #{tpu_custom_call.1} parent=1 // pred_check_branch
      %28 = sbr.rel (0) target = $region9
    $region8: #{tpu_custom_call.1} parent=1 // pred_region
      _
    $region9: #{tpu_custom_call.1} parent=1 // pred_fallthru
      _
    // Predicated region
    $region10: #{tpu_custom_call.1} parent=1 // pred_check
      _
    $region11: #{tpu_custom_call.1} parent=1 // pred_check_branch
      %30 = sbr.rel (0) target = $region13
    $region12: #{tpu_custom_call.1} parent=1 // pred_region
      _
    $region13: #{tpu_custom_call.1} parent=1 // pred_fallthru
      _
    // Predicated region
    $region14: #{tpu_custom_call.1} parent=1 // pred_check
      _
    $region15: #{tpu_custom_call.1} parent=1 // pred_check_branch
      %32 = sbr.rel (0) target = $region17
    $region16: #{tpu_custom_call.1} parent=1 // pred_region
      _
    $region17: #{tpu_custom_call.1} parent=1 // pred_fallthru
      _
    // Predicated region
    $region18: #{tpu_custom_call.1} parent=1 // pred_check
      _
    $region19: #{tpu_custom_call.1} parent=1 // pred_check_branch
      %34 = sbr.rel (0) target = $region21
    $region20: #{tpu_custom_call.1} parent=1 // pred_region
      _
    $region21: #{tpu_custom_call.1} parent=1 // pred_fallthru
      _
    // Predicated region
    $region22: #{tpu_custom_call.1} parent=1 // pred_check
      _
    $region23: #{tpu_custom_call.1} parent=1 // pred_check_branch
      %36 = sbr.rel (0) target = $region25
    $region24: #{tpu_custom_call.1} parent=1 // pred_region
      %s38 = ssub.s32 512, 512
      %39 = vsyncadd [#allocation4], %s38
      %s40 = sshll.u32 [#allocation3], 4
      %s41 = int_to_ptr.vmem [resolvable:$true] %s40
      %46 = dma.hbm_to_vmem [thread:$0]  %s5, 512, %s41, [#allocation4], 128, 128, 8
    $region25: #{tpu_custom_call.1} parent=1 // pred_fallthru
      _
    // Predicated region
    $region26: #{tpu_custom_call.1} parent=1 // pred_check
      _
    $region27: #{tpu_custom_call.1} parent=1 // pred_check_branch
      %48 = sbr.rel (0) target = $region29
    $region28: #{tpu_custom_call.1} parent=1 // pred_region
      _
    $region29: #{tpu_custom_call.1} parent=1 // pred_fallthru
      _
    // Predicated region
    $region30: #{tpu_custom_call.1} parent=1 // pred_check
      _
    $region31: #{tpu_custom_call.1} parent=1 // pred_check_branch
      %50 = sbr.rel (0) target = $region33
    $region32: #{tpu_custom_call.1} parent=1 // pred_region
      %s52 = ssub.s32 512, 512
      %53 = vsyncadd [#allocation7], %s52
      %s54 = sshll.u32 [#allocation6], 4
      %s55 = int_to_ptr.vmem [resolvable:$true] %s54
      %60 = dma.hbm_to_vmem [thread:$0]  %s7, 512, %s55, [#allocation7], 128, 128, 8
    $region33: #{tpu_custom_call.1} parent=1 // pred_fallthru
      _
    // Predicated region
    $region34: #{tpu_custom_call.1} parent=1 // pred_check
      _
    $region35: #{tpu_custom_call.1} parent=1 // pred_check_branch
      %62 = sbr.rel (0) target = $region37
    $region36: #{tpu_custom_call.1} parent=1 // pred_region
      %s64 = ssub.s32 512, 512
      %65 = vsyncadd [#allocation7], %s64
      %s66 = sshll.u32 [#allocation8], 4
      %s67 = int_to_ptr.vmem [resolvable:$true] %s66
      %72 = dma.hbm_to_vmem [thread:$0]  %s8, 512, %s67, [#allocation7], 128, 128, 8
    $region37: #{tpu_custom_call.1} parent=1 // pred_fallthru
      _
    // Predicated region
    $region38: #{tpu_custom_call.1} parent=1 // pred_check
      _
    $region39: #{tpu_custom_call.1} parent=1 // pred_check_branch
      %74 = sbr.rel (0) target = $region41
    $region40: #{tpu_custom_call.1} parent=1 // pred_region
      %s76 = ssub.s32 16, 16
      %77 = vsyncadd [#allocation10], %s76
      %s79 = sshll.u32 [#allocation9], 4
      %s80 = int_to_ptr.vmem [resolvable:$true] %s79
      %82 = dma.hbm_to_vmem [thread:$0]  %s9, 16, %s80, [#allocation10]
    $region41: #{tpu_custom_call.1} parent=1 // pred_fallthru
      _
    // Predicated region
    $region42: #{tpu_custom_call.1} parent=1 // pred_check
      _
    $region43: #{tpu_custom_call.1} parent=1 // pred_check_branch
      %84 = sbr.rel (0) target = $region45
    $region44: #{tpu_custom_call.1} parent=1 // pred_region
      _
    $region45: #{tpu_custom_call.1} parent=1 // pred_fallthru
      _
    // Predicated region
    $region46: #{tpu_custom_call.1} parent=1 // pred_check
      _
    $region47: #{tpu_custom_call.1} parent=1 // pred_check_branch
      %86 = sbr.rel (0) target = $region49
    $region48: #{tpu_custom_call.1} parent=1 // pred_region
      %s88 = ssub.s32 512, 512
      %89 = vsyncadd [#allocation10], %s88
      %s90 = sshll.u32 [#allocation11], 4
      %s91 = int_to_ptr.vmem [resolvable:$true] %s90
      %96 = dma.hbm_to_vmem [thread:$0]  %s11, 512, %s91, [#allocation10], 128, 128, 8
    $region49: #{tpu_custom_call.1} parent=1 // pred_fallthru
      _
    // Predicated region
    $region50: #{tpu_custom_call.1} parent=1 // pred_check
      _
    $region51: #{tpu_custom_call.1} parent=1 // pred_check_branch
      %98 = sbr.rel (0) target = $region53
    $region52: #{tpu_custom_call.1} parent=1 // pred_region
      _
    $region53: #{tpu_custom_call.1} parent=1 // pred_fallthru
      _
    // Predicated region
    $region54: #{tpu_custom_call.1} parent=1 // pred_check
      _
    $region55: #{tpu_custom_call.1} parent=1 // pred_check_branch
      %100 = sbr.rel (0) target = $region57
    $region56: #{tpu_custom_call.1} parent=1 // pred_region
      %101 = dma.done [#allocation4], 512
    $region57: #{tpu_custom_call.1} parent=1 // pred_fallthru
      _
    // Predicated region
    $region58: #{tpu_custom_call.1} parent=1 // pred_check
      _
    $region59: #{tpu_custom_call.1} parent=1 // pred_check_branch
      %103 = sbr.rel (0) target = $region61
    $region60: #{tpu_custom_call.1} parent=1 // pred_region
      %104 = dma.done [#allocation7], 512
    $region61: #{tpu_custom_call.1} parent=1 // pred_fallthru
      _
    // Predicated region
    $region62: #{tpu_custom_call.1} parent=1 // pred_check
      _
    $region63: #{tpu_custom_call.1} parent=1 // pred_check_branch
      %106 = sbr.rel (0) target = $region65
    $region64: #{tpu_custom_call.1} parent=1 // pred_region
      %107 = dma.done [#allocation7], 512
    $region65: #{tpu_custom_call.1} parent=1 // pred_fallthru
      _
    // Predicated region
    $region66: #{tpu_custom_call.1} parent=1 // pred_check
      _
    $region67: #{tpu_custom_call.1} parent=1 // pred_check_branch
      %109 = sbr.rel (0) target = $region69
    $region68: #{tpu_custom_call.1} parent=1 // pred_region
      %110 = dma.done [#allocation10], 16
    $region69: #{tpu_custom_call.1} parent=1 // pred_fallthru
      _
    // Predicated region
    $region70: #{tpu_custom_call.1} parent=1 // pred_check
      _
    $region71: #{tpu_custom_call.1} parent=1 // pred_check_branch
      %112 = sbr.rel (0) target = $region73
    $region72: #{tpu_custom_call.1} parent=1 // pred_region
      %113 = dma.done [#allocation10], 512
    $region73: #{tpu_custom_call.1} parent=1 // pred_fallthru
      _
    %v114 = vld [vmem:[%s0] sm:$0xff]
    %v115 = vld [vmem:[%s0 + $0x8] sm:$0xff]
    %v116 = vld [vmem:[%s0 + $0x10] sm:$0xff]
    %v117 = vld [vmem:[%s0 + $0x18] sm:$0xff]
    %v118 = vld [vmem:[%s0 + $0x20] sm:$0xff]
    %v119 = vld [vmem:[%s0 + $0x28] sm:$0xff]
    %v120 = vld [vmem:[%s0 + $0x30] sm:$0xff]
    %v121 = vld [vmem:[%s0 + $0x38] sm:$0xff]
    %v122 = vld [vmem:[%s1] sm:$0xff]
    %v123 = vld [vmem:[%s1 + $0x8] sm:$0xff]
    %v124 = vld [vmem:[%s1 + $0x10] sm:$0xff]
    %v125 = vld [vmem:[%s1 + $0x18] sm:$0xff]
    %v126 = vld [vmem:[%s2] sm:$0xff]
    %v127 = vld [vmem:[%s2 + $0x8] sm:$0xff]
    %v128 = vld [vmem:[%s2 + $0x10] sm:$0xff]
    %v129 = vld [vmem:[%s2 + $0x18] sm:$0xff]
    %v130 = vld [vmem:[%s3] sm:$0x1]
    %v132 = vlaneseq
    %v133 = vshrl.u32 %v132, 7
    %v134 = vsub.s32 0, %v133
    %v135 = vrot.slane %v130, %v134
    %vm137 = vcmask 261120
    %v139 = vsel %vm137, %v114, 0
    %v142 = vsel %vm137, %v115, 0
    %v145 = vsel %vm137, %v116, 0
    %v148 = vsel %vm137, %v117, 0
    %v151 = vsel %vm137, %v118, 0
    %v154 = vsel %vm137, %v119, 0
    %v157 = vsel %vm137, %v120, 0
    %v160 = vsel %vm137, %v121, 0
    %162 = vmatprep.subr.mxu0 0.0
    %163 = vmatpush1.msra.mxu0 %v122
    %164 = vmatprep.subr.mxu0 0.0
    %165 = vmatpush1.msra.mxu0 %v123
    %166 = vmatprep.subr.mxu0 0.0
    %167 = vmatpush1.msra.mxu0 %v124
    %168 = vmatprep.subr.mxu0 0.0
    %169 = vmatpush1.msra.mxu0 %v125
    %170 = vmatprep.subr.mxu0 0.0
    %171 = vmatpush1.msra.mxu0 0.0
    %172 = vmatprep.subr.mxu0 0.0
    %173 = vmatpush1.msra.mxu0 0.0
    %174 = vmatprep.subr.mxu0 0.0
    %175 = vmatpush1.msra.mxu0 0.0
    %176 = vmatprep.subr.mxu0 0.0
    %177 = vmatpush1.msra.mxu0 0.0
    %178 = vmatprep.subr.mxu0 0.0
    %179 = vmatpush1.msra.mxu0 0.0
    %180 = vmatprep.subr.mxu0 0.0
    %181 = vmatpush1.msra.mxu0 0.0
    %182 = vmatprep.subr.mxu0 0.0
    %183 = vmatpush1.msra.mxu0 0.0
    %184 = vmatprep.subr.mxu0 0.0
    %185 = vmatpush1.msra.mxu0 0.0
    %186 = vmatprep.subr.mxu0 0.0
    %187 = vmatpush1.msra.mxu0 0.0
    %188 = vmatprep.subr.mxu0 0.0
    %189 = vmatpush1.msra.mxu0 0.0
    %190 = vmatprep.subr.mxu0 0.0
    %191 = vmatpush1.msra.mxu0 0.0
    %192 = vmatprep.subr.mxu0 0.0
    %193 = vmatpush1.msra.mxu0 0.0
    %194 = vmatprep.subr.mxu0 0.0
    %195 = vmatpush1.msra.mxu0 0.0
    %196 = vmatprep.subr.mxu0 0.0
    %197 = vmatpush1.msra.mxu0 0.0
    %198 = vmatprep.subr.mxu0 0.0
    %199 = vmatpush1.msra.mxu0 0.0
    %200 = vmatprep.subr.mxu0 0.0
    %201 = vmatpush1.msra.mxu0 0.0
    %202 = vmatprep.subr.mxu0 0.0
    %203 = vmatpush1.msra.mxu0 0.0
    %204 = vmatprep.subr.mxu0 0.0
    %205 = vmatpush1.msra.mxu0 0.0
    %206 = vmatprep.subr.mxu0 0.0
    %207 = vmatpush1.msra.mxu0 0.0
    %208 = vmatprep.subr.mxu0 0.0
    %209 = vmatpush1.msra.mxu0 0.0
    %210 = vmatprep.subr.mxu0 0.0
    %211 = vmatpush1.msra.mxu0 0.0
    %212 = vmatprep.subr.mxu0 0.0
    %213 = vmatpush1.msra.mxu0 0.0
    %214 = vmatprep.subr.mxu0 0.0
    %215 = vmatpush1.msra.mxu0 0.0
    %216 = vmatprep.subr.mxu0 0.0
    %217 = vmatpush1.msra.mxu0 0.0
    %218 = vmatprep.subr.mxu0 0.0
    %219 = vmatpush1.msra.mxu0 0.0
    %220 = vmatprep.subr.mxu0 0.0
    %221 = vmatpush1.msra.mxu0 0.0
    %222 = vmatprep.subr.mxu0 0.0
    %223 = vmatpush1.msra.mxu0 0.0
    %224 = vmatprep.subr.mxu0 0.0
    %225 = vmatpush1.msra.mxu0 0.0
    %226 = vmatprep.mubr.f32.mxu0 0.0
    %227 = vmatmul.mubr.f32.gmra.mrb[0].mxu0 %v139
    %v228 = vpop.f32.mrb[0].mxu0
    %v229 = vadd.f32 %v135, %v228
    %v230 = vpop.f32.mrb[0].mxu0
    %231 = vmatprep.mubr.f32.mxu0 0.0
    %232 = vmatmul.mubr.f32.gmra.mrb[0].mxu0 %v142
    %v233 = vpop.f32.mrb[0].mxu0
    %v234 = vadd.f32 %v135, %v233
    %v235 = vpop.f32.mrb[0].mxu0
    %236 = vmatprep.mubr.f32.mxu0 0.0
    %237 = vmatmul.mubr.f32.gmra.mrb[0].mxu0 %v145
    %v238 = vpop.f32.mrb[0].mxu0
    %v239 = vadd.f32 %v135, %v238
    %v240 = vpop.f32.mrb[0].mxu0
    %241 = vmatprep.mubr.f32.mxu0 0.0
    %242 = vmatmul.mubr.f32.gmra.mrb[0].mxu0 %v148
    %v243 = vpop.f32.mrb[0].mxu0
    %v244 = vadd.f32 %v135, %v243
    %v245 = vpop.f32.mrb[0].mxu0
    %246 = vmatprep.mubr.f32.mxu0 0.0
    %247 = vmatmul.mubr.f32.gmra.mrb[0].mxu0 %v151
    %v248 = vpop.f32.mrb[0].mxu0
    %v249 = vadd.f32 %v135, %v248
    %v250 = vpop.f32.mrb[0].mxu0
    %251 = vmatprep.mubr.f32.mxu0 0.0
    %252 = vmatmul.mubr.f32.gmra.mrb[0].mxu0 %v154
    %v253 = vpop.f32.mrb[0].mxu0
    %v254 = vadd.f32 %v135, %v253
    %v255 = vpop.f32.mrb[0].mxu0
    %256 = vmatprep.mubr.f32.mxu0 0.0
    %257 = vmatmul.mubr.f32.gmra.mrb[0].mxu0 %v157
    %v258 = vpop.f32.mrb[0].mxu0
    %v259 = vadd.f32 %v135, %v258
    %v260 = vpop.f32.mrb[0].mxu0
    %261 = vmatprep.mubr.f32.mxu0 0.0
    %262 = vmatmul.mubr.f32.gmra.mrb[0].mxu0 %v160
    %v263 = vpop.f32.mrb[0].mxu0
    %v264 = vadd.f32 %v135, %v263
    %v265 = vpop.f32.mrb[0].mxu0
    %266 = vdwg.mxu0
    %v268 = vsel %vm137, 0.0, 0
    %270 = vmatprep.subr.mxu0 0.0
    %271 = vmatpush1.msra.mxu0 %v126
    %272 = vmatprep.subr.mxu0 0.0
    %273 = vmatpush1.msra.mxu0 %v127
    %274 = vmatprep.subr.mxu0 0.0
    %275 = vmatpush1.msra.mxu0 %v128
    %276 = vmatprep.subr.mxu0 0.0
    %277 = vmatpush1.msra.mxu0 %v129
    %278 = vmatprep.subr.mxu0 0.0
    %279 = vmatpush1.msra.mxu0 0.0
    %280 = vmatprep.subr.mxu0 0.0
    %281 = vmatpush1.msra.mxu0 0.0
    %282 = vmatprep.subr.mxu0 0.0
    %283 = vmatpush1.msra.mxu0 0.0
    %284 = vmatprep.subr.mxu0 0.0
    %285 = vmatpush1.msra.mxu0 0.0
    %286 = vmatprep.subr.mxu0 0.0
    %287 = vmatpush1.msra.mxu0 0.0
    %288 = vmatprep.subr.mxu0 0.0
    %289 = vmatpush1.msra.mxu0 0.0
    %290 = vmatprep.subr.mxu0 0.0
    %291 = vmatpush1.msra.mxu0 0.0
    %292 = vmatprep.subr.mxu0 0.0
    %293 = vmatpush1.msra.mxu0 0.0
    %294 = vmatprep.subr.mxu0 0.0
    %295 = vmatpush1.msra.mxu0 0.0
    %296 = vmatprep.subr.mxu0 0.0
    %297 = vmatpush1.msra.mxu0 0.0
    %298 = vmatprep.subr.mxu0 0.0
    %299 = vmatpush1.msra.mxu0 0.0
    %300 = vmatprep.subr.mxu0 0.0
    %301 = vmatpush1.msra.mxu0 0.0
    %302 = vmatprep.subr.mxu0 0.0
    %303 = vmatpush1.msra.mxu0 0.0
    %304 = vmatprep.subr.mxu0 0.0
    %305 = vmatpush1.msra.mxu0 0.0
    %306 = vmatprep.subr.mxu0 0.0
    %307 = vmatpush1.msra.mxu0 0.0
    %308 = vmatprep.subr.mxu0 0.0
    %309 = vmatpush1.msra.mxu0 0.0
    %310 = vmatprep.subr.mxu0 0.0
    %311 = vmatpush1.msra.mxu0 0.0
    %312 = vmatprep.subr.mxu0 0.0
    %313 = vmatpush1.msra.mxu0 0.0
    %314 = vmatprep.subr.mxu0 0.0
    %315 = vmatpush1.msra.mxu0 0.0
    %316 = vmatprep.subr.mxu0 0.0
    %317 = vmatpush1.msra.mxu0 0.0
    %318 = vmatprep.subr.mxu0 0.0
    %319 = vmatpush1.msra.mxu0 0.0
    %320 = vmatprep.subr.mxu0 0.0
    %321 = vmatpush1.msra.mxu0 0.0
    %322 = vmatprep.subr.mxu0 0.0
    %323 = vmatpush1.msra.mxu0 0.0
    %324 = vmatprep.subr.mxu0 0.0
    %325 = vmatpush1.msra.mxu0 0.0
    %326 = vmatprep.subr.mxu0 0.0
    %327 = vmatpush1.msra.mxu0 0.0
    %328 = vmatprep.subr.mxu0 0.0
    %329 = vmatpush1.msra.mxu0 0.0
    %330 = vmatprep.subr.mxu0 0.0
    %331 = vmatpush1.msra.mxu0 0.0
    %332 = vmatprep.subr.mxu0 0.0
    %333 = vmatpush1.msra.mxu0 0.0
    %334 = vmatprep.mubr.f32.mxu0 0.0
    %335 = vmatmul.mubr.f32.gmra.mrb[0].mxu0 %v268
    %v336 = vpop.f32.mrb[0].mxu0
    %v337 = vadd.f32 0.0, %v336
    %v338 = vpop.f32.mrb[0].mxu0
    %339 = vdwg.mxu0
    %v340 = vadd.f32 %v229, %v337
    %v341 = vxor.u32 %v340, 2147483648
    %v342 = vmul.f32 %v341, 1.442695
    %v343 = vpow.pop %v342
    %v344 = vadd.f32 %v343, 1.0
    %v345 = vrcp.pop %v344
    %v346 = vmul.f32 1.0, %v345
    %v347 = vtanh.pop %v340
    %v348 = vmul.f32 %v346, 0.0
    %350 = vrot.lane.b32.xlu0 %v347, 64
    %v351 = vpop.permute.xlu0 %350
    %v353 = vmul.f32 %v346, %v351
    %355 = vrot.lane.b32.xlu0 %v353, 32
    %v356 = vpop.permute.xlu0 %355
    %v358 = vadd.f32 %v348, %v356
    %v359 = vtanh.pop %v358
    %361 = vrot.lane.b32.xlu0 %v359, 64
    %v362 = vpop.permute.xlu0 %361
    %v364 = vmul.f32 %v346, %v362
    %366 = vrot.lane.b32.xlu0 %v364, 32
    %v367 = vpop.permute.xlu0 %366
    %369 = vst.msk [vmem:[#allocation2] sm:$0xff] %vm137, %v367
    %v370 = vsel %vm137, %v367, 0
    %372 = vmatprep.subr.mxu0 0.0
    %373 = vmatpush1.msra.mxu0 %v126
    %374 = vmatprep.subr.mxu0 0.0
    %375 = vmatpush1.msra.mxu0 %v127
    %376 = vmatprep.subr.mxu0 0.0
    %377 = vmatpush1.msra.mxu0 %v128
    %378 = vmatprep.subr.mxu0 0.0
    %379 = vmatpush1.msra.mxu0 %v129
    %380 = vmatprep.subr.mxu0 0.0
    %381 = vmatpush1.msra.mxu0 0.0
    %382 = vmatprep.subr.mxu0 0.0
    %383 = vmatpush1.msra.mxu0 0.0
    %384 = vmatprep.subr.mxu0 0.0
    %385 = vmatpush1.msra.mxu0 0.0
    %386 = vmatprep.subr.mxu0 0.0
    %387 = vmatpush1.msra.mxu0 0.0
    %388 = vmatprep.subr.mxu0 0.0
    %389 = vmatpush1.msra.mxu0 0.0
    %390 = vmatprep.subr.mxu0 0.0
    %391 = vmatpush1.msra.mxu0 0.0
    %392 = vmatprep.subr.mxu0 0.0
    %393 = vmatpush1.msra.mxu0 0.0
    %394 = vmatprep.subr.mxu0 0.0
    %395 = vmatpush1.msra.mxu0 0.0
    %396 = vmatprep.subr.mxu0 0.0
    %397 = vmatpush1.msra.mxu0 0.0
    %398 = vmatprep.subr.mxu0 0.0
    %399 = vmatpush1.msra.mxu0 0.0
    %400 = vmatprep.subr.mxu0 0.0
    %401 = vmatpush1.msra.mxu0 0.0
    %402 = vmatprep.subr.mxu0 0.0
    %403 = vmatpush1.msra.mxu0 0.0
    %404 = vmatprep.subr.mxu0 0.0
    %405 = vmatpush1.msra.mxu0 0.0
    %406 = vmatprep.subr.mxu0 0.0
    %407 = vmatpush1.msra.mxu0 0.0
    %408 = vmatprep.subr.mxu0 0.0
    %409 = vmatpush1.msra.mxu0 0.0
    %410 = vmatprep.subr.mxu0 0.0
    %411 = vmatpush1.msra.mxu0 0.0
    %412 = vmatprep.subr.mxu0 0.0
    %413 = vmatpush1.msra.mxu0 0.0
    %414 = vmatprep.subr.mxu0 0.0
    %415 = vmatpush1.msra.mxu0 0.0
    %416 = vmatprep.subr.mxu0 0.0
    %417 = vmatpush1.msra.mxu0 0.0
    %418 = vmatprep.subr.mxu0 0.0
    %419 = vmatpush1.msra.mxu0 0.0
    %420 = vmatprep.subr.mxu0 0.0
    %421 = vmatpush1.msra.mxu0 0.0
    %422 = vmatprep.subr.mxu0 0.0
    %423 = vmatpush1.msra.mxu0 0.0
    %424 = vmatprep.subr.mxu0 0.0
    %425 = vmatpush1.msra.mxu0 0.0
    %426 = vmatprep.subr.mxu0 0.0
    %427 = vmatpush1.msra.mxu0 0.0
    %428 = vmatprep.subr.mxu0 0.0
    %429 = vmatpush1.msra.mxu0 0.0
    %430 = vmatprep.subr.mxu0 0.0
    %431 = vmatpush1.msra.mxu0 0.0
    %432 = vmatprep.subr.mxu0 0.0
    %433 = vmatpush1.msra.mxu0 0.0
    %434 = vmatprep.subr.mxu0 0.0
    %435 = vmatpush1.msra.mxu0 0.0
    %436 = vmatprep.mubr.f32.mxu0 0.0
    %437 = vmatmul.mubr.f32.gmra.mrb[0].mxu0 %v370
    %v438 = vpop.f32.mrb[0].mxu0
    %v439 = vadd.f32 0.0, %v438
    %v440 = vpop.f32.mrb[0].mxu0
    %441 = vdwg.mxu0
    %v442 = vadd.f32 %v234, %v439
    %v443 = vxor.u32 %v442, 2147483648
    %v444 = vmul.f32 %v443, 1.442695
    %v445 = vpow.pop %v444
    %v446 = vadd.f32 %v445, 1.0
    %v447 = vrcp.pop %v446
    %v448 = vmul.f32 1.0, %v447
    %v449 = vtanh.pop %v442
    %v450 = vmul.f32 %v448, %v358
    %452 = vrot.lane.b32.xlu0 %v449, 64
    %v453 = vpop.permute.xlu0 %452
    %v455 = vmul.f32 %v448, %v453
    %457 = vrot.lane.b32.xlu0 %v455, 32
    %v458 = vpop.permute.xlu0 %457
    %v460 = vadd.f32 %v450, %v458
    %v461 = vtanh.pop %v460
    %463 = vrot.lane.b32.xlu0 %v461, 64
    %v464 = vpop.permute.xlu0 %463
    %v466 = vmul.f32 %v448, %v464
    %468 = vrot.lane.b32.xlu0 %v466, 32
    %v469 = vpop.permute.xlu0 %468
    %471 = vst.msk [vmem:[#allocation2 + $0x8] sm:$0xff] %vm137, %v469
    %v472 = vsel %vm137, %v469, 0
    %474 = vmatprep.subr.mxu0 0.0
    %475 = vmatpush1.msra.mxu0 %v126
    %476 = vmatprep.subr.mxu0 0.0
    %477 = vmatpush1.msra.mxu0 %v127
    %478 = vmatprep.subr.mxu0 0.0
    %479 = vmatpush1.msra.mxu0 %v128
    %480 = vmatprep.subr.mxu0 0.0
    %481 = vmatpush1.msra.mxu0 %v129
    %482 = vmatprep.subr.mxu0 0.0
    %483 = vmatpush1.msra.mxu0 0.0
    %484 = vmatprep.subr.mxu0 0.0
    %485 = vmatpush1.msra.mxu0 0.0
    %486 = vmatprep.subr.mxu0 0.0
    %487 = vmatpush1.msra.mxu0 0.0
    %488 = vmatprep.subr.mxu0 0.0
    %489 = vmatpush1.msra.mxu0 0.0
    %490 = vmatprep.subr.mxu0 0.0
    %491 = vmatpush1.msra.mxu0 0.0
    %492 = vmatprep.subr.mxu0 0.0
    %493 = vmatpush1.msra.mxu0 0.0
    %494 = vmatprep.subr.mxu0 0.0
    %495 = vmatpush1.msra.mxu0 0.0
    %496 = vmatprep.subr.mxu0 0.0
    %497 = vmatpush1.msra.mxu0 0.0
    %498 = vmatprep.subr.mxu0 0.0
    %499 = vmatpush1.msra.mxu0 0.0
    %500 = vmatprep.subr.mxu0 0.0
    %501 = vmatpush1.msra.mxu0 0.0
    %502 = vmatprep.subr.mxu0 0.0
    %503 = vmatpush1.msra.mxu0 0.0
    %504 = vmatprep.subr.mxu0 0.0
    %505 = vmatpush1.msra.mxu0 0.0
    %506 = vmatprep.subr.mxu0 0.0
    %507 = vmatpush1.msra.mxu0 0.0
    %508 = vmatprep.subr.mxu0 0.0
    %509 = vmatpush1.msra.mxu0 0.0
    %510 = vmatprep.subr.mxu0 0.0
    %511 = vmatpush1.msra.mxu0 0.0
    %512 = vmatprep.subr.mxu0 0.0
    %513 = vmatpush1.msra.mxu0 0.0
    %514 = vmatprep.subr.mxu0 0.0
    %515 = vmatpush1.msra.mxu0 0.0
    %516 = vmatprep.subr.mxu0 0.0
    %517 = vmatpush1.msra.mxu0 0.0
    %518 = vmatprep.subr.mxu0 0.0
    %519 = vmatpush1.msra.mxu0 0.0
    %520 = vmatprep.subr.mxu0 0.0
    %521 = vmatpush1.msra.mxu0 0.0
    %522 = vmatprep.subr.mxu0 0.0
    %523 = vmatpush1.msra.mxu0 0.0
    %524 = vmatprep.subr.mxu0 0.0
    %525 = vmatpush1.msra.mxu0 0.0
    %526 = vmatprep.subr.mxu0 0.0
    %527 = vmatpush1.msra.mxu0 0.0
    %528 = vmatprep.subr.mxu0 0.0
    %529 = vmatpush1.msra.mxu0 0.0
    %530 = vmatprep.subr.mxu0 0.0
    %531 = vmatpush1.msra.mxu0 0.0
    %532 = vmatprep.subr.mxu0 0.0
    %533 = vmatpush1.msra.mxu0 0.0
    %534 = vmatprep.subr.mxu0 0.0
    %535 = vmatpush1.msra.mxu0 0.0
    %536 = vmatprep.subr.mxu0 0.0
    %537 = vmatpush1.msra.mxu0 0.0
    %538 = vmatprep.mubr.f32.mxu0 0.0
    %539 = vmatmul.mubr.f32.gmra.mrb[0].mxu0 %v472
    %v540 = vpop.f32.mrb[0].mxu0
    %v541 = vadd.f32 0.0, %v540
    %v542 = vpop.f32.mrb[0].mxu0
    %543 = vdwg.mxu0
    %v544 = vadd.f32 %v239, %v541
    %v545 = vxor.u32 %v544, 2147483648
    %v546 = vmul.f32 %v545, 1.442695
    %v547 = vpow.pop %v546
    %v548 = vadd.f32 %v547, 1.0
    %v549 = vrcp.pop %v548
    %v550 = vmul.f32 1.0, %v549
    %v551 = vtanh.pop %v544
    %v552 = vmul.f32 %v550, %v460
    %554 = vrot.lane.b32.xlu0 %v551, 64
    %v555 = vpop.permute.xlu0 %554
    %v557 = vmul.f32 %v550, %v555
    %559 = vrot.lane.b32.xlu0 %v557, 32
    %v560 = vpop.permute.xlu0 %559
    %v562 = vadd.f32 %v552, %v560
    %v563 = vtanh.pop %v562
    %565 = vrot.lane.b32.xlu0 %v563, 64
    %v566 = vpop.permute.xlu0 %565
    %v568 = vmul.f32 %v550, %v566
    %570 = vrot.lane.b32.xlu0 %v568, 32
    %v571 = vpop.permute.xlu0 %570
    %573 = vst.msk [vmem:[#allocation2 + $0x10] sm:$0xff] %vm137, %v571
    %v574 = vsel %vm137, %v571, 0
    %576 = vmatprep.subr.mxu0 0.0
    %577 = vmatpush1.msra.mxu0 %v126
    %578 = vmatprep.subr.mxu0 0.0
    %579 = vmatpush1.msra.mxu0 %v127
    %580 = vmatprep.subr.mxu0 0.0
    %581 = vmatpush1.msra.mxu0 %v128
    %582 = vmatprep.subr.mxu0 0.0
    %583 = vmatpush1.msra.mxu0 %v129
    %584 = vmatprep.subr.mxu0 0.0
    %585 = vmatpush1.msra.mxu0 0.0
    %586 = vmatprep.subr.mxu0 0.0
    %587 = vmatpush1.msra.mxu0 0.0
    %588 = vmatprep.subr.mxu0 0.0
    %589 = vmatpush1.msra.mxu0 0.0
    %590 = vmatprep.subr.mxu0 0.0
    %591 = vmatpush1.msra.mxu0 0.0
    %592 = vmatprep.subr.mxu0 0.0
    %593 = vmatpush1.msra.mxu0 0.0
    %594 = vmatprep.subr.mxu0 0.0
    %595 = vmatpush1.msra.mxu0 0.0
    %596 = vmatprep.subr.mxu0 0.0
    %597 = vmatpush1.msra.mxu0 0.0
    %598 = vmatprep.subr.mxu0 0.0
    %599 = vmatpush1.msra.mxu0 0.0
    %600 = vmatprep.subr.mxu0 0.0
    %601 = vmatpush1.msra.mxu0 0.0
    %602 = vmatprep.subr.mxu0 0.0
    %603 = vmatpush1.msra.mxu0 0.0
    %604 = vmatprep.subr.mxu0 0.0
    %605 = vmatpush1.msra.mxu0 0.0
    %606 = vmatprep.subr.mxu0 0.0
    %607 = vmatpush1.msra.mxu0 0.0
    %608 = vmatprep.subr.mxu0 0.0
    %609 = vmatpush1.msra.mxu0 0.0
    %610 = vmatprep.subr.mxu0 0.0
    %611 = vmatpush1.msra.mxu0 0.0
    %612 = vmatprep.subr.mxu0 0.0
    %613 = vmatpush1.msra.mxu0 0.0
    %614 = vmatprep.subr.mxu0 0.0
    %615 = vmatpush1.msra.mxu0 0.0
    %616 = vmatprep.subr.mxu0 0.0
    %617 = vmatpush1.msra.mxu0 0.0
    %618 = vmatprep.subr.mxu0 0.0
    %619 = vmatpush1.msra.mxu0 0.0
    %620 = vmatprep.subr.mxu0 0.0
    %621 = vmatpush1.msra.mxu0 0.0
    %622 = vmatprep.subr.mxu0 0.0
    %623 = vmatpush1.msra.mxu0 0.0
    %624 = vmatprep.subr.mxu0 0.0
    %625 = vmatpush1.msra.mxu0 0.0
    %626 = vmatprep.subr.mxu0 0.0
    %627 = vmatpush1.msra.mxu0 0.0
    %628 = vmatprep.subr.mxu0 0.0
    %629 = vmatpush1.msra.mxu0 0.0
    %630 = vmatprep.subr.mxu0 0.0
    %631 = vmatpush1.msra.mxu0 0.0
    %632 = vmatprep.subr.mxu0 0.0
    %633 = vmatpush1.msra.mxu0 0.0
    %634 = vmatprep.subr.mxu0 0.0
    %635 = vmatpush1.msra.mxu0 0.0
    %636 = vmatprep.subr.mxu0 0.0
    %637 = vmatpush1.msra.mxu0 0.0
    %638 = vmatprep.subr.mxu0 0.0
    %639 = vmatpush1.msra.mxu0 0.0
    %640 = vmatprep.mubr.f32.mxu0 0.0
    %641 = vmatmul.mubr.f32.gmra.mrb[0].mxu0 %v574
    %v642 = vpop.f32.mrb[0].mxu0
    %v643 = vadd.f32 0.0, %v642
    %v644 = vpop.f32.mrb[0].mxu0
    %645 = vdwg.mxu0
    %v646 = vadd.f32 %v244, %v643
    %v647 = vxor.u32 %v646, 2147483648
    %v648 = vmul.f32 %v647, 1.442695
    %v649 = vpow.pop %v648
    %v650 = vadd.f32 %v649, 1.0
    %v651 = vrcp.pop %v650
    %v652 = vmul.f32 1.0, %v651
    %v653 = vtanh.pop %v646
    %v654 = vmul.f32 %v652, %v562
    %656 = vrot.lane.b32.xlu0 %v653, 64
    %v657 = vpop.permute.xlu0 %656
    %v659 = vmul.f32 %v652, %v657
    %661 = vrot.lane.b32.xlu0 %v659, 32
    %v662 = vpop.permute.xlu0 %661
    %v664 = vadd.f32 %v654, %v662
    %v665 = vtanh.pop %v664
    %667 = vrot.lane.b32.xlu0 %v665, 64
    %v668 = vpop.permute.xlu0 %667
    %v670 = vmul.f32 %v652, %v668
    %672 = vrot.lane.b32.xlu0 %v670, 32
    %v673 = vpop.permute.xlu0 %672
    %675 = vst.msk [vmem:[#allocation2 + $0x18] sm:$0xff] %vm137, %v673
    %v676 = vsel %vm137, %v673, 0
    %678 = vmatprep.subr.mxu0 0.0
    %679 = vmatpush1.msra.mxu0 %v126
    %680 = vmatprep.subr.mxu0 0.0
    %681 = vmatpush1.msra.mxu0 %v127
    %682 = vmatprep.subr.mxu0 0.0
    %683 = vmatpush1.msra.mxu0 %v128
    %684 = vmatprep.subr.mxu0 0.0
    %685 = vmatpush1.msra.mxu0 %v129
    %686 = vmatprep.subr.mxu0 0.0
    %687 = vmatpush1.msra.mxu0 0.0
    %688 = vmatprep.subr.mxu0 0.0
    %689 = vmatpush1.msra.mxu0 0.0
    %690 = vmatprep.subr.mxu0 0.0
    %691 = vmatpush1.msra.mxu0 0.0
    %692 = vmatprep.subr.mxu0 0.0
    %693 = vmatpush1.msra.mxu0 0.0
    %694 = vmatprep.subr.mxu0 0.0
    %695 = vmatpush1.msra.mxu0 0.0
    %696 = vmatprep.subr.mxu0 0.0
    %697 = vmatpush1.msra.mxu0 0.0
    %698 = vmatprep.subr.mxu0 0.0
    %699 = vmatpush1.msra.mxu0 0.0
    %700 = vmatprep.subr.mxu0 0.0
    %701 = vmatpush1.msra.mxu0 0.0
    %702 = vmatprep.subr.mxu0 0.0
    %703 = vmatpush1.msra.mxu0 0.0
    %704 = vmatprep.subr.mxu0 0.0
    %705 = vmatpush1.msra.mxu0 0.0
    %706 = vmatprep.subr.mxu0 0.0
    %707 = vmatpush1.msra.mxu0 0.0
    %708 = vmatprep.subr.mxu0 0.0
    %709 = vmatpush1.msra.mxu0 0.0
    %710 = vmatprep.subr.mxu0 0.0
    %711 = vmatpush1.msra.mxu0 0.0
    %712 = vmatprep.subr.mxu0 0.0
    %713 = vmatpush1.msra.mxu0 0.0
    %714 = vmatprep.subr.mxu0 0.0
    %715 = vmatpush1.msra.mxu0 0.0
    %716 = vmatprep.subr.mxu0 0.0
    %717 = vmatpush1.msra.mxu0 0.0
    %718 = vmatprep.subr.mxu0 0.0
    %719 = vmatpush1.msra.mxu0 0.0
    %720 = vmatprep.subr.mxu0 0.0
    %721 = vmatpush1.msra.mxu0 0.0
    %722 = vmatprep.subr.mxu0 0.0
    %723 = vmatpush1.msra.mxu0 0.0
    %724 = vmatprep.subr.mxu0 0.0
    %725 = vmatpush1.msra.mxu0 0.0
    %726 = vmatprep.subr.mxu0 0.0
    %727 = vmatpush1.msra.mxu0 0.0
    %728 = vmatprep.subr.mxu0 0.0
    %729 = vmatpush1.msra.mxu0 0.0
    %730 = vmatprep.subr.mxu0 0.0
    %731 = vmatpush1.msra.mxu0 0.0
    %732 = vmatprep.subr.mxu0 0.0
    %733 = vmatpush1.msra.mxu0 0.0
    %734 = vmatprep.subr.mxu0 0.0
    %735 = vmatpush1.msra.mxu0 0.0
    %736 = vmatprep.subr.mxu0 0.0
    %737 = vmatpush1.msra.mxu0 0.0
    %738 = vmatprep.subr.mxu0 0.0
    %739 = vmatpush1.msra.mxu0 0.0
    %740 = vmatprep.subr.mxu0 0.0
    %741 = vmatpush1.msra.mxu0 0.0
    %742 = vmatprep.mubr.f32.mxu0 0.0
    %743 = vmatmul.mubr.f32.gmra.mrb[0].mxu0 %v676
    %v744 = vpop.f32.mrb[0].mxu0
    %v745 = vadd.f32 0.0, %v744
    %v746 = vpop.f32.mrb[0].mxu0
    %747 = vdwg.mxu0
    %v748 = vadd.f32 %v249, %v745
    %v749 = vxor.u32 %v748, 2147483648
    %v750 = vmul.f32 %v749, 1.442695
    %v751 = vpow.pop %v750
    %v752 = vadd.f32 %v751, 1.0
    %v753 = vrcp.pop %v752
    %v754 = vmul.f32 1.0, %v753
    %v755 = vtanh.pop %v748
    %v756 = vmul.f32 %v754, %v664
    %758 = vrot.lane.b32.xlu0 %v755, 64
    %v759 = vpop.permute.xlu0 %758
    %v761 = vmul.f32 %v754, %v759
    %763 = vrot.lane.b32.xlu0 %v761, 32
    %v764 = vpop.permute.xlu0 %763
    %v766 = vadd.f32 %v756, %v764
    %v767 = vtanh.pop %v766
    %769 = vrot.lane.b32.xlu0 %v767, 64
    %v770 = vpop.permute.xlu0 %769
    %v772 = vmul.f32 %v754, %v770
    %774 = vrot.lane.b32.xlu0 %v772, 32
    %v775 = vpop.permute.xlu0 %774
    %777 = vst.msk [vmem:[#allocation2 + $0x20] sm:$0xff] %vm137, %v775
    %v778 = vsel %vm137, %v775, 0
    %780 = vmatprep.subr.mxu0 0.0
    %781 = vmatpush1.msra.mxu0 %v126
    %782 = vmatprep.subr.mxu0 0.0
    %783 = vmatpush1.msra.mxu0 %v127
    %784 = vmatprep.subr.mxu0 0.0
    %785 = vmatpush1.msra.mxu0 %v128
    %786 = vmatprep.subr.mxu0 0.0
    %787 = vmatpush1.msra.mxu0 %v129
    %788 = vmatprep.subr.mxu0 0.0
    %789 = vmatpush1.msra.mxu0 0.0
    %790 = vmatprep.subr.mxu0 0.0
    %791 = vmatpush1.msra.mxu0 0.0
    %792 = vmatprep.subr.mxu0 0.0
    %793 = vmatpush1.msra.mxu0 0.0
    %794 = vmatprep.subr.mxu0 0.0
    %795 = vmatpush1.msra.mxu0 0.0
    %796 = vmatprep.subr.mxu0 0.0
    %797 = vmatpush1.msra.mxu0 0.0
    %798 = vmatprep.subr.mxu0 0.0
    %799 = vmatpush1.msra.mxu0 0.0
    %800 = vmatprep.subr.mxu0 0.0
    %801 = vmatpush1.msra.mxu0 0.0
    %802 = vmatprep.subr.mxu0 0.0
    %803 = vmatpush1.msra.mxu0 0.0
    %804 = vmatprep.subr.mxu0 0.0
    %805 = vmatpush1.msra.mxu0 0.0
    %806 = vmatprep.subr.mxu0 0.0
    %807 = vmatpush1.msra.mxu0 0.0
    %808 = vmatprep.subr.mxu0 0.0
    %809 = vmatpush1.msra.mxu0 0.0
    %810 = vmatprep.subr.mxu0 0.0
    %811 = vmatpush1.msra.mxu0 0.0
    %812 = vmatprep.subr.mxu0 0.0
    %813 = vmatpush1.msra.mxu0 0.0
    %814 = vmatprep.subr.mxu0 0.0
    %815 = vmatpush1.msra.mxu0 0.0
    %816 = vmatprep.subr.mxu0 0.0
    %817 = vmatpush1.msra.mxu0 0.0
    %818 = vmatprep.subr.mxu0 0.0
    %819 = vmatpush1.msra.mxu0 0.0
    %820 = vmatprep.subr.mxu0 0.0
    %821 = vmatpush1.msra.mxu0 0.0
    %822 = vmatprep.subr.mxu0 0.0
    %823 = vmatpush1.msra.mxu0 0.0
    %824 = vmatprep.subr.mxu0 0.0
    %825 = vmatpush1.msra.mxu0 0.0
    %826 = vmatprep.subr.mxu0 0.0
    %827 = vmatpush1.msra.mxu0 0.0
    %828 = vmatprep.subr.mxu0 0.0
    %829 = vmatpush1.msra.mxu0 0.0
    %830 = vmatprep.subr.mxu0 0.0
    %831 = vmatpush1.msra.mxu0 0.0
    %832 = vmatprep.subr.mxu0 0.0
    %833 = vmatpush1.msra.mxu0 0.0
    %834 = vmatprep.subr.mxu0 0.0
    %835 = vmatpush1.msra.mxu0 0.0
    %836 = vmatprep.subr.mxu0 0.0
    %837 = vmatpush1.msra.mxu0 0.0
    %838 = vmatprep.subr.mxu0 0.0
    %839 = vmatpush1.msra.mxu0 0.0
    %840 = vmatprep.subr.mxu0 0.0
    %841 = vmatpush1.msra.mxu0 0.0
    %842 = vmatprep.subr.mxu0 0.0
    %843 = vmatpush1.msra.mxu0 0.0
    %844 = vmatprep.mubr.f32.mxu0 0.0
    %845 = vmatmul.mubr.f32.gmra.mrb[0].mxu0 %v778
    %v846 = vpop.f32.mrb[0].mxu0
    %v847 = vadd.f32 0.0, %v846
    %v848 = vpop.f32.mrb[0].mxu0
    %849 = vdwg.mxu0
    %v850 = vadd.f32 %v254, %v847
    %v851 = vxor.u32 %v850, 2147483648
    %v852 = vmul.f32 %v851, 1.442695
    %v853 = vpow.pop %v852
    %v854 = vadd.f32 %v853, 1.0
    %v855 = vrcp.pop %v854
    %v856 = vmul.f32 1.0, %v855
    %v857 = vtanh.pop %v850
    %v858 = vmul.f32 %v856, %v766
    %860 = vrot.lane.b32.xlu0 %v857, 64
    %v861 = vpop.permute.xlu0 %860
    %v863 = vmul.f32 %v856, %v861
    %865 = vrot.lane.b32.xlu0 %v863, 32
    %v866 = vpop.permute.xlu0 %865
    %v868 = vadd.f32 %v858, %v866
    %v869 = vtanh.pop %v868
    %871 = vrot.lane.b32.xlu0 %v869, 64
    %v872 = vpop.permute.xlu0 %871
    %v874 = vmul.f32 %v856, %v872
    %876 = vrot.lane.b32.xlu0 %v874, 32
    %v877 = vpop.permute.xlu0 %876
    %879 = vst.msk [vmem:[#allocation2 + $0x28] sm:$0xff] %vm137, %v877
    %v880 = vsel %vm137, %v877, 0
    %882 = vmatprep.subr.mxu0 0.0
    %883 = vmatpush1.msra.mxu0 %v126
    %884 = vmatprep.subr.mxu0 0.0
    %885 = vmatpush1.msra.mxu0 %v127
    %886 = vmatprep.subr.mxu0 0.0
    %887 = vmatpush1.msra.mxu0 %v128
    %888 = vmatprep.subr.mxu0 0.0
    %889 = vmatpush1.msra.mxu0 %v129
    %890 = vmatprep.subr.mxu0 0.0
    %891 = vmatpush1.msra.mxu0 0.0
    %892 = vmatprep.subr.mxu0 0.0
    %893 = vmatpush1.msra.mxu0 0.0
    %894 = vmatprep.subr.mxu0 0.0
    %895 = vmatpush1.msra.mxu0 0.0
    %896 = vmatprep.subr.mxu0 0.0
    %897 = vmatpush1.msra.mxu0 0.0
    %898 = vmatprep.subr.mxu0 0.0
    %899 = vmatpush1.msra.mxu0 0.0
    %900 = vmatprep.subr.mxu0 0.0
    %901 = vmatpush1.msra.mxu0 0.0
    %902 = vmatprep.subr.mxu0 0.0
    %903 = vmatpush1.msra.mxu0 0.0
    %904 = vmatprep.subr.mxu0 0.0
    %905 = vmatpush1.msra.mxu0 0.0
    %906 = vmatprep.subr.mxu0 0.0
    %907 = vmatpush1.msra.mxu0 0.0
    %908 = vmatprep.subr.mxu0 0.0
    %909 = vmatpush1.msra.mxu0 0.0
    %910 = vmatprep.subr.mxu0 0.0
    %911 = vmatpush1.msra.mxu0 0.0
    %912 = vmatprep.subr.mxu0 0.0
    %913 = vmatpush1.msra.mxu0 0.0
    %914 = vmatprep.subr.mxu0 0.0
    %915 = vmatpush1.msra.mxu0 0.0
    %916 = vmatprep.subr.mxu0 0.0
    %917 = vmatpush1.msra.mxu0 0.0
    %918 = vmatprep.subr.mxu0 0.0
    %919 = vmatpush1.msra.mxu0 0.0
    %920 = vmatprep.subr.mxu0 0.0
    %921 = vmatpush1.msra.mxu0 0.0
    %922 = vmatprep.subr.mxu0 0.0
    %923 = vmatpush1.msra.mxu0 0.0
    %924 = vmatprep.subr.mxu0 0.0
    %925 = vmatpush1.msra.mxu0 0.0
    %926 = vmatprep.subr.mxu0 0.0
    %927 = vmatpush1.msra.mxu0 0.0
    %928 = vmatprep.subr.mxu0 0.0
    %929 = vmatpush1.msra.mxu0 0.0
    %930 = vmatprep.subr.mxu0 0.0
    %931 = vmatpush1.msra.mxu0 0.0
    %932 = vmatprep.subr.mxu0 0.0
    %933 = vmatpush1.msra.mxu0 0.0
    %934 = vmatprep.subr.mxu0 0.0
    %935 = vmatpush1.msra.mxu0 0.0
    %936 = vmatprep.subr.mxu0 0.0
    %937 = vmatpush1.msra.mxu0 0.0
    %938 = vmatprep.subr.mxu0 0.0
    %939 = vmatpush1.msra.mxu0 0.0
    %940 = vmatprep.subr.mxu0 0.0
    %941 = vmatpush1.msra.mxu0 0.0
    %942 = vmatprep.subr.mxu0 0.0
    %943 = vmatpush1.msra.mxu0 0.0
    %944 = vmatprep.subr.mxu0 0.0
    %945 = vmatpush1.msra.mxu0 0.0
    %946 = vmatprep.mubr.f32.mxu0 0.0
    %947 = vmatmul.mubr.f32.gmra.mrb[0].mxu0 %v880
    %v948 = vpop.f32.mrb[0].mxu0
    %v949 = vadd.f32 0.0, %v948
    %v950 = vpop.f32.mrb[0].mxu0
    %951 = vdwg.mxu0
    %v952 = vadd.f32 %v259, %v949
    %v953 = vxor.u32 %v952, 2147483648
    %v954 = vmul.f32 %v953, 1.442695
    %v955 = vpow.pop %v954
    %v956 = vadd.f32 %v955, 1.0
    %v957 = vrcp.pop %v956
    %v958 = vmul.f32 1.0, %v957
    %v959 = vtanh.pop %v952
    %v960 = vmul.f32 %v958, %v868
    %962 = vrot.lane.b32.xlu0 %v959, 64
    %v963 = vpop.permute.xlu0 %962
    %v965 = vmul.f32 %v958, %v963
    %967 = vrot.lane.b32.xlu0 %v965, 32
    %v968 = vpop.permute.xlu0 %967
    %v970 = vadd.f32 %v960, %v968
    %v971 = vtanh.pop %v970
    %973 = vrot.lane.b32.xlu0 %v971, 64
    %v974 = vpop.permute.xlu0 %973
    %v976 = vmul.f32 %v958, %v974
    %978 = vrot.lane.b32.xlu0 %v976, 32
    %v979 = vpop.permute.xlu0 %978
    %981 = vst.msk [vmem:[#allocation2 + $0x30] sm:$0xff] %vm137, %v979
    %v982 = vsel %vm137, %v979, 0
    %984 = vmatprep.subr.mxu0 0.0
    %985 = vmatpush1.msra.mxu0 %v126
    %986 = vmatprep.subr.mxu0 0.0
    %987 = vmatpush1.msra.mxu0 %v127
    %988 = vmatprep.subr.mxu0 0.0
    %989 = vmatpush1.msra.mxu0 %v128
    %990 = vmatprep.subr.mxu0 0.0
    %991 = vmatpush1.msra.mxu0 %v129
    %992 = vmatprep.subr.mxu0 0.0
    %993 = vmatpush1.msra.mxu0 0.0
    %994 = vmatprep.subr.mxu0 0.0
    %995 = vmatpush1.msra.mxu0 0.0
    %996 = vmatprep.subr.mxu0 0.0
    %997 = vmatpush1.msra.mxu0 0.0
    %998 = vmatprep.subr.mxu0 0.0
    %999 = vmatpush1.msra.mxu0 0.0
    %1000 = vmatprep.subr.mxu0 0.0
    %1001 = vmatpush1.msra.mxu0 0.0
    %1002 = vmatprep.subr.mxu0 0.0
    %1003 = vmatpush1.msra.mxu0 0.0
    %1004 = vmatprep.subr.mxu0 0.0
    %1005 = vmatpush1.msra.mxu0 0.0
    %1006 = vmatprep.subr.mxu0 0.0
    %1007 = vmatpush1.msra.mxu0 0.0
    %1008 = vmatprep.subr.mxu0 0.0
    %1009 = vmatpush1.msra.mxu0 0.0
    %1010 = vmatprep.subr.mxu0 0.0
    %1011 = vmatpush1.msra.mxu0 0.0
    %1012 = vmatprep.subr.mxu0 0.0
    %1013 = vmatpush1.msra.mxu0 0.0
    %1014 = vmatprep.subr.mxu0 0.0
    %1015 = vmatpush1.msra.mxu0 0.0
    %1016 = vmatprep.subr.mxu0 0.0
    %1017 = vmatpush1.msra.mxu0 0.0
    %1018 = vmatprep.subr.mxu0 0.0
    %1019 = vmatpush1.msra.mxu0 0.0
    %1020 = vmatprep.subr.mxu0 0.0
    %1021 = vmatpush1.msra.mxu0 0.0
    %1022 = vmatprep.subr.mxu0 0.0
    %1023 = vmatpush1.msra.mxu0 0.0
    %1024 = vmatprep.subr.mxu0 0.0
    %1025 = vmatpush1.msra.mxu0 0.0
    %1026 = vmatprep.subr.mxu0 0.0
    %1027 = vmatpush1.msra.mxu0 0.0
    %1028 = vmatprep.subr.mxu0 0.0
    %1029 = vmatpush1.msra.mxu0 0.0
    %1030 = vmatprep.subr.mxu0 0.0
    %1031 = vmatpush1.msra.mxu0 0.0
    %1032 = vmatprep.subr.mxu0 0.0
    %1033 = vmatpush1.msra.mxu0 0.0
    %1034 = vmatprep.subr.mxu0 0.0
    %1035 = vmatpush1.msra.mxu0 0.0
    %1036 = vmatprep.subr.mxu0 0.0
    %1037 = vmatpush1.msra.mxu0 0.0
    %1038 = vmatprep.subr.mxu0 0.0
    %1039 = vmatpush1.msra.mxu0 0.0
    %1040 = vmatprep.subr.mxu0 0.0
    %1041 = vmatpush1.msra.mxu0 0.0
    %1042 = vmatprep.subr.mxu0 0.0
    %1043 = vmatpush1.msra.mxu0 0.0
    %1044 = vmatprep.subr.mxu0 0.0
    %1045 = vmatpush1.msra.mxu0 0.0
    %1046 = vmatprep.subr.mxu0 0.0
    %1047 = vmatpush1.msra.mxu0 0.0
    %1048 = vmatprep.mubr.f32.mxu0 0.0
    %1049 = vmatmul.mubr.f32.gmra.mrb[0].mxu0 %v982
    %v1050 = vpop.f32.mrb[0].mxu0
    %v1051 = vadd.f32 0.0, %v1050
    %v1052 = vpop.f32.mrb[0].mxu0
    %1053 = vdwg.mxu0
    %v1054 = vadd.f32 %v264, %v1051
    %v1055 = vxor.u32 %v1054, 2147483648
    %v1056 = vmul.f32 %v1055, 1.442695
    %v1057 = vpow.pop %v1056
    %v1058 = vadd.f32 %v1057, 1.0
    %v1059 = vrcp.pop %v1058
    %v1060 = vmul.f32 1.0, %v1059
    %v1061 = vtanh.pop %v1054
    %v1062 = vmul.f32 %v1060, %v970
    %1064 = vrot.lane.b32.xlu0 %v1061, 64
    %v1065 = vpop.permute.xlu0 %1064
    %v1067 = vmul.f32 %v1060, %v1065
    %1069 = vrot.lane.b32.xlu0 %v1067, 32
    %v1070 = vpop.permute.xlu0 %1069
    %v1072 = vadd.f32 %v1062, %v1070
    %v1073 = vtanh.pop %v1072
    %1075 = vrot.lane.b32.xlu0 %v1073, 64
    %v1076 = vpop.permute.xlu0 %1075
    %v1078 = vmul.f32 %v1060, %v1076
    %1080 = vrot.lane.b32.xlu0 %v1078, 32
    %v1081 = vpop.permute.xlu0 %1080
    %1083 = vst.msk [vmem:[#allocation2 + $0x38] sm:$0xff] %vm137, %v1081
    %v1084 = vld [vmem:[#allocation2] sm:$0xff]
    %v1085 = vld [vmem:[#allocation2 + $0x8] sm:$0xff]
    %v1086 = vld [vmem:[#allocation2 + $0x10] sm:$0xff]
    %v1087 = vld [vmem:[#allocation2 + $0x18] sm:$0xff]
    %v1088 = vld [vmem:[#allocation2 + $0x20] sm:$0xff]
    %v1089 = vld [vmem:[#allocation2 + $0x28] sm:$0xff]
    %v1090 = vld [vmem:[#allocation2 + $0x30] sm:$0xff]
    %v1091 = vld [vmem:[#allocation2 + $0x38] sm:$0xff]
    %v1092 = vld [vmem:[%s4] sm:$0xff]
    %v1093 = vld [vmem:[%s4 + $0x8] sm:$0xff]
    %v1094 = vld [vmem:[%s4 + $0x10] sm:$0xff]
    %v1095 = vld [vmem:[%s4 + $0x18] sm:$0xff]
    %v1096 = vld [vmem:[#allocation3] sm:$0xff]
    %v1097 = vld [vmem:[#allocation3 + $0x8] sm:$0xff]
    %v1098 = vld [vmem:[#allocation3 + $0x10] sm:$0xff]
    %v1099 = vld [vmem:[#allocation3 + $0x18] sm:$0xff]
    %v1100 = vld [vmem:[%s6] sm:$0x1]
    %v1102 = vlaneseq
    %v1103 = vshrl.u32 %v1102, 7
    %v1104 = vsub.s32 0, %v1103
    %v1105 = vrot.slane %v1100, %v1104
    %v1108 = vsel %vm137, %v1084, 0
    %v1111 = vsel %vm137, %v1085, 0
    %v1114 = vsel %vm137, %v1086, 0
    %v1117 = vsel %vm137, %v1087, 0
    %v1120 = vsel %vm137, %v1088, 0
    %v1123 = vsel %vm137, %v1089, 0
    %v1126 = vsel %vm137, %v1090, 0
    %v1129 = vsel %vm137, %v1091, 0
    %1131 = vmatprep.subr.mxu0 0.0
    %1132 = vmatpush1.msra.mxu0 %v1092
    %1133 = vmatprep.subr.mxu0 0.0
    %1134 = vmatpush1.msra.mxu0 %v1093
    %1135 = vmatprep.subr.mxu0 0.0
    %1136 = vmatpush1.msra.mxu0 %v1094
    %1137 = vmatprep.subr.mxu0 0.0
    %1138 = vmatpush1.msra.mxu0 %v1095
    %1139 = vmatprep.subr.mxu0 0.0
    %1140 = vmatpush1.msra.mxu0 0.0
    %1141 = vmatprep.subr.mxu0 0.0
    %1142 = vmatpush1.msra.mxu0 0.0
    %1143 = vmatprep.subr.mxu0 0.0
    %1144 = vmatpush1.msra.mxu0 0.0
    %1145 = vmatprep.subr.mxu0 0.0
    %1146 = vmatpush1.msra.mxu0 0.0
    %1147 = vmatprep.subr.mxu0 0.0
    %1148 = vmatpush1.msra.mxu0 0.0
    %1149 = vmatprep.subr.mxu0 0.0
    %1150 = vmatpush1.msra.mxu0 0.0
    %1151 = vmatprep.subr.mxu0 0.0
    %1152 = vmatpush1.msra.mxu0 0.0
    %1153 = vmatprep.subr.mxu0 0.0
    %1154 = vmatpush1.msra.mxu0 0.0
    %1155 = vmatprep.subr.mxu0 0.0
    %1156 = vmatpush1.msra.mxu0 0.0
    %1157 = vmatprep.subr.mxu0 0.0
    %1158 = vmatpush1.msra.mxu0 0.0
    %1159 = vmatprep.subr.mxu0 0.0
    %1160 = vmatpush1.msra.mxu0 0.0
    %1161 = vmatprep.subr.mxu0 0.0
    %1162 = vmatpush1.msra.mxu0 0.0
    %1163 = vmatprep.subr.mxu0 0.0
    %1164 = vmatpush1.msra.mxu0 0.0
    %1165 = vmatprep.subr.mxu0 0.0
    %1166 = vmatpush1.msra.mxu0 0.0
    %1167 = vmatprep.subr.mxu0 0.0
    %1168 = vmatpush1.msra.mxu0 0.0
    %1169 = vmatprep.subr.mxu0 0.0
    %1170 = vmatpush1.msra.mxu0 0.0
    %1171 = vmatprep.subr.mxu0 0.0
    %1172 = vmatpush1.msra.mxu0 0.0
    %1173 = vmatprep.subr.mxu0 0.0
    %1174 = vmatpush1.msra.mxu0 0.0
    %1175 = vmatprep.subr.mxu0 0.0
    %1176 = vmatpush1.msra.mxu0 0.0
    %1177 = vmatprep.subr.mxu0 0.0
    %1178 = vmatpush1.msra.mxu0 0.0
    %1179 = vmatprep.subr.mxu0 0.0
    %1180 = vmatpush1.msra.mxu0 0.0
    %1181 = vmatprep.subr.mxu0 0.0
    %1182 = vmatpush1.msra.mxu0 0.0
    %1183 = vmatprep.subr.mxu0 0.0
    %1184 = vmatpush1.msra.mxu0 0.0
    %1185 = vmatprep.subr.mxu0 0.0
    %1186 = vmatpush1.msra.mxu0 0.0
    %1187 = vmatprep.subr.mxu0 0.0
    %1188 = vmatpush1.msra.mxu0 0.0
    %1189 = vmatprep.subr.mxu0 0.0
    %1190 = vmatpush1.msra.mxu0 0.0
    %1191 = vmatprep.subr.mxu0 0.0
    %1192 = vmatpush1.msra.mxu0 0.0
    %1193 = vmatprep.subr.mxu0 0.0
    %1194 = vmatpush1.msra.mxu0 0.0
    %1195 = vmatprep.mubr.f32.mxu0 0.0
    %1196 = vmatmul.mubr.f32.gmra.mrb[0].mxu0 %v1108
    %v1197 = vpop.f32.mrb[0].mxu0
    %v1198 = vadd.f32 %v1105, %v1197
    %v1199 = vpop.f32.mrb[0].mxu0
    %1200 = vmatprep.mubr.f32.mxu0 0.0
    %1201 = vmatmul.mubr.f32.gmra.mrb[0].mxu0 %v1111
    %v1202 = vpop.f32.mrb[0].mxu0
    %v1203 = vadd.f32 %v1105, %v1202
    %v1204 = vpop.f32.mrb[0].mxu0
    %1205 = vmatprep.mubr.f32.mxu0 0.0
    %1206 = vmatmul.mubr.f32.gmra.mrb[0].mxu0 %v1114
    %v1207 = vpop.f32.mrb[0].mxu0
    %v1208 = vadd.f32 %v1105, %v1207
    %v1209 = vpop.f32.mrb[0].mxu0
    %1210 = vmatprep.mubr.f32.mxu0 0.0
    %1211 = vmatmul.mubr.f32.gmra.mrb[0].mxu0 %v1117
    %v1212 = vpop.f32.mrb[0].mxu0
    %v1213 = vadd.f32 %v1105, %v1212
    %v1214 = vpop.f32.mrb[0].mxu0
    %1215 = vmatprep.mubr.f32.mxu0 0.0
    %1216 = vmatmul.mubr.f32.gmra.mrb[0].mxu0 %v1120
    %v1217 = vpop.f32.mrb[0].mxu0
    %v1218 = vadd.f32 %v1105, %v1217
    %v1219 = vpop.f32.mrb[0].mxu0
    %1220 = vmatprep.mubr.f32.mxu0 0.0
    %1221 = vmatmul.mubr.f32.gmra.mrb[0].mxu0 %v1123
    %v1222 = vpop.f32.mrb[0].mxu0
    %v1223 = vadd.f32 %v1105, %v1222
    %v1224 = vpop.f32.mrb[0].mxu0
    %1225 = vmatprep.mubr.f32.mxu0 0.0
    %1226 = vmatmul.mubr.f32.gmra.mrb[0].mxu0 %v1126
    %v1227 = vpop.f32.mrb[0].mxu0
    %v1228 = vadd.f32 %v1105, %v1227
    %v1229 = vpop.f32.mrb[0].mxu0
    %1230 = vmatprep.mubr.f32.mxu0 0.0
    %1231 = vmatmul.mubr.f32.gmra.mrb[0].mxu0 %v1129
    %v1232 = vpop.f32.mrb[0].mxu0
    %v1233 = vadd.f32 %v1105, %v1232
    %v1234 = vpop.f32.mrb[0].mxu0
    %1235 = vdwg.mxu0
    %1236 = vmatprep.subr.mxu0 0.0
    %1237 = vmatpush1.msra.mxu0 %v1096
    %1238 = vmatprep.subr.mxu0 0.0
    %1239 = vmatpush1.msra.mxu0 %v1097
    %1240 = vmatprep.subr.mxu0 0.0
    %1241 = vmatpush1.msra.mxu0 %v1098
    %1242 = vmatprep.subr.mxu0 0.0
    %1243 = vmatpush1.msra.mxu0 %v1099
    %1244 = vmatprep.subr.mxu0 0.0
    %1245 = vmatpush1.msra.mxu0 0.0
    %1246 = vmatprep.subr.mxu0 0.0
    %1247 = vmatpush1.msra.mxu0 0.0
    %1248 = vmatprep.subr.mxu0 0.0
    %1249 = vmatpush1.msra.mxu0 0.0
    %1250 = vmatprep.subr.mxu0 0.0
    %1251 = vmatpush1.msra.mxu0 0.0
    %1252 = vmatprep.subr.mxu0 0.0
    %1253 = vmatpush1.msra.mxu0 0.0
    %1254 = vmatprep.subr.mxu0 0.0
    %1255 = vmatpush1.msra.mxu0 0.0
    %1256 = vmatprep.subr.mxu0 0.0
    %1257 = vmatpush1.msra.mxu0 0.0
    %1258 = vmatprep.subr.mxu0 0.0
    %1259 = vmatpush1.msra.mxu0 0.0
    %1260 = vmatprep.subr.mxu0 0.0
    %1261 = vmatpush1.msra.mxu0 0.0
    %1262 = vmatprep.subr.mxu0 0.0
    %1263 = vmatpush1.msra.mxu0 0.0
    %1264 = vmatprep.subr.mxu0 0.0
    %1265 = vmatpush1.msra.mxu0 0.0
    %1266 = vmatprep.subr.mxu0 0.0
    %1267 = vmatpush1.msra.mxu0 0.0
    %1268 = vmatprep.subr.mxu0 0.0
    %1269 = vmatpush1.msra.mxu0 0.0
    %1270 = vmatprep.subr.mxu0 0.0
    %1271 = vmatpush1.msra.mxu0 0.0
    %1272 = vmatprep.subr.mxu0 0.0
    %1273 = vmatpush1.msra.mxu0 0.0
    %1274 = vmatprep.subr.mxu0 0.0
    %1275 = vmatpush1.msra.mxu0 0.0
    %1276 = vmatprep.subr.mxu0 0.0
    %1277 = vmatpush1.msra.mxu0 0.0
    %1278 = vmatprep.subr.mxu0 0.0
    %1279 = vmatpush1.msra.mxu0 0.0
    %1280 = vmatprep.subr.mxu0 0.0
    %1281 = vmatpush1.msra.mxu0 0.0
    %1282 = vmatprep.subr.mxu0 0.0
    %1283 = vmatpush1.msra.mxu0 0.0
    %1284 = vmatprep.subr.mxu0 0.0
    %1285 = vmatpush1.msra.mxu0 0.0
    %1286 = vmatprep.subr.mxu0 0.0
    %1287 = vmatpush1.msra.mxu0 0.0
    %1288 = vmatprep.subr.mxu0 0.0
    %1289 = vmatpush1.msra.mxu0 0.0
    %1290 = vmatprep.subr.mxu0 0.0
    %1291 = vmatpush1.msra.mxu0 0.0
    %1292 = vmatprep.subr.mxu0 0.0
    %1293 = vmatpush1.msra.mxu0 0.0
    %1294 = vmatprep.subr.mxu0 0.0
    %1295 = vmatpush1.msra.mxu0 0.0
    %1296 = vmatprep.subr.mxu0 0.0
    %1297 = vmatpush1.msra.mxu0 0.0
    %1298 = vmatprep.subr.mxu0 0.0
    %1299 = vmatpush1.msra.mxu0 0.0
    %1300 = vmatprep.mubr.f32.mxu0 0.0
    %1301 = vmatmul.mubr.f32.gmra.mrb[0].mxu0 %v268
    %v1302 = vpop.f32.mrb[0].mxu0
    %v1303 = vadd.f32 0.0, %v1302
    %v1304 = vpop.f32.mrb[0].mxu0
    %1305 = vdwg.mxu0
    %v1306 = vadd.f32 %v1198, %v1303
    %v1307 = vxor.u32 %v1306, 2147483648
    %v1308 = vmul.f32 %v1307, 1.442695
    %v1309 = vpow.pop %v1308
    %v1310 = vadd.f32 %v1309, 1.0
    %v1311 = vrcp.pop %v1310
    %v1312 = vmul.f32 1.0, %v1311
    %v1313 = vtanh.pop %v1306
    %v1314 = vmul.f32 %v1312, 0.0
    %1316 = vrot.lane.b32.xlu0 %v1313, 64
    %v1317 = vpop.permute.xlu0 %1316
    %v1319 = vmul.f32 %v1312, %v1317
    %1321 = vrot.lane.b32.xlu0 %v1319, 32
    %v1322 = vpop.permute.xlu0 %1321
    %v1324 = vadd.f32 %v1314, %v1322
    %v1325 = vtanh.pop %v1324
    %1327 = vrot.lane.b32.xlu0 %v1325, 64
    %v1328 = vpop.permute.xlu0 %1327
    %v1330 = vmul.f32 %v1312, %v1328
    %1332 = vrot.lane.b32.xlu0 %v1330, 32
    %v1333 = vpop.permute.xlu0 %1332
    %v1334 = vsel %vm137, %v1333, 0
    %1336 = vmatprep.subr.mxu0 0.0
    %1337 = vmatpush1.msra.mxu0 %v1096
    %1338 = vmatprep.subr.mxu0 0.0
    %1339 = vmatpush1.msra.mxu0 %v1097
    %1340 = vmatprep.subr.mxu0 0.0
    %1341 = vmatpush1.msra.mxu0 %v1098
    %1342 = vmatprep.subr.mxu0 0.0
    %1343 = vmatpush1.msra.mxu0 %v1099
    %1344 = vmatprep.subr.mxu0 0.0
    %1345 = vmatpush1.msra.mxu0 0.0
    %1346 = vmatprep.subr.mxu0 0.0
    %1347 = vmatpush1.msra.mxu0 0.0
    %1348 = vmatprep.subr.mxu0 0.0
    %1349 = vmatpush1.msra.mxu0 0.0
    %1350 = vmatprep.subr.mxu0 0.0
    %1351 = vmatpush1.msra.mxu0 0.0
    %1352 = vmatprep.subr.mxu0 0.0
    %1353 = vmatpush1.msra.mxu0 0.0
    %1354 = vmatprep.subr.mxu0 0.0
    %1355 = vmatpush1.msra.mxu0 0.0
    %1356 = vmatprep.subr.mxu0 0.0
    %1357 = vmatpush1.msra.mxu0 0.0
    %1358 = vmatprep.subr.mxu0 0.0
    %1359 = vmatpush1.msra.mxu0 0.0
    %1360 = vmatprep.subr.mxu0 0.0
    %1361 = vmatpush1.msra.mxu0 0.0
    %1362 = vmatprep.subr.mxu0 0.0
    %1363 = vmatpush1.msra.mxu0 0.0
    %1364 = vmatprep.subr.mxu0 0.0
    %1365 = vmatpush1.msra.mxu0 0.0
    %1366 = vmatprep.subr.mxu0 0.0
    %1367 = vmatpush1.msra.mxu0 0.0
    %1368 = vmatprep.subr.mxu0 0.0
    %1369 = vmatpush1.msra.mxu0 0.0
    %1370 = vmatprep.subr.mxu0 0.0
    %1371 = vmatpush1.msra.mxu0 0.0
    %1372 = vmatprep.subr.mxu0 0.0
    %1373 = vmatpush1.msra.mxu0 0.0
    %1374 = vmatprep.subr.mxu0 0.0
    %1375 = vmatpush1.msra.mxu0 0.0
    %1376 = vmatprep.subr.mxu0 0.0
    %1377 = vmatpush1.msra.mxu0 0.0
    %1378 = vmatprep.subr.mxu0 0.0
    %1379 = vmatpush1.msra.mxu0 0.0
    %1380 = vmatprep.subr.mxu0 0.0
    %1381 = vmatpush1.msra.mxu0 0.0
    %1382 = vmatprep.subr.mxu0 0.0
    %1383 = vmatpush1.msra.mxu0 0.0
    %1384 = vmatprep.subr.mxu0 0.0
    %1385 = vmatpush1.msra.mxu0 0.0
    %1386 = vmatprep.subr.mxu0 0.0
    %1387 = vmatpush1.msra.mxu0 0.0
    %1388 = vmatprep.subr.mxu0 0.0
    %1389 = vmatpush1.msra.mxu0 0.0
    %1390 = vmatprep.subr.mxu0 0.0
    %1391 = vmatpush1.msra.mxu0 0.0
    %1392 = vmatprep.subr.mxu0 0.0
    %1393 = vmatpush1.msra.mxu0 0.0
    %1394 = vmatprep.subr.mxu0 0.0
    %1395 = vmatpush1.msra.mxu0 0.0
    %1396 = vmatprep.subr.mxu0 0.0
    %1397 = vmatpush1.msra.mxu0 0.0
    %1398 = vmatprep.subr.mxu0 0.0
    %1399 = vmatpush1.msra.mxu0 0.0
    %1400 = vmatprep.mubr.f32.mxu0 0.0
    %1401 = vmatmul.mubr.f32.gmra.mrb[0].mxu0 %v1334
    %v1402 = vpop.f32.mrb[0].mxu0
    %v1403 = vadd.f32 0.0, %v1402
    %v1404 = vpop.f32.mrb[0].mxu0
    %1405 = vdwg.mxu0
    %v1406 = vadd.f32 %v1203, %v1403
    %v1407 = vxor.u32 %v1406, 2147483648
    %v1408 = vmul.f32 %v1407, 1.442695
    %v1409 = vpow.pop %v1408
    %v1410 = vadd.f32 %v1409, 1.0
    %v1411 = vrcp.pop %v1410
    %v1412 = vmul.f32 1.0, %v1411
    %v1413 = vtanh.pop %v1406
    %v1414 = vmul.f32 %v1412, %v1324
    %1416 = vrot.lane.b32.xlu0 %v1413, 64
    %v1417 = vpop.permute.xlu0 %1416
    %v1419 = vmul.f32 %v1412, %v1417
    %1421 = vrot.lane.b32.xlu0 %v1419, 32
    %v1422 = vpop.permute.xlu0 %1421
    %v1424 = vadd.f32 %v1414, %v1422
    %v1425 = vtanh.pop %v1424
    %1427 = vrot.lane.b32.xlu0 %v1425, 64
    %v1428 = vpop.permute.xlu0 %1427
    %v1430 = vmul.f32 %v1412, %v1428
    %1432 = vrot.lane.b32.xlu0 %v1430, 32
    %v1433 = vpop.permute.xlu0 %1432
    %v1434 = vsel %vm137, %v1433, 0
    %1436 = vmatprep.subr.mxu0 0.0
    %1437 = vmatpush1.msra.mxu0 %v1096
    %1438 = vmatprep.subr.mxu0 0.0
    %1439 = vmatpush1.msra.mxu0 %v1097
    %1440 = vmatprep.subr.mxu0 0.0
    %1441 = vmatpush1.msra.mxu0 %v1098
    %1442 = vmatprep.subr.mxu0 0.0
    %1443 = vmatpush1.msra.mxu0 %v1099
    %1444 = vmatprep.subr.mxu0 0.0
    %1445 = vmatpush1.msra.mxu0 0.0
    %1446 = vmatprep.subr.mxu0 0.0
    %1447 = vmatpush1.msra.mxu0 0.0
    %1448 = vmatprep.subr.mxu0 0.0
    %1449 = vmatpush1.msra.mxu0 0.0
    %1450 = vmatprep.subr.mxu0 0.0
    %1451 = vmatpush1.msra.mxu0 0.0
    %1452 = vmatprep.subr.mxu0 0.0
    %1453 = vmatpush1.msra.mxu0 0.0
    %1454 = vmatprep.subr.mxu0 0.0
    %1455 = vmatpush1.msra.mxu0 0.0
    %1456 = vmatprep.subr.mxu0 0.0
    %1457 = vmatpush1.msra.mxu0 0.0
    %1458 = vmatprep.subr.mxu0 0.0
    %1459 = vmatpush1.msra.mxu0 0.0
    %1460 = vmatprep.subr.mxu0 0.0
    %1461 = vmatpush1.msra.mxu0 0.0
    %1462 = vmatprep.subr.mxu0 0.0
    %1463 = vmatpush1.msra.mxu0 0.0
    %1464 = vmatprep.subr.mxu0 0.0
    %1465 = vmatpush1.msra.mxu0 0.0
    %1466 = vmatprep.subr.mxu0 0.0
    %1467 = vmatpush1.msra.mxu0 0.0
    %1468 = vmatprep.subr.mxu0 0.0
    %1469 = vmatpush1.msra.mxu0 0.0
    %1470 = vmatprep.subr.mxu0 0.0
    %1471 = vmatpush1.msra.mxu0 0.0
    %1472 = vmatprep.subr.mxu0 0.0
    %1473 = vmatpush1.msra.mxu0 0.0
    %1474 = vmatprep.subr.mxu0 0.0
    %1475 = vmatpush1.msra.mxu0 0.0
    %1476 = vmatprep.subr.mxu0 0.0
    %1477 = vmatpush1.msra.mxu0 0.0
    %1478 = vmatprep.subr.mxu0 0.0
    %1479 = vmatpush1.msra.mxu0 0.0
    %1480 = vmatprep.subr.mxu0 0.0
    %1481 = vmatpush1.msra.mxu0 0.0
    %1482 = vmatprep.subr.mxu0 0.0
    %1483 = vmatpush1.msra.mxu0 0.0
    %1484 = vmatprep.subr.mxu0 0.0
    %1485 = vmatpush1.msra.mxu0 0.0
    %1486 = vmatprep.subr.mxu0 0.0
    %1487 = vmatpush1.msra.mxu0 0.0
    %1488 = vmatprep.subr.mxu0 0.0
    %1489 = vmatpush1.msra.mxu0 0.0
    %1490 = vmatprep.subr.mxu0 0.0
    %1491 = vmatpush1.msra.mxu0 0.0
    %1492 = vmatprep.subr.mxu0 0.0
    %1493 = vmatpush1.msra.mxu0 0.0
    %1494 = vmatprep.subr.mxu0 0.0
    %1495 = vmatpush1.msra.mxu0 0.0
    %1496 = vmatprep.subr.mxu0 0.0
    %1497 = vmatpush1.msra.mxu0 0.0
    %1498 = vmatprep.subr.mxu0 0.0
    %1499 = vmatpush1.msra.mxu0 0.0
    %1500 = vmatprep.mubr.f32.mxu0 0.0
    %1501 = vmatmul.mubr.f32.gmra.mrb[0].mxu0 %v1434
    %v1502 = vpop.f32.mrb[0].mxu0
    %v1503 = vadd.f32 0.0, %v1502
    %v1504 = vpop.f32.mrb[0].mxu0
    %1505 = vdwg.mxu0
    %v1506 = vadd.f32 %v1208, %v1503
    %v1507 = vxor.u32 %v1506, 2147483648
    %v1508 = vmul.f32 %v1507, 1.442695
    %v1509 = vpow.pop %v1508
    %v1510 = vadd.f32 %v1509, 1.0
    %v1511 = vrcp.pop %v1510
    %v1512 = vmul.f32 1.0, %v1511
    %v1513 = vtanh.pop %v1506
    %v1514 = vmul.f32 %v1512, %v1424
    %1516 = vrot.lane.b32.xlu0 %v1513, 64
    %v1517 = vpop.permute.xlu0 %1516
    %v1519 = vmul.f32 %v1512, %v1517
    %1521 = vrot.lane.b32.xlu0 %v1519, 32
    %v1522 = vpop.permute.xlu0 %1521
    %v1524 = vadd.f32 %v1514, %v1522
    %v1525 = vtanh.pop %v1524
    %1527 = vrot.lane.b32.xlu0 %v1525, 64
    %v1528 = vpop.permute.xlu0 %1527
    %v1530 = vmul.f32 %v1512, %v1528
    %1532 = vrot.lane.b32.xlu0 %v1530, 32
    %v1533 = vpop.permute.xlu0 %1532
    %v1534 = vsel %vm137, %v1533, 0
    %1536 = vmatprep.subr.mxu0 0.0
    %1537 = vmatpush1.msra.mxu0 %v1096
    %1538 = vmatprep.subr.mxu0 0.0
    %1539 = vmatpush1.msra.mxu0 %v1097
    %1540 = vmatprep.subr.mxu0 0.0
    %1541 = vmatpush1.msra.mxu0 %v1098
    %1542 = vmatprep.subr.mxu0 0.0
    %1543 = vmatpush1.msra.mxu0 %v1099
    %1544 = vmatprep.subr.mxu0 0.0
    %1545 = vmatpush1.msra.mxu0 0.0
    %1546 = vmatprep.subr.mxu0 0.0
    %1547 = vmatpush1.msra.mxu0 0.0
    %1548 = vmatprep.subr.mxu0 0.0
    %1549 = vmatpush1.msra.mxu0 0.0
    %1550 = vmatprep.subr.mxu0 0.0
    %1551 = vmatpush1.msra.mxu0 0.0
    %1552 = vmatprep.subr.mxu0 0.0
    %1553 = vmatpush1.msra.mxu0 0.0
    %1554 = vmatprep.subr.mxu0 0.0
    %1555 = vmatpush1.msra.mxu0 0.0
    %1556 = vmatprep.subr.mxu0 0.0
    %1557 = vmatpush1.msra.mxu0 0.0
    %1558 = vmatprep.subr.mxu0 0.0
    %1559 = vmatpush1.msra.mxu0 0.0
    %1560 = vmatprep.subr.mxu0 0.0
    %1561 = vmatpush1.msra.mxu0 0.0
    %1562 = vmatprep.subr.mxu0 0.0
    %1563 = vmatpush1.msra.mxu0 0.0
    %1564 = vmatprep.subr.mxu0 0.0
    %1565 = vmatpush1.msra.mxu0 0.0
    %1566 = vmatprep.subr.mxu0 0.0
    %1567 = vmatpush1.msra.mxu0 0.0
    %1568 = vmatprep.subr.mxu0 0.0
    %1569 = vmatpush1.msra.mxu0 0.0
    %1570 = vmatprep.subr.mxu0 0.0
    %1571 = vmatpush1.msra.mxu0 0.0
    %1572 = vmatprep.subr.mxu0 0.0
    %1573 = vmatpush1.msra.mxu0 0.0
    %1574 = vmatprep.subr.mxu0 0.0
    %1575 = vmatpush1.msra.mxu0 0.0
    %1576 = vmatprep.subr.mxu0 0.0
    %1577 = vmatpush1.msra.mxu0 0.0
    %1578 = vmatprep.subr.mxu0 0.0
    %1579 = vmatpush1.msra.mxu0 0.0
    %1580 = vmatprep.subr.mxu0 0.0
    %1581 = vmatpush1.msra.mxu0 0.0
    %1582 = vmatprep.subr.mxu0 0.0
    %1583 = vmatpush1.msra.mxu0 0.0
    %1584 = vmatprep.subr.mxu0 0.0
    %1585 = vmatpush1.msra.mxu0 0.0
    %1586 = vmatprep.subr.mxu0 0.0
    %1587 = vmatpush1.msra.mxu0 0.0
    %1588 = vmatprep.subr.mxu0 0.0
    %1589 = vmatpush1.msra.mxu0 0.0
    %1590 = vmatprep.subr.mxu0 0.0
    %1591 = vmatpush1.msra.mxu0 0.0
    %1592 = vmatprep.subr.mxu0 0.0
    %1593 = vmatpush1.msra.mxu0 0.0
    %1594 = vmatprep.subr.mxu0 0.0
    %1595 = vmatpush1.msra.mxu0 0.0
    %1596 = vmatprep.subr.mxu0 0.0
    %1597 = vmatpush1.msra.mxu0 0.0
    %1598 = vmatprep.subr.mxu0 0.0
    %1599 = vmatpush1.msra.mxu0 0.0
    %1600 = vmatprep.mubr.f32.mxu0 0.0
    %1601 = vmatmul.mubr.f32.gmra.mrb[0].mxu0 %v1534
    %v1602 = vpop.f32.mrb[0].mxu0
    %v1603 = vadd.f32 0.0, %v1602
    %v1604 = vpop.f32.mrb[0].mxu0
    %1605 = vdwg.mxu0
    %v1606 = vadd.f32 %v1213, %v1603
    %v1607 = vxor.u32 %v1606, 2147483648
    %v1608 = vmul.f32 %v1607, 1.442695
    %v1609 = vpow.pop %v1608
    %v1610 = vadd.f32 %v1609, 1.0
    %v1611 = vrcp.pop %v1610
    %v1612 = vmul.f32 1.0, %v1611
    %v1613 = vtanh.pop %v1606
    %v1614 = vmul.f32 %v1612, %v1524
    %1616 = vrot.lane.b32.xlu0 %v1613, 64
    %v1617 = vpop.permute.xlu0 %1616
    %v1619 = vmul.f32 %v1612, %v1617
    %1621 = vrot.lane.b32.xlu0 %v1619, 32
    %v1622 = vpop.permute.xlu0 %1621
    %v1624 = vadd.f32 %v1614, %v1622
    %v1625 = vtanh.pop %v1624
    %1627 = vrot.lane.b32.xlu0 %v1625, 64
    %v1628 = vpop.permute.xlu0 %1627
    %v1630 = vmul.f32 %v1612, %v1628
    %1632 = vrot.lane.b32.xlu0 %v1630, 32
    %v1633 = vpop.permute.xlu0 %1632
    %v1634 = vsel %vm137, %v1633, 0
    %1636 = vmatprep.subr.mxu0 0.0
    %1637 = vmatpush1.msra.mxu0 %v1096
    %1638 = vmatprep.subr.mxu0 0.0
    %1639 = vmatpush1.msra.mxu0 %v1097
    %1640 = vmatprep.subr.mxu0 0.0
    %1641 = vmatpush1.msra.mxu0 %v1098
    %1642 = vmatprep.subr.mxu0 0.0
    %1643 = vmatpush1.msra.mxu0 %v1099
    %1644 = vmatprep.subr.mxu0 0.0
    %1645 = vmatpush1.msra.mxu0 0.0
    %1646 = vmatprep.subr.mxu0 0.0
    %1647 = vmatpush1.msra.mxu0 0.0
    %1648 = vmatprep.subr.mxu0 0.0
    %1649 = vmatpush1.msra.mxu0 0.0
    %1650 = vmatprep.subr.mxu0 0.0
    %1651 = vmatpush1.msra.mxu0 0.0
    %1652 = vmatprep.subr.mxu0 0.0
    %1653 = vmatpush1.msra.mxu0 0.0
    %1654 = vmatprep.subr.mxu0 0.0
    %1655 = vmatpush1.msra.mxu0 0.0
    %1656 = vmatprep.subr.mxu0 0.0
    %1657 = vmatpush1.msra.mxu0 0.0
    %1658 = vmatprep.subr.mxu0 0.0
    %1659 = vmatpush1.msra.mxu0 0.0
    %1660 = vmatprep.subr.mxu0 0.0
    %1661 = vmatpush1.msra.mxu0 0.0
    %1662 = vmatprep.subr.mxu0 0.0
    %1663 = vmatpush1.msra.mxu0 0.0
    %1664 = vmatprep.subr.mxu0 0.0
    %1665 = vmatpush1.msra.mxu0 0.0
    %1666 = vmatprep.subr.mxu0 0.0
    %1667 = vmatpush1.msra.mxu0 0.0
    %1668 = vmatprep.subr.mxu0 0.0
    %1669 = vmatpush1.msra.mxu0 0.0
    %1670 = vmatprep.subr.mxu0 0.0
    %1671 = vmatpush1.msra.mxu0 0.0
    %1672 = vmatprep.subr.mxu0 0.0
    %1673 = vmatpush1.msra.mxu0 0.0
    %1674 = vmatprep.subr.mxu0 0.0
    %1675 = vmatpush1.msra.mxu0 0.0
    %1676 = vmatprep.subr.mxu0 0.0
    %1677 = vmatpush1.msra.mxu0 0.0
    %1678 = vmatprep.subr.mxu0 0.0
    %1679 = vmatpush1.msra.mxu0 0.0
    %1680 = vmatprep.subr.mxu0 0.0
    %1681 = vmatpush1.msra.mxu0 0.0
    %1682 = vmatprep.subr.mxu0 0.0
    %1683 = vmatpush1.msra.mxu0 0.0
    %1684 = vmatprep.subr.mxu0 0.0
    %1685 = vmatpush1.msra.mxu0 0.0
    %1686 = vmatprep.subr.mxu0 0.0
    %1687 = vmatpush1.msra.mxu0 0.0
    %1688 = vmatprep.subr.mxu0 0.0
    %1689 = vmatpush1.msra.mxu0 0.0
    %1690 = vmatprep.subr.mxu0 0.0
    %1691 = vmatpush1.msra.mxu0 0.0
    %1692 = vmatprep.subr.mxu0 0.0
    %1693 = vmatpush1.msra.mxu0 0.0
    %1694 = vmatprep.subr.mxu0 0.0
    %1695 = vmatpush1.msra.mxu0 0.0
    %1696 = vmatprep.subr.mxu0 0.0
    %1697 = vmatpush1.msra.mxu0 0.0
    %1698 = vmatprep.subr.mxu0 0.0
    %1699 = vmatpush1.msra.mxu0 0.0
    %1700 = vmatprep.mubr.f32.mxu0 0.0
    %1701 = vmatmul.mubr.f32.gmra.mrb[0].mxu0 %v1634
    %v1702 = vpop.f32.mrb[0].mxu0
    %v1703 = vadd.f32 0.0, %v1702
    %v1704 = vpop.f32.mrb[0].mxu0
    %1705 = vdwg.mxu0
    %v1706 = vadd.f32 %v1218, %v1703
    %v1707 = vxor.u32 %v1706, 2147483648
    %v1708 = vmul.f32 %v1707, 1.442695
    %v1709 = vpow.pop %v1708
    %v1710 = vadd.f32 %v1709, 1.0
    %v1711 = vrcp.pop %v1710
    %v1712 = vmul.f32 1.0, %v1711
    %v1713 = vtanh.pop %v1706
    %v1714 = vmul.f32 %v1712, %v1624
    %1716 = vrot.lane.b32.xlu0 %v1713, 64
    %v1717 = vpop.permute.xlu0 %1716
    %v1719 = vmul.f32 %v1712, %v1717
    %1721 = vrot.lane.b32.xlu0 %v1719, 32
    %v1722 = vpop.permute.xlu0 %1721
    %v1724 = vadd.f32 %v1714, %v1722
    %v1725 = vtanh.pop %v1724
    %1727 = vrot.lane.b32.xlu0 %v1725, 64
    %v1728 = vpop.permute.xlu0 %1727
    %v1730 = vmul.f32 %v1712, %v1728
    %1732 = vrot.lane.b32.xlu0 %v1730, 32
    %v1733 = vpop.permute.xlu0 %1732
    %v1734 = vsel %vm137, %v1733, 0
    %1736 = vmatprep.subr.mxu0 0.0
    %1737 = vmatpush1.msra.mxu0 %v1096
    %1738 = vmatprep.subr.mxu0 0.0
    %1739 = vmatpush1.msra.mxu0 %v1097
    %1740 = vmatprep.subr.mxu0 0.0
    %1741 = vmatpush1.msra.mxu0 %v1098
    %1742 = vmatprep.subr.mxu0 0.0
    %1743 = vmatpush1.msra.mxu0 %v1099
    %1744 = vmatprep.subr.mxu0 0.0
    %1745 = vmatpush1.msra.mxu0 0.0
    %1746 = vmatprep.subr.mxu0 0.0
    %1747 = vmatpush1.msra.mxu0 0.0
    %1748 = vmatprep.subr.mxu0 0.0
    %1749 = vmatpush1.msra.mxu0 0.0
    %1750 = vmatprep.subr.mxu0 0.0
    %1751 = vmatpush1.msra.mxu0 0.0
    %1752 = vmatprep.subr.mxu0 0.0
    %1753 = vmatpush1.msra.mxu0 0.0
    %1754 = vmatprep.subr.mxu0 0.0
    %1755 = vmatpush1.msra.mxu0 0.0
    %1756 = vmatprep.subr.mxu0 0.0
    %1757 = vmatpush1.msra.mxu0 0.0
    %1758 = vmatprep.subr.mxu0 0.0
    %1759 = vmatpush1.msra.mxu0 0.0
    %1760 = vmatprep.subr.mxu0 0.0
    %1761 = vmatpush1.msra.mxu0 0.0
    %1762 = vmatprep.subr.mxu0 0.0
    %1763 = vmatpush1.msra.mxu0 0.0
    %1764 = vmatprep.subr.mxu0 0.0
    %1765 = vmatpush1.msra.mxu0 0.0
    %1766 = vmatprep.subr.mxu0 0.0
    %1767 = vmatpush1.msra.mxu0 0.0
    %1768 = vmatprep.subr.mxu0 0.0
    %1769 = vmatpush1.msra.mxu0 0.0
    %1770 = vmatprep.subr.mxu0 0.0
    %1771 = vmatpush1.msra.mxu0 0.0
    %1772 = vmatprep.subr.mxu0 0.0
    %1773 = vmatpush1.msra.mxu0 0.0
    %1774 = vmatprep.subr.mxu0 0.0
    %1775 = vmatpush1.msra.mxu0 0.0
    %1776 = vmatprep.subr.mxu0 0.0
    %1777 = vmatpush1.msra.mxu0 0.0
    %1778 = vmatprep.subr.mxu0 0.0
    %1779 = vmatpush1.msra.mxu0 0.0
    %1780 = vmatprep.subr.mxu0 0.0
    %1781 = vmatpush1.msra.mxu0 0.0
    %1782 = vmatprep.subr.mxu0 0.0
    %1783 = vmatpush1.msra.mxu0 0.0
    %1784 = vmatprep.subr.mxu0 0.0
    %1785 = vmatpush1.msra.mxu0 0.0
    %1786 = vmatprep.subr.mxu0 0.0
    %1787 = vmatpush1.msra.mxu0 0.0
    %1788 = vmatprep.subr.mxu0 0.0
    %1789 = vmatpush1.msra.mxu0 0.0
    %1790 = vmatprep.subr.mxu0 0.0
    %1791 = vmatpush1.msra.mxu0 0.0
    %1792 = vmatprep.subr.mxu0 0.0
    %1793 = vmatpush1.msra.mxu0 0.0
    %1794 = vmatprep.subr.mxu0 0.0
    %1795 = vmatpush1.msra.mxu0 0.0
    %1796 = vmatprep.subr.mxu0 0.0
    %1797 = vmatpush1.msra.mxu0 0.0
    %1798 = vmatprep.subr.mxu0 0.0
    %1799 = vmatpush1.msra.mxu0 0.0
    %1800 = vmatprep.mubr.f32.mxu0 0.0
    %1801 = vmatmul.mubr.f32.gmra.mrb[0].mxu0 %v1734
    %v1802 = vpop.f32.mrb[0].mxu0
    %v1803 = vadd.f32 0.0, %v1802
    %v1804 = vpop.f32.mrb[0].mxu0
    %1805 = vdwg.mxu0
    %v1806 = vadd.f32 %v1223, %v1803
    %v1807 = vxor.u32 %v1806, 2147483648
    %v1808 = vmul.f32 %v1807, 1.442695
    %v1809 = vpow.pop %v1808
    %v1810 = vadd.f32 %v1809, 1.0
    %v1811 = vrcp.pop %v1810
    %v1812 = vmul.f32 1.0, %v1811
    %v1813 = vtanh.pop %v1806
    %v1814 = vmul.f32 %v1812, %v1724
    %1816 = vrot.lane.b32.xlu0 %v1813, 64
    %v1817 = vpop.permute.xlu0 %1816
    %v1819 = vmul.f32 %v1812, %v1817
    %1821 = vrot.lane.b32.xlu0 %v1819, 32
    %v1822 = vpop.permute.xlu0 %1821
    %v1824 = vadd.f32 %v1814, %v1822
    %v1825 = vtanh.pop %v1824
    %1827 = vrot.lane.b32.xlu0 %v1825, 64
    %v1828 = vpop.permute.xlu0 %1827
    %v1830 = vmul.f32 %v1812, %v1828
    %1832 = vrot.lane.b32.xlu0 %v1830, 32
    %v1833 = vpop.permute.xlu0 %1832
    %v1834 = vsel %vm137, %v1833, 0
    %1836 = vmatprep.subr.mxu0 0.0
    %1837 = vmatpush1.msra.mxu0 %v1096
    %1838 = vmatprep.subr.mxu0 0.0
    %1839 = vmatpush1.msra.mxu0 %v1097
    %1840 = vmatprep.subr.mxu0 0.0
    %1841 = vmatpush1.msra.mxu0 %v1098
    %1842 = vmatprep.subr.mxu0 0.0
    %1843 = vmatpush1.msra.mxu0 %v1099
    %1844 = vmatprep.subr.mxu0 0.0
    %1845 = vmatpush1.msra.mxu0 0.0
    %1846 = vmatprep.subr.mxu0 0.0
    %1847 = vmatpush1.msra.mxu0 0.0
    %1848 = vmatprep.subr.mxu0 0.0
    %1849 = vmatpush1.msra.mxu0 0.0
    %1850 = vmatprep.subr.mxu0 0.0
    %1851 = vmatpush1.msra.mxu0 0.0
    %1852 = vmatprep.subr.mxu0 0.0
    %1853 = vmatpush1.msra.mxu0 0.0
    %1854 = vmatprep.subr.mxu0 0.0
    %1855 = vmatpush1.msra.mxu0 0.0
    %1856 = vmatprep.subr.mxu0 0.0
    %1857 = vmatpush1.msra.mxu0 0.0
    %1858 = vmatprep.subr.mxu0 0.0
    %1859 = vmatpush1.msra.mxu0 0.0
    %1860 = vmatprep.subr.mxu0 0.0
    %1861 = vmatpush1.msra.mxu0 0.0
    %1862 = vmatprep.subr.mxu0 0.0
    %1863 = vmatpush1.msra.mxu0 0.0
    %1864 = vmatprep.subr.mxu0 0.0
    %1865 = vmatpush1.msra.mxu0 0.0
    %1866 = vmatprep.subr.mxu0 0.0
    %1867 = vmatpush1.msra.mxu0 0.0
    %1868 = vmatprep.subr.mxu0 0.0
    %1869 = vmatpush1.msra.mxu0 0.0
    %1870 = vmatprep.subr.mxu0 0.0
    %1871 = vmatpush1.msra.mxu0 0.0
    %1872 = vmatprep.subr.mxu0 0.0
    %1873 = vmatpush1.msra.mxu0 0.0
    %1874 = vmatprep.subr.mxu0 0.0
    %1875 = vmatpush1.msra.mxu0 0.0
    %1876 = vmatprep.subr.mxu0 0.0
    %1877 = vmatpush1.msra.mxu0 0.0
    %1878 = vmatprep.subr.mxu0 0.0
    %1879 = vmatpush1.msra.mxu0 0.0
    %1880 = vmatprep.subr.mxu0 0.0
    %1881 = vmatpush1.msra.mxu0 0.0
    %1882 = vmatprep.subr.mxu0 0.0
    %1883 = vmatpush1.msra.mxu0 0.0
    %1884 = vmatprep.subr.mxu0 0.0
    %1885 = vmatpush1.msra.mxu0 0.0
    %1886 = vmatprep.subr.mxu0 0.0
    %1887 = vmatpush1.msra.mxu0 0.0
    %1888 = vmatprep.subr.mxu0 0.0
    %1889 = vmatpush1.msra.mxu0 0.0
    %1890 = vmatprep.subr.mxu0 0.0
    %1891 = vmatpush1.msra.mxu0 0.0
    %1892 = vmatprep.subr.mxu0 0.0
    %1893 = vmatpush1.msra.mxu0 0.0
    %1894 = vmatprep.subr.mxu0 0.0
    %1895 = vmatpush1.msra.mxu0 0.0
    %1896 = vmatprep.subr.mxu0 0.0
    %1897 = vmatpush1.msra.mxu0 0.0
    %1898 = vmatprep.subr.mxu0 0.0
    %1899 = vmatpush1.msra.mxu0 0.0
    %1900 = vmatprep.mubr.f32.mxu0 0.0
    %1901 = vmatmul.mubr.f32.gmra.mrb[0].mxu0 %v1834
    %v1902 = vpop.f32.mrb[0].mxu0
    %v1903 = vadd.f32 0.0, %v1902
    %v1904 = vpop.f32.mrb[0].mxu0
    %1905 = vdwg.mxu0
    %v1906 = vadd.f32 %v1228, %v1903
    %v1907 = vxor.u32 %v1906, 2147483648
    %v1908 = vmul.f32 %v1907, 1.442695
    %v1909 = vpow.pop %v1908
    %v1910 = vadd.f32 %v1909, 1.0
    %v1911 = vrcp.pop %v1910
    %v1912 = vmul.f32 1.0, %v1911
    %v1913 = vtanh.pop %v1906
    %v1914 = vmul.f32 %v1912, %v1824
    %1916 = vrot.lane.b32.xlu0 %v1913, 64
    %v1917 = vpop.permute.xlu0 %1916
    %v1919 = vmul.f32 %v1912, %v1917
    %1921 = vrot.lane.b32.xlu0 %v1919, 32
    %v1922 = vpop.permute.xlu0 %1921
    %v1924 = vadd.f32 %v1914, %v1922
    %v1925 = vtanh.pop %v1924
    %1927 = vrot.lane.b32.xlu0 %v1925, 64
    %v1928 = vpop.permute.xlu0 %1927
    %v1930 = vmul.f32 %v1912, %v1928
    %1932 = vrot.lane.b32.xlu0 %v1930, 32
    %v1933 = vpop.permute.xlu0 %1932
    %v1934 = vsel %vm137, %v1933, 0
    %1936 = vmatprep.subr.mxu0 0.0
    %1937 = vmatpush1.msra.mxu0 %v1096
    %1938 = vmatprep.subr.mxu0 0.0
    %1939 = vmatpush1.msra.mxu0 %v1097
    %1940 = vmatprep.subr.mxu0 0.0
    %1941 = vmatpush1.msra.mxu0 %v1098
    %1942 = vmatprep.subr.mxu0 0.0
    %1943 = vmatpush1.msra.mxu0 %v1099
    %1944 = vmatprep.subr.mxu0 0.0
    %1945 = vmatpush1.msra.mxu0 0.0
    %1946 = vmatprep.subr.mxu0 0.0
    %1947 = vmatpush1.msra.mxu0 0.0
    %1948 = vmatprep.subr.mxu0 0.0
    %1949 = vmatpush1.msra.mxu0 0.0
    %1950 = vmatprep.subr.mxu0 0.0
    %1951 = vmatpush1.msra.mxu0 0.0
    %1952 = vmatprep.subr.mxu0 0.0
    %1953 = vmatpush1.msra.mxu0 0.0
    %1954 = vmatprep.subr.mxu0 0.0
    %1955 = vmatpush1.msra.mxu0 0.0
    %1956 = vmatprep.subr.mxu0 0.0
    %1957 = vmatpush1.msra.mxu0 0.0
    %1958 = vmatprep.subr.mxu0 0.0
    %1959 = vmatpush1.msra.mxu0 0.0
    %1960 = vmatprep.subr.mxu0 0.0
    %1961 = vmatpush1.msra.mxu0 0.0
    %1962 = vmatprep.subr.mxu0 0.0
    %1963 = vmatpush1.msra.mxu0 0.0
    %1964 = vmatprep.subr.mxu0 0.0
    %1965 = vmatpush1.msra.mxu0 0.0
    %1966 = vmatprep.subr.mxu0 0.0
    %1967 = vmatpush1.msra.mxu0 0.0
    %1968 = vmatprep.subr.mxu0 0.0
    %1969 = vmatpush1.msra.mxu0 0.0
    %1970 = vmatprep.subr.mxu0 0.0
    %1971 = vmatpush1.msra.mxu0 0.0
    %1972 = vmatprep.subr.mxu0 0.0
    %1973 = vmatpush1.msra.mxu0 0.0
    %1974 = vmatprep.subr.mxu0 0.0
    %1975 = vmatpush1.msra.mxu0 0.0
    %1976 = vmatprep.subr.mxu0 0.0
    %1977 = vmatpush1.msra.mxu0 0.0
    %1978 = vmatprep.subr.mxu0 0.0
    %1979 = vmatpush1.msra.mxu0 0.0
    %1980 = vmatprep.subr.mxu0 0.0
    %1981 = vmatpush1.msra.mxu0 0.0
    %1982 = vmatprep.subr.mxu0 0.0
    %1983 = vmatpush1.msra.mxu0 0.0
    %1984 = vmatprep.subr.mxu0 0.0
    %1985 = vmatpush1.msra.mxu0 0.0
    %1986 = vmatprep.subr.mxu0 0.0
    %1987 = vmatpush1.msra.mxu0 0.0
    %1988 = vmatprep.subr.mxu0 0.0
    %1989 = vmatpush1.msra.mxu0 0.0
    %1990 = vmatprep.subr.mxu0 0.0
    %1991 = vmatpush1.msra.mxu0 0.0
    %1992 = vmatprep.subr.mxu0 0.0
    %1993 = vmatpush1.msra.mxu0 0.0
    %1994 = vmatprep.subr.mxu0 0.0
    %1995 = vmatpush1.msra.mxu0 0.0
    %1996 = vmatprep.subr.mxu0 0.0
    %1997 = vmatpush1.msra.mxu0 0.0
    %1998 = vmatprep.subr.mxu0 0.0
    %1999 = vmatpush1.msra.mxu0 0.0
    %2000 = vmatprep.mubr.f32.mxu0 0.0
    %2001 = vmatmul.mubr.f32.gmra.mrb[0].mxu0 %v1934
    %v2002 = vpop.f32.mrb[0].mxu0
    %v2003 = vadd.f32 0.0, %v2002
    %v2004 = vpop.f32.mrb[0].mxu0
    %2005 = vdwg.mxu0
    %v2006 = vadd.f32 %v1233, %v2003
    %v2007 = vxor.u32 %v2006, 2147483648
    %v2008 = vmul.f32 %v2007, 1.442695
    %v2009 = vpow.pop %v2008
    %v2010 = vadd.f32 %v2009, 1.0
    %v2011 = vrcp.pop %v2010
    %v2012 = vmul.f32 1.0, %v2011
    %v2013 = vtanh.pop %v2006
    %v2014 = vmul.f32 %v2012, %v1924
    %2016 = vrot.lane.b32.xlu0 %v2013, 64
    %v2017 = vpop.permute.xlu0 %2016
    %v2019 = vmul.f32 %v2012, %v2017
    %2021 = vrot.lane.b32.xlu0 %v2019, 32
    %v2022 = vpop.permute.xlu0 %2021
    %v2024 = vadd.f32 %v2014, %v2022
    %v2025 = vtanh.pop %v2024
    %2027 = vrot.lane.b32.xlu0 %v2025, 64
    %v2028 = vpop.permute.xlu0 %2027
    %v2030 = vmul.f32 %v2012, %v2028
    %v2031 = vld [vmem:[#allocation6] sm:$0xff]
    %v2032 = vld [vmem:[#allocation6 + $0x8] sm:$0xff]
    %v2033 = vld [vmem:[#allocation6 + $0x10] sm:$0xff]
    %v2034 = vld [vmem:[#allocation6 + $0x18] sm:$0xff]
    %v2035 = vld [vmem:[#allocation8] sm:$0xff]
    %v2036 = vld [vmem:[#allocation8 + $0x8] sm:$0xff]
    %v2037 = vld [vmem:[#allocation8 + $0x10] sm:$0xff]
    %v2038 = vld [vmem:[#allocation8 + $0x18] sm:$0xff]
    %v2039 = vld [vmem:[#allocation9] sm:$0x1]
    %v2041 = vlaneseq
    %v2042 = vshrl.u32 %v2041, 7
    %v2043 = vsub.s32 0, %v2042
    %v2044 = vrot.slane %v2039, %v2043
    %2047 = vrot.lane.b32.xlu0 %v2030, 32
    %v2048 = vpop.permute.xlu0 %2047
    %v2049 = vsel %vm137, %v2048, 0
    %2051 = vmatprep.subr.mxu0 0.0
    %2052 = vmatpush1.msra.mxu0 %v2031
    %2053 = vmatprep.subr.mxu0 0.0
    %2054 = vmatpush1.msra.mxu0 %v2032
    %2055 = vmatprep.subr.mxu0 0.0
    %2056 = vmatpush1.msra.mxu0 %v2033
    %2057 = vmatprep.subr.mxu0 0.0
    %2058 = vmatpush1.msra.mxu0 %v2034
    %2059 = vmatprep.subr.mxu0 0.0
    %2060 = vmatpush1.msra.mxu0 0.0
    %2061 = vmatprep.subr.mxu0 0.0
    %2062 = vmatpush1.msra.mxu0 0.0
    %2063 = vmatprep.subr.mxu0 0.0
    %2064 = vmatpush1.msra.mxu0 0.0
    %2065 = vmatprep.subr.mxu0 0.0
    %2066 = vmatpush1.msra.mxu0 0.0
    %2067 = vmatprep.subr.mxu0 0.0
    %2068 = vmatpush1.msra.mxu0 0.0
    %2069 = vmatprep.subr.mxu0 0.0
    %2070 = vmatpush1.msra.mxu0 0.0
    %2071 = vmatprep.subr.mxu0 0.0
    %2072 = vmatpush1.msra.mxu0 0.0
    %2073 = vmatprep.subr.mxu0 0.0
    %2074 = vmatpush1.msra.mxu0 0.0
    %2075 = vmatprep.subr.mxu0 0.0
    %2076 = vmatpush1.msra.mxu0 0.0
    %2077 = vmatprep.subr.mxu0 0.0
    %2078 = vmatpush1.msra.mxu0 0.0
    %2079 = vmatprep.subr.mxu0 0.0
    %2080 = vmatpush1.msra.mxu0 0.0
    %2081 = vmatprep.subr.mxu0 0.0
    %2082 = vmatpush1.msra.mxu0 0.0
    %2083 = vmatprep.subr.mxu0 0.0
    %2084 = vmatpush1.msra.mxu0 0.0
    %2085 = vmatprep.subr.mxu0 0.0
    %2086 = vmatpush1.msra.mxu0 0.0
    %2087 = vmatprep.subr.mxu0 0.0
    %2088 = vmatpush1.msra.mxu0 0.0
    %2089 = vmatprep.subr.mxu0 0.0
    %2090 = vmatpush1.msra.mxu0 0.0
    %2091 = vmatprep.subr.mxu0 0.0
    %2092 = vmatpush1.msra.mxu0 0.0
    %2093 = vmatprep.subr.mxu0 0.0
    %2094 = vmatpush1.msra.mxu0 0.0
    %2095 = vmatprep.subr.mxu0 0.0
    %2096 = vmatpush1.msra.mxu0 0.0
    %2097 = vmatprep.subr.mxu0 0.0
    %2098 = vmatpush1.msra.mxu0 0.0
    %2099 = vmatprep.subr.mxu0 0.0
    %2100 = vmatpush1.msra.mxu0 0.0
    %2101 = vmatprep.subr.mxu0 0.0
    %2102 = vmatpush1.msra.mxu0 0.0
    %2103 = vmatprep.subr.mxu0 0.0
    %2104 = vmatpush1.msra.mxu0 0.0
    %2105 = vmatprep.subr.mxu0 0.0
    %2106 = vmatpush1.msra.mxu0 0.0
    %2107 = vmatprep.subr.mxu0 0.0
    %2108 = vmatpush1.msra.mxu0 0.0
    %2109 = vmatprep.subr.mxu0 0.0
    %2110 = vmatpush1.msra.mxu0 0.0
    %2111 = vmatprep.subr.mxu0 0.0
    %2112 = vmatpush1.msra.mxu0 0.0
    %2113 = vmatprep.subr.mxu0 0.0
    %2114 = vmatpush1.msra.mxu0 0.0
    %2115 = vmatprep.mubr.f32.mxu0 0.0
    %2116 = vmatmul.mubr.f32.gmra.mrb[0].mxu0 %v2049
    %v2117 = vpop.f32.mrb[0].mxu0
    %v2118 = vadd.f32 %v2044, %v2117
    %v2119 = vpop.f32.mrb[0].mxu0
    %2120 = vdwg.mxu0
    %2121 = vmatprep.subr.mxu0 0.0
    %2122 = vmatpush1.msra.mxu0 %v2035
    %2123 = vmatprep.subr.mxu0 0.0
    %2124 = vmatpush1.msra.mxu0 %v2036
    %2125 = vmatprep.subr.mxu0 0.0
    %2126 = vmatpush1.msra.mxu0 %v2037
    %2127 = vmatprep.subr.mxu0 0.0
    %2128 = vmatpush1.msra.mxu0 %v2038
    %2129 = vmatprep.subr.mxu0 0.0
    %2130 = vmatpush1.msra.mxu0 0.0
    %2131 = vmatprep.subr.mxu0 0.0
    %2132 = vmatpush1.msra.mxu0 0.0
    %2133 = vmatprep.subr.mxu0 0.0
    %2134 = vmatpush1.msra.mxu0 0.0
    %2135 = vmatprep.subr.mxu0 0.0
    %2136 = vmatpush1.msra.mxu0 0.0
    %2137 = vmatprep.subr.mxu0 0.0
    %2138 = vmatpush1.msra.mxu0 0.0
    %2139 = vmatprep.subr.mxu0 0.0
    %2140 = vmatpush1.msra.mxu0 0.0
    %2141 = vmatprep.subr.mxu0 0.0
    %2142 = vmatpush1.msra.mxu0 0.0
    %2143 = vmatprep.subr.mxu0 0.0
    %2144 = vmatpush1.msra.mxu0 0.0
    %2145 = vmatprep.subr.mxu0 0.0
    %2146 = vmatpush1.msra.mxu0 0.0
    %2147 = vmatprep.subr.mxu0 0.0
    %2148 = vmatpush1.msra.mxu0 0.0
    %2149 = vmatprep.subr.mxu0 0.0
    %2150 = vmatpush1.msra.mxu0 0.0
    %2151 = vmatprep.subr.mxu0 0.0
    %2152 = vmatpush1.msra.mxu0 0.0
    %2153 = vmatprep.subr.mxu0 0.0
    %2154 = vmatpush1.msra.mxu0 0.0
    %2155 = vmatprep.subr.mxu0 0.0
    %2156 = vmatpush1.msra.mxu0 0.0
    %2157 = vmatprep.subr.mxu0 0.0
    %2158 = vmatpush1.msra.mxu0 0.0
    %2159 = vmatprep.subr.mxu0 0.0
    %2160 = vmatpush1.msra.mxu0 0.0
    %2161 = vmatprep.subr.mxu0 0.0
    %2162 = vmatpush1.msra.mxu0 0.0
    %2163 = vmatprep.subr.mxu0 0.0
    %2164 = vmatpush1.msra.mxu0 0.0
    %2165 = vmatprep.subr.mxu0 0.0
    %2166 = vmatpush1.msra.mxu0 0.0
    %2167 = vmatprep.subr.mxu0 0.0
    %2168 = vmatpush1.msra.mxu0 0.0
    %2169 = vmatprep.subr.mxu0 0.0
    %2170 = vmatpush1.msra.mxu0 0.0
    %2171 = vmatprep.subr.mxu0 0.0
    %2172 = vmatpush1.msra.mxu0 0.0
    %2173 = vmatprep.subr.mxu0 0.0
    %2174 = vmatpush1.msra.mxu0 0.0
    %2175 = vmatprep.subr.mxu0 0.0
    %2176 = vmatpush1.msra.mxu0 0.0
    %2177 = vmatprep.subr.mxu0 0.0
    %2178 = vmatpush1.msra.mxu0 0.0
    %2179 = vmatprep.subr.mxu0 0.0
    %2180 = vmatpush1.msra.mxu0 0.0
    %2181 = vmatprep.subr.mxu0 0.0
    %2182 = vmatpush1.msra.mxu0 0.0
    %2183 = vmatprep.subr.mxu0 0.0
    %2184 = vmatpush1.msra.mxu0 0.0
    %2185 = vmatprep.mubr.f32.mxu0 0.0
    %2186 = vmatmul.mubr.f32.gmra.mrb[0].mxu0 %v268
    %v2187 = vpop.f32.mrb[0].mxu0
    %v2188 = vadd.f32 0.0, %v2187
    %v2189 = vpop.f32.mrb[0].mxu0
    %2190 = vdwg.mxu0
    %v2191 = vadd.f32 %v2118, %v2188
    %v2192 = vxor.u32 %v2191, 2147483648
    %v2193 = vmul.f32 %v2192, 1.442695
    %v2194 = vpow.pop %v2193
    %v2195 = vadd.f32 %v2194, 1.0
    %v2196 = vrcp.pop %v2195
    %v2197 = vmul.f32 1.0, %v2196
    %v2198 = vtanh.pop %v2191
    %v2199 = vmul.f32 %v2197, 0.0
    %2201 = vrot.lane.b32.xlu0 %v2198, 64
    %v2202 = vpop.permute.xlu0 %2201
    %v2204 = vmul.f32 %v2197, %v2202
    %2206 = vrot.lane.b32.xlu0 %v2204, 32
    %v2207 = vpop.permute.xlu0 %2206
    %v2209 = vadd.f32 %v2199, %v2207
    %v2210 = vtanh.pop %v2209
    %2212 = vrot.lane.b32.xlu0 %v2210, 64
    %v2213 = vpop.permute.xlu0 %2212
    %v2215 = vmul.f32 %v2197, %v2213
    %2217 = vrot.lane.b32.xlu0 %v2215, 32
    %v2218 = vpop.permute.xlu0 %2217
    %vm2220 = vcmask 254976
    %2221 = vst.msk [vmem:[#allocation2] sm:$0x3] %vm2220, %v2218
    %v2222 = vsel %vm137, %v2218, 0
    %2224 = vmatprep.subr.mxu0 0.0
    %2225 = vmatpush1.msra.mxu0 %v2035
    %2226 = vmatprep.subr.mxu0 0.0
    %2227 = vmatpush1.msra.mxu0 %v2036
    %2228 = vmatprep.subr.mxu0 0.0
    %2229 = vmatpush1.msra.mxu0 %v2037
    %2230 = vmatprep.subr.mxu0 0.0
    %2231 = vmatpush1.msra.mxu0 %v2038
    %2232 = vmatprep.subr.mxu0 0.0
    %2233 = vmatpush1.msra.mxu0 0.0
    %2234 = vmatprep.subr.mxu0 0.0
    %2235 = vmatpush1.msra.mxu0 0.0
    %2236 = vmatprep.subr.mxu0 0.0
    %2237 = vmatpush1.msra.mxu0 0.0
    %2238 = vmatprep.subr.mxu0 0.0
    %2239 = vmatpush1.msra.mxu0 0.0
    %2240 = vmatprep.subr.mxu0 0.0
    %2241 = vmatpush1.msra.mxu0 0.0
    %2242 = vmatprep.subr.mxu0 0.0
    %2243 = vmatpush1.msra.mxu0 0.0
    %2244 = vmatprep.subr.mxu0 0.0
    %2245 = vmatpush1.msra.mxu0 0.0
    %2246 = vmatprep.subr.mxu0 0.0
    %2247 = vmatpush1.msra.mxu0 0.0
    %2248 = vmatprep.subr.mxu0 0.0
    %2249 = vmatpush1.msra.mxu0 0.0
    %2250 = vmatprep.subr.mxu0 0.0
    %2251 = vmatpush1.msra.mxu0 0.0
    %2252 = vmatprep.subr.mxu0 0.0
    %2253 = vmatpush1.msra.mxu0 0.0
    %2254 = vmatprep.subr.mxu0 0.0
    %2255 = vmatpush1.msra.mxu0 0.0
    %2256 = vmatprep.subr.mxu0 0.0
    %2257 = vmatpush1.msra.mxu0 0.0
    %2258 = vmatprep.subr.mxu0 0.0
    %2259 = vmatpush1.msra.mxu0 0.0
    %2260 = vmatprep.subr.mxu0 0.0
    %2261 = vmatpush1.msra.mxu0 0.0
    %2262 = vmatprep.subr.mxu0 0.0
    %2263 = vmatpush1.msra.mxu0 0.0
    %2264 = vmatprep.subr.mxu0 0.0
    %2265 = vmatpush1.msra.mxu0 0.0
    %2266 = vmatprep.subr.mxu0 0.0
    %2267 = vmatpush1.msra.mxu0 0.0
    %2268 = vmatprep.subr.mxu0 0.0
    %2269 = vmatpush1.msra.mxu0 0.0
    %2270 = vmatprep.subr.mxu0 0.0
    %2271 = vmatpush1.msra.mxu0 0.0
    %2272 = vmatprep.subr.mxu0 0.0
    %2273 = vmatpush1.msra.mxu0 0.0
    %2274 = vmatprep.subr.mxu0 0.0
    %2275 = vmatpush1.msra.mxu0 0.0
    %2276 = vmatprep.subr.mxu0 0.0
    %2277 = vmatpush1.msra.mxu0 0.0
    %2278 = vmatprep.subr.mxu0 0.0
    %2279 = vmatpush1.msra.mxu0 0.0
    %2280 = vmatprep.subr.mxu0 0.0
    %2281 = vmatpush1.msra.mxu0 0.0
    %2282 = vmatprep.subr.mxu0 0.0
    %2283 = vmatpush1.msra.mxu0 0.0
    %2284 = vmatprep.subr.mxu0 0.0
    %2285 = vmatpush1.msra.mxu0 0.0
    %2286 = vmatprep.subr.mxu0 0.0
    %2287 = vmatpush1.msra.mxu0 0.0
    %2288 = vmatprep.mubr.f32.mxu0 0.0
    %2289 = vmatmul.mubr.f32.gmra.mrb[0].mxu0 %v2222
    %v2290 = vpop.f32.mrb[0].mxu0
    %v2291 = vadd.f32 0.0, %v2290
    %v2292 = vpop.f32.mrb[0].mxu0
    %2293 = vdwg.mxu0
    %v2295 = vrot.slane %v2291, 6
    %v2297 = vadd.f32 %v2118, %v2295
    %v2298 = vxor.u32 %v2297, 2147483648
    %v2299 = vmul.f32 %v2298, 1.442695
    %v2300 = vpow.pop %v2299
    %v2301 = vadd.f32 %v2300, 1.0
    %v2302 = vrcp.pop %v2301
    %v2303 = vmul.f32 1.0, %v2302
    %v2304 = vtanh.pop %v2297
    %v2306 = vrot.slane %v2209, 6
    %v2308 = vmul.f32 %v2303, %v2306
    %2310 = vrot.lane.b32.xlu0 %v2304, 64
    %v2311 = vpop.permute.xlu0 %2310
    %v2313 = vmul.f32 %v2303, %v2311
    %2315 = vrot.lane.b32.xlu0 %v2313, 32
    %v2316 = vpop.permute.xlu0 %2315
    %v2318 = vadd.f32 %v2308, %v2316
    %v2319 = vtanh.pop %v2318
    %2321 = vrot.lane.b32.xlu0 %v2319, 64
    %v2322 = vpop.permute.xlu0 %2321
    %v2324 = vmul.f32 %v2303, %v2322
    %2326 = vrot.lane.b32.xlu0 %v2324, 32
    %v2327 = vpop.permute.xlu0 %2326
    %vm2329 = vcmask 257026
    %2330 = vst.msk [vmem:[#allocation2] sm:$0xc] %vm2329, %v2327
    %v2331 = vrot.slane %v2324, 2
    %2332 = vrot.lane.b32.xlu0 %v2331, 32
    %v2333 = vpop.permute.xlu0 %2332
    %v2334 = vsel %vm137, %v2333, 0
    %2336 = vmatprep.subr.mxu0 0.0
    %2337 = vmatpush1.msra.mxu0 %v2035
    %2338 = vmatprep.subr.mxu0 0.0
    %2339 = vmatpush1.msra.mxu0 %v2036
    %2340 = vmatprep.subr.mxu0 0.0
    %2341 = vmatpush1.msra.mxu0 %v2037
    %2342 = vmatprep.subr.mxu0 0.0
    %2343 = vmatpush1.msra.mxu0 %v2038
    %2344 = vmatprep.subr.mxu0 0.0
    %2345 = vmatpush1.msra.mxu0 0.0
    %2346 = vmatprep.subr.mxu0 0.0
    %2347 = vmatpush1.msra.mxu0 0.0
    %2348 = vmatprep.subr.mxu0 0.0
    %2349 = vmatpush1.msra.mxu0 0.0
    %2350 = vmatprep.subr.mxu0 0.0
    %2351 = vmatpush1.msra.mxu0 0.0
    %2352 = vmatprep.subr.mxu0 0.0
    %2353 = vmatpush1.msra.mxu0 0.0
    %2354 = vmatprep.subr.mxu0 0.0
    %2355 = vmatpush1.msra.mxu0 0.0
    %2356 = vmatprep.subr.mxu0 0.0
    %2357 = vmatpush1.msra.mxu0 0.0
    %2358 = vmatprep.subr.mxu0 0.0
    %2359 = vmatpush1.msra.mxu0 0.0
    %2360 = vmatprep.subr.mxu0 0.0
    %2361 = vmatpush1.msra.mxu0 0.0
    %2362 = vmatprep.subr.mxu0 0.0
    %2363 = vmatpush1.msra.mxu0 0.0
    %2364 = vmatprep.subr.mxu0 0.0
    %2365 = vmatpush1.msra.mxu0 0.0
    %2366 = vmatprep.subr.mxu0 0.0
    %2367 = vmatpush1.msra.mxu0 0.0
    %2368 = vmatprep.subr.mxu0 0.0
    %2369 = vmatpush1.msra.mxu0 0.0
    %2370 = vmatprep.subr.mxu0 0.0
    %2371 = vmatpush1.msra.mxu0 0.0
    %2372 = vmatprep.subr.mxu0 0.0
    %2373 = vmatpush1.msra.mxu0 0.0
    %2374 = vmatprep.subr.mxu0 0.0
    %2375 = vmatpush1.msra.mxu0 0.0
    %2376 = vmatprep.subr.mxu0 0.0
    %2377 = vmatpush1.msra.mxu0 0.0
    %2378 = vmatprep.subr.mxu0 0.0
    %2379 = vmatpush1.msra.mxu0 0.0
    %2380 = vmatprep.subr.mxu0 0.0
    %2381 = vmatpush1.msra.mxu0 0.0
    %2382 = vmatprep.subr.mxu0 0.0
    %2383 = vmatpush1.msra.mxu0 0.0
    %2384 = vmatprep.subr.mxu0 0.0
    %2385 = vmatpush1.msra.mxu0 0.0
    %2386 = vmatprep.subr.mxu0 0.0
    %2387 = vmatpush1.msra.mxu0 0.0
    %2388 = vmatprep.subr.mxu0 0.0
    %2389 = vmatpush1.msra.mxu0 0.0
    %2390 = vmatprep.subr.mxu0 0.0
    %2391 = vmatpush1.msra.mxu0 0.0
    %2392 = vmatprep.subr.mxu0 0.0
    %2393 = vmatpush1.msra.mxu0 0.0
    %2394 = vmatprep.subr.mxu0 0.0
    %2395 = vmatpush1.msra.mxu0 0.0
    %2396 = vmatprep.subr.mxu0 0.0
    %2397 = vmatpush1.msra.mxu0 0.0
    %2398 = vmatprep.subr.mxu0 0.0
    %2399 = vmatpush1.msra.mxu0 0.0
    %2400 = vmatprep.mubr.f32.mxu0 0.0
    %2401 = vmatmul.mubr.f32.gmra.mrb[0].mxu0 %v2334
    %v2402 = vpop.f32.mrb[0].mxu0
    %v2403 = vadd.f32 0.0, %v2402
    %v2404 = vpop.f32.mrb[0].mxu0
    %2405 = vdwg.mxu0
    %v2407 = vrot.slane %v2403, 4
    %v2409 = vadd.f32 %v2118, %v2407
    %v2410 = vxor.u32 %v2409, 2147483648
    %v2411 = vmul.f32 %v2410, 1.442695
    %v2412 = vpow.pop %v2411
    %v2413 = vadd.f32 %v2412, 1.0
    %v2414 = vrcp.pop %v2413
    %v2415 = vmul.f32 1.0, %v2414
    %v2416 = vtanh.pop %v2409
    %v2418 = vrot.slane %v2318, 6
    %v2420 = vmul.f32 %v2415, %v2418
    %2422 = vrot.lane.b32.xlu0 %v2416, 64
    %v2423 = vpop.permute.xlu0 %2422
    %v2425 = vmul.f32 %v2415, %v2423
    %2427 = vrot.lane.b32.xlu0 %v2425, 32
    %v2428 = vpop.permute.xlu0 %2427
    %v2430 = vadd.f32 %v2420, %v2428
    %v2431 = vtanh.pop %v2430
    %2433 = vrot.lane.b32.xlu0 %v2431, 64
    %v2434 = vpop.permute.xlu0 %2433
    %v2436 = vmul.f32 %v2415, %v2434
    %2438 = vrot.lane.b32.xlu0 %v2436, 32
    %v2439 = vpop.permute.xlu0 %2438
    %vm2441 = vcmask 259076
    %2442 = vst.msk [vmem:[#allocation2] sm:$0x30] %vm2441, %v2439
    %v2443 = vrot.slane %v2436, 4
    %2444 = vrot.lane.b32.xlu0 %v2443, 32
    %v2445 = vpop.permute.xlu0 %2444
    %v2446 = vsel %vm137, %v2445, 0
    %2448 = vmatprep.subr.mxu0 0.0
    %2449 = vmatpush1.msra.mxu0 %v2035
    %2450 = vmatprep.subr.mxu0 0.0
    %2451 = vmatpush1.msra.mxu0 %v2036
    %2452 = vmatprep.subr.mxu0 0.0
    %2453 = vmatpush1.msra.mxu0 %v2037
    %2454 = vmatprep.subr.mxu0 0.0
    %2455 = vmatpush1.msra.mxu0 %v2038
    %2456 = vmatprep.subr.mxu0 0.0
    %2457 = vmatpush1.msra.mxu0 0.0
    %2458 = vmatprep.subr.mxu0 0.0
    %2459 = vmatpush1.msra.mxu0 0.0
    %2460 = vmatprep.subr.mxu0 0.0
    %2461 = vmatpush1.msra.mxu0 0.0
    %2462 = vmatprep.subr.mxu0 0.0
    %2463 = vmatpush1.msra.mxu0 0.0
    %2464 = vmatprep.subr.mxu0 0.0
    %2465 = vmatpush1.msra.mxu0 0.0
    %2466 = vmatprep.subr.mxu0 0.0
    %2467 = vmatpush1.msra.mxu0 0.0
    %2468 = vmatprep.subr.mxu0 0.0
    %2469 = vmatpush1.msra.mxu0 0.0
    %2470 = vmatprep.subr.mxu0 0.0
    %2471 = vmatpush1.msra.mxu0 0.0
    %2472 = vmatprep.subr.mxu0 0.0
    %2473 = vmatpush1.msra.mxu0 0.0
    %2474 = vmatprep.subr.mxu0 0.0
    %2475 = vmatpush1.msra.mxu0 0.0
    %2476 = vmatprep.subr.mxu0 0.0
    %2477 = vmatpush1.msra.mxu0 0.0
    %2478 = vmatprep.subr.mxu0 0.0
    %2479 = vmatpush1.msra.mxu0 0.0
    %2480 = vmatprep.subr.mxu0 0.0
    %2481 = vmatpush1.msra.mxu0 0.0
    %2482 = vmatprep.subr.mxu0 0.0
    %2483 = vmatpush1.msra.mxu0 0.0
    %2484 = vmatprep.subr.mxu0 0.0
    %2485 = vmatpush1.msra.mxu0 0.0
    %2486 = vmatprep.subr.mxu0 0.0
    %2487 = vmatpush1.msra.mxu0 0.0
    %2488 = vmatprep.subr.mxu0 0.0
    %2489 = vmatpush1.msra.mxu0 0.0
    %2490 = vmatprep.subr.mxu0 0.0
    %2491 = vmatpush1.msra.mxu0 0.0
    %2492 = vmatprep.subr.mxu0 0.0
    %2493 = vmatpush1.msra.mxu0 0.0
    %2494 = vmatprep.subr.mxu0 0.0
    %2495 = vmatpush1.msra.mxu0 0.0
    %2496 = vmatprep.subr.mxu0 0.0
    %2497 = vmatpush1.msra.mxu0 0.0
    %2498 = vmatprep.subr.mxu0 0.0
    %2499 = vmatpush1.msra.mxu0 0.0
    %2500 = vmatprep.subr.mxu0 0.0
    %2501 = vmatpush1.msra.mxu0 0.0
    %2502 = vmatprep.subr.mxu0 0.0
    %2503 = vmatpush1.msra.mxu0 0.0
    %2504 = vmatprep.subr.mxu0 0.0
    %2505 = vmatpush1.msra.mxu0 0.0
    %2506 = vmatprep.subr.mxu0 0.0
    %2507 = vmatpush1.msra.mxu0 0.0
    %2508 = vmatprep.subr.mxu0 0.0
    %2509 = vmatpush1.msra.mxu0 0.0
    %2510 = vmatprep.subr.mxu0 0.0
    %2511 = vmatpush1.msra.mxu0 0.0
    %2512 = vmatprep.mubr.f32.mxu0 0.0
    %2513 = vmatmul.mubr.f32.gmra.mrb[0].mxu0 %v2446
    %v2514 = vpop.f32.mrb[0].mxu0
    %v2515 = vadd.f32 0.0, %v2514
    %v2516 = vpop.f32.mrb[0].mxu0
    %2517 = vdwg.mxu0
    %v2519 = vrot.slane %v2515, 2
    %v2521 = vadd.f32 %v2118, %v2519
    %v2522 = vxor.u32 %v2521, 2147483648
    %v2523 = vmul.f32 %v2522, 1.442695
    %v2524 = vpow.pop %v2523
    %v2525 = vadd.f32 %v2524, 1.0
    %v2526 = vrcp.pop %v2525
    %v2527 = vmul.f32 1.0, %v2526
    %v2528 = vtanh.pop %v2521
    %v2530 = vrot.slane %v2430, 6
    %v2532 = vmul.f32 %v2527, %v2530
    %2534 = vrot.lane.b32.xlu0 %v2528, 64
    %v2535 = vpop.permute.xlu0 %2534
    %v2537 = vmul.f32 %v2527, %v2535
    %2539 = vrot.lane.b32.xlu0 %v2537, 32
    %v2540 = vpop.permute.xlu0 %2539
    %v2542 = vadd.f32 %v2532, %v2540
    %v2543 = vtanh.pop %v2542
    %2545 = vrot.lane.b32.xlu0 %v2543, 64
    %v2546 = vpop.permute.xlu0 %2545
    %v2548 = vmul.f32 %v2527, %v2546
    %2550 = vrot.lane.b32.xlu0 %v2548, 32
    %v2551 = vpop.permute.xlu0 %2550
    %vm2553 = vcmask 261126
    %2554 = vst.msk [vmem:[#allocation2] sm:$0xc0] %vm2553, %v2551
    %v2555 = vld [vmem:[#allocation2] sm:$0xff]
    %v2556 = vld [vmem:[%s10] sm:$0xff]
    %v2557 = vld [vmem:[%s10 + $0x8] sm:$0xff]
    %v2558 = vld [vmem:[%s10 + $0x10] sm:$0xff]
    %v2559 = vld [vmem:[%s10 + $0x18] sm:$0xff]
    %v2560 = vld [vmem:[#allocation11] sm:$0xff]
    %v2561 = vld [vmem:[#allocation11 + $0x8] sm:$0xff]
    %v2562 = vld [vmem:[#allocation11 + $0x10] sm:$0xff]
    %v2563 = vld [vmem:[#allocation11 + $0x18] sm:$0xff]
    %v2564 = vld [vmem:[%s12] sm:$0x1]
    %v2566 = vlaneseq
    %v2567 = vshrl.u32 %v2566, 7
    %v2568 = vsub.s32 0, %v2567
    %v2569 = vrot.slane %v2564, %v2568
    %v2572 = vsel %vm137, %v2555, 0
    %2574 = vmatprep.subr.mxu0 0.0
    %2575 = vmatpush1.msra.mxu0 %v2556
    %2576 = vmatprep.subr.mxu0 0.0
    %2577 = vmatpush1.msra.mxu0 %v2557
    %2578 = vmatprep.subr.mxu0 0.0
    %2579 = vmatpush1.msra.mxu0 %v2558
    %2580 = vmatprep.subr.mxu0 0.0
    %2581 = vmatpush1.msra.mxu0 %v2559
    %2582 = vmatprep.subr.mxu0 0.0
    %2583 = vmatpush1.msra.mxu0 0.0
    %2584 = vmatprep.subr.mxu0 0.0
    %2585 = vmatpush1.msra.mxu0 0.0
    %2586 = vmatprep.subr.mxu0 0.0
    %2587 = vmatpush1.msra.mxu0 0.0
    %2588 = vmatprep.subr.mxu0 0.0
    %2589 = vmatpush1.msra.mxu0 0.0
    %2590 = vmatprep.subr.mxu0 0.0
    %2591 = vmatpush1.msra.mxu0 0.0
    %2592 = vmatprep.subr.mxu0 0.0
    %2593 = vmatpush1.msra.mxu0 0.0
    %2594 = vmatprep.subr.mxu0 0.0
    %2595 = vmatpush1.msra.mxu0 0.0
    %2596 = vmatprep.subr.mxu0 0.0
    %2597 = vmatpush1.msra.mxu0 0.0
    %2598 = vmatprep.subr.mxu0 0.0
    %2599 = vmatpush1.msra.mxu0 0.0
    %2600 = vmatprep.subr.mxu0 0.0
    %2601 = vmatpush1.msra.mxu0 0.0
    %2602 = vmatprep.subr.mxu0 0.0
    %2603 = vmatpush1.msra.mxu0 0.0
    %2604 = vmatprep.subr.mxu0 0.0
    %2605 = vmatpush1.msra.mxu0 0.0
    %2606 = vmatprep.subr.mxu0 0.0
    %2607 = vmatpush1.msra.mxu0 0.0
    %2608 = vmatprep.subr.mxu0 0.0
    %2609 = vmatpush1.msra.mxu0 0.0
    %2610 = vmatprep.subr.mxu0 0.0
    %2611 = vmatpush1.msra.mxu0 0.0
    %2612 = vmatprep.subr.mxu0 0.0
    %2613 = vmatpush1.msra.mxu0 0.0
    %2614 = vmatprep.subr.mxu0 0.0
    %2615 = vmatpush1.msra.mxu0 0.0
    %2616 = vmatprep.subr.mxu0 0.0
    %2617 = vmatpush1.msra.mxu0 0.0
    %2618 = vmatprep.subr.mxu0 0.0
    %2619 = vmatpush1.msra.mxu0 0.0
    %2620 = vmatprep.subr.mxu0 0.0
    %2621 = vmatpush1.msra.mxu0 0.0
    %2622 = vmatprep.subr.mxu0 0.0
    %2623 = vmatpush1.msra.mxu0 0.0
    %2624 = vmatprep.subr.mxu0 0.0
    %2625 = vmatpush1.msra.mxu0 0.0
    %2626 = vmatprep.subr.mxu0 0.0
    %2627 = vmatpush1.msra.mxu0 0.0
    %2628 = vmatprep.subr.mxu0 0.0
    %2629 = vmatpush1.msra.mxu0 0.0
    %2630 = vmatprep.subr.mxu0 0.0
    %2631 = vmatpush1.msra.mxu0 0.0
    %2632 = vmatprep.subr.mxu0 0.0
    %2633 = vmatpush1.msra.mxu0 0.0
    %2634 = vmatprep.subr.mxu0 0.0
    %2635 = vmatpush1.msra.mxu0 0.0
    %2636 = vmatprep.subr.mxu0 0.0
    %2637 = vmatpush1.msra.mxu0 0.0
    %2638 = vmatprep.mubr.f32.mxu0 0.0
    %2639 = vmatmul.mubr.f32.gmra.mrb[0].mxu0 %v2572
    %v2640 = vpop.f32.mrb[0].mxu0
    %v2641 = vadd.f32 %v2569, %v2640
    %v2642 = vpop.f32.mrb[0].mxu0
    %2643 = vdwg.mxu0
    %2644 = vmatprep.subr.mxu0 0.0
    %2645 = vmatpush1.msra.mxu0 %v2560
    %2646 = vmatprep.subr.mxu0 0.0
    %2647 = vmatpush1.msra.mxu0 %v2561
    %2648 = vmatprep.subr.mxu0 0.0
    %2649 = vmatpush1.msra.mxu0 %v2562
    %2650 = vmatprep.subr.mxu0 0.0
    %2651 = vmatpush1.msra.mxu0 %v2563
    %2652 = vmatprep.subr.mxu0 0.0
    %2653 = vmatpush1.msra.mxu0 0.0
    %2654 = vmatprep.subr.mxu0 0.0
    %2655 = vmatpush1.msra.mxu0 0.0
    %2656 = vmatprep.subr.mxu0 0.0
    %2657 = vmatpush1.msra.mxu0 0.0
    %2658 = vmatprep.subr.mxu0 0.0
    %2659 = vmatpush1.msra.mxu0 0.0
    %2660 = vmatprep.subr.mxu0 0.0
    %2661 = vmatpush1.msra.mxu0 0.0
    %2662 = vmatprep.subr.mxu0 0.0
    %2663 = vmatpush1.msra.mxu0 0.0
    %2664 = vmatprep.subr.mxu0 0.0
    %2665 = vmatpush1.msra.mxu0 0.0
    %2666 = vmatprep.subr.mxu0 0.0
    %2667 = vmatpush1.msra.mxu0 0.0
    %2668 = vmatprep.subr.mxu0 0.0
    %2669 = vmatpush1.msra.mxu0 0.0
    %2670 = vmatprep.subr.mxu0 0.0
    %2671 = vmatpush1.msra.mxu0 0.0
    %2672 = vmatprep.subr.mxu0 0.0
    %2673 = vmatpush1.msra.mxu0 0.0
    %2674 = vmatprep.subr.mxu0 0.0
    %2675 = vmatpush1.msra.mxu0 0.0
    %2676 = vmatprep.subr.mxu0 0.0
    %2677 = vmatpush1.msra.mxu0 0.0
    %2678 = vmatprep.subr.mxu0 0.0
    %2679 = vmatpush1.msra.mxu0 0.0
    %2680 = vmatprep.subr.mxu0 0.0
    %2681 = vmatpush1.msra.mxu0 0.0
    %2682 = vmatprep.subr.mxu0 0.0
    %2683 = vmatpush1.msra.mxu0 0.0
    %2684 = vmatprep.subr.mxu0 0.0
    %2685 = vmatpush1.msra.mxu0 0.0
    %2686 = vmatprep.subr.mxu0 0.0
    %2687 = vmatpush1.msra.mxu0 0.0
    %2688 = vmatprep.subr.mxu0 0.0
    %2689 = vmatpush1.msra.mxu0 0.0
    %2690 = vmatprep.subr.mxu0 0.0
    %2691 = vmatpush1.msra.mxu0 0.0
    %2692 = vmatprep.subr.mxu0 0.0
    %2693 = vmatpush1.msra.mxu0 0.0
    %2694 = vmatprep.subr.mxu0 0.0
    %2695 = vmatpush1.msra.mxu0 0.0
    %2696 = vmatprep.subr.mxu0 0.0
    %2697 = vmatpush1.msra.mxu0 0.0
    %2698 = vmatprep.subr.mxu0 0.0
    %2699 = vmatpush1.msra.mxu0 0.0
    %2700 = vmatprep.subr.mxu0 0.0
    %2701 = vmatpush1.msra.mxu0 0.0
    %2702 = vmatprep.subr.mxu0 0.0
    %2703 = vmatpush1.msra.mxu0 0.0
    %2704 = vmatprep.subr.mxu0 0.0
    %2705 = vmatpush1.msra.mxu0 0.0
    %2706 = vmatprep.subr.mxu0 0.0
    %2707 = vmatpush1.msra.mxu0 0.0
    %2708 = vmatprep.mubr.f32.mxu0 0.0
    %2709 = vmatmul.mubr.f32.gmra.mrb[0].mxu0 %v268
    %v2710 = vpop.f32.mrb[0].mxu0
    %v2711 = vadd.f32 0.0, %v2710
    %v2712 = vpop.f32.mrb[0].mxu0
    %2713 = vdwg.mxu0
    %v2714 = vadd.f32 %v2641, %v2711
    %v2715 = vxor.u32 %v2714, 2147483648
    %v2716 = vmul.f32 %v2715, 1.442695
    %v2717 = vpow.pop %v2716
    %v2718 = vadd.f32 %v2717, 1.0
    %v2719 = vrcp.pop %v2718
    %v2720 = vmul.f32 1.0, %v2719
    %v2721 = vtanh.pop %v2714
    %v2722 = vmul.f32 %v2720, 0.0
    %2724 = vrot.lane.b32.xlu0 %v2721, 64
    %v2725 = vpop.permute.xlu0 %2724
    %v2727 = vmul.f32 %v2720, %v2725
    %2729 = vrot.lane.b32.xlu0 %v2727, 32
    %v2730 = vpop.permute.xlu0 %2729
    %v2732 = vadd.f32 %v2722, %v2730
    %v2733 = vtanh.pop %v2732
    %2735 = vrot.lane.b32.xlu0 %v2733, 64
    %v2736 = vpop.permute.xlu0 %2735
    %v2738 = vmul.f32 %v2720, %v2736
    %2740 = vrot.lane.b32.xlu0 %v2738, 32
    %v2741 = vpop.permute.xlu0 %2740
    %v2742 = vsel %vm137, %v2741, 0
    %2744 = vmatprep.subr.mxu0 0.0
    %2745 = vmatpush1.msra.mxu0 %v2560
    %2746 = vmatprep.subr.mxu0 0.0
    %2747 = vmatpush1.msra.mxu0 %v2561
    %2748 = vmatprep.subr.mxu0 0.0
    %2749 = vmatpush1.msra.mxu0 %v2562
    %2750 = vmatprep.subr.mxu0 0.0
    %2751 = vmatpush1.msra.mxu0 %v2563
    %2752 = vmatprep.subr.mxu0 0.0
    %2753 = vmatpush1.msra.mxu0 0.0
    %2754 = vmatprep.subr.mxu0 0.0
    %2755 = vmatpush1.msra.mxu0 0.0
    %2756 = vmatprep.subr.mxu0 0.0
    %2757 = vmatpush1.msra.mxu0 0.0
    %2758 = vmatprep.subr.mxu0 0.0
    %2759 = vmatpush1.msra.mxu0 0.0
    %2760 = vmatprep.subr.mxu0 0.0
    %2761 = vmatpush1.msra.mxu0 0.0
    %2762 = vmatprep.subr.mxu0 0.0
    %2763 = vmatpush1.msra.mxu0 0.0
    %2764 = vmatprep.subr.mxu0 0.0
    %2765 = vmatpush1.msra.mxu0 0.0
    %2766 = vmatprep.subr.mxu0 0.0
    %2767 = vmatpush1.msra.mxu0 0.0
    %2768 = vmatprep.subr.mxu0 0.0
    %2769 = vmatpush1.msra.mxu0 0.0
    %2770 = vmatprep.subr.mxu0 0.0
    %2771 = vmatpush1.msra.mxu0 0.0
    %2772 = vmatprep.subr.mxu0 0.0
    %2773 = vmatpush1.msra.mxu0 0.0
    %2774 = vmatprep.subr.mxu0 0.0
    %2775 = vmatpush1.msra.mxu0 0.0
    %2776 = vmatprep.subr.mxu0 0.0
    %2777 = vmatpush1.msra.mxu0 0.0
    %2778 = vmatprep.subr.mxu0 0.0
    %2779 = vmatpush1.msra.mxu0 0.0
    %2780 = vmatprep.subr.mxu0 0.0
    %2781 = vmatpush1.msra.mxu0 0.0
    %2782 = vmatprep.subr.mxu0 0.0
    %2783 = vmatpush1.msra.mxu0 0.0
    %2784 = vmatprep.subr.mxu0 0.0
    %2785 = vmatpush1.msra.mxu0 0.0
    %2786 = vmatprep.subr.mxu0 0.0
    %2787 = vmatpush1.msra.mxu0 0.0
    %2788 = vmatprep.subr.mxu0 0.0
    %2789 = vmatpush1.msra.mxu0 0.0
    %2790 = vmatprep.subr.mxu0 0.0
    %2791 = vmatpush1.msra.mxu0 0.0
    %2792 = vmatprep.subr.mxu0 0.0
    %2793 = vmatpush1.msra.mxu0 0.0
    %2794 = vmatprep.subr.mxu0 0.0
    %2795 = vmatpush1.msra.mxu0 0.0
    %2796 = vmatprep.subr.mxu0 0.0
    %2797 = vmatpush1.msra.mxu0 0.0
    %2798 = vmatprep.subr.mxu0 0.0
    %2799 = vmatpush1.msra.mxu0 0.0
    %2800 = vmatprep.subr.mxu0 0.0
    %2801 = vmatpush1.msra.mxu0 0.0
    %2802 = vmatprep.subr.mxu0 0.0
    %2803 = vmatpush1.msra.mxu0 0.0
    %2804 = vmatprep.subr.mxu0 0.0
    %2805 = vmatpush1.msra.mxu0 0.0
    %2806 = vmatprep.subr.mxu0 0.0
    %2807 = vmatpush1.msra.mxu0 0.0
    %2808 = vmatprep.mubr.f32.mxu0 0.0
    %2809 = vmatmul.mubr.f32.gmra.mrb[0].mxu0 %v2742
    %v2810 = vpop.f32.mrb[0].mxu0
    %v2811 = vadd.f32 0.0, %v2810
    %v2812 = vpop.f32.mrb[0].mxu0
    %2813 = vdwg.mxu0
    %v2815 = vrot.slane %v2811, 6
    %v2817 = vadd.f32 %v2641, %v2815
    %v2818 = vxor.u32 %v2817, 2147483648
    %v2819 = vmul.f32 %v2818, 1.442695
    %v2820 = vpow.pop %v2819
    %v2821 = vadd.f32 %v2820, 1.0
    %v2822 = vrcp.pop %v2821
    %v2823 = vmul.f32 1.0, %v2822
    %v2824 = vtanh.pop %v2817
    %v2826 = vrot.slane %v2732, 6
    %v2828 = vmul.f32 %v2823, %v2826
    %2830 = vrot.lane.b32.xlu0 %v2824, 64
    %v2831 = vpop.permute.xlu0 %2830
    %v2833 = vmul.f32 %v2823, %v2831
    %2835 = vrot.lane.b32.xlu0 %v2833, 32
    %v2836 = vpop.permute.xlu0 %2835
    %v2838 = vadd.f32 %v2828, %v2836
    %v2839 = vtanh.pop %v2838
    %2841 = vrot.lane.b32.xlu0 %v2839, 64
    %v2842 = vpop.permute.xlu0 %2841
    %v2844 = vmul.f32 %v2823, %v2842
    %v2846 = vrot.slane %v2844, 2
    %2847 = vrot.lane.b32.xlu0 %v2846, 32
    %v2848 = vpop.permute.xlu0 %2847
    %v2849 = vsel %vm137, %v2848, 0
    %2851 = vmatprep.subr.mxu0 0.0
    %2852 = vmatpush1.msra.mxu0 %v2560
    %2853 = vmatprep.subr.mxu0 0.0
    %2854 = vmatpush1.msra.mxu0 %v2561
    %2855 = vmatprep.subr.mxu0 0.0
    %2856 = vmatpush1.msra.mxu0 %v2562
    %2857 = vmatprep.subr.mxu0 0.0
    %2858 = vmatpush1.msra.mxu0 %v2563
    %2859 = vmatprep.subr.mxu0 0.0
    %2860 = vmatpush1.msra.mxu0 0.0
    %2861 = vmatprep.subr.mxu0 0.0
    %2862 = vmatpush1.msra.mxu0 0.0
    %2863 = vmatprep.subr.mxu0 0.0
    %2864 = vmatpush1.msra.mxu0 0.0
    %2865 = vmatprep.subr.mxu0 0.0
    %2866 = vmatpush1.msra.mxu0 0.0
    %2867 = vmatprep.subr.mxu0 0.0
    %2868 = vmatpush1.msra.mxu0 0.0
    %2869 = vmatprep.subr.mxu0 0.0
    %2870 = vmatpush1.msra.mxu0 0.0
    %2871 = vmatprep.subr.mxu0 0.0
    %2872 = vmatpush1.msra.mxu0 0.0
    %2873 = vmatprep.subr.mxu0 0.0
    %2874 = vmatpush1.msra.mxu0 0.0
    %2875 = vmatprep.subr.mxu0 0.0
    %2876 = vmatpush1.msra.mxu0 0.0
    %2877 = vmatprep.subr.mxu0 0.0
    %2878 = vmatpush1.msra.mxu0 0.0
    %2879 = vmatprep.subr.mxu0 0.0
    %2880 = vmatpush1.msra.mxu0 0.0
    %2881 = vmatprep.subr.mxu0 0.0
    %2882 = vmatpush1.msra.mxu0 0.0
    %2883 = vmatprep.subr.mxu0 0.0
    %2884 = vmatpush1.msra.mxu0 0.0
    %2885 = vmatprep.subr.mxu0 0.0
    %2886 = vmatpush1.msra.mxu0 0.0
    %2887 = vmatprep.subr.mxu0 0.0
    %2888 = vmatpush1.msra.mxu0 0.0
    %2889 = vmatprep.subr.mxu0 0.0
    %2890 = vmatpush1.msra.mxu0 0.0
    %2891 = vmatprep.subr.mxu0 0.0
    %2892 = vmatpush1.msra.mxu0 0.0
    %2893 = vmatprep.subr.mxu0 0.0
    %2894 = vmatpush1.msra.mxu0 0.0
    %2895 = vmatprep.subr.mxu0 0.0
    %2896 = vmatpush1.msra.mxu0 0.0
    %2897 = vmatprep.subr.mxu0 0.0
    %2898 = vmatpush1.msra.mxu0 0.0
    %2899 = vmatprep.subr.mxu0 0.0
    %2900 = vmatpush1.msra.mxu0 0.0
    %2901 = vmatprep.subr.mxu0 0.0
    %2902 = vmatpush1.msra.mxu0 0.0
    %2903 = vmatprep.subr.mxu0 0.0
    %2904 = vmatpush1.msra.mxu0 0.0
    %2905 = vmatprep.subr.mxu0 0.0
    %2906 = vmatpush1.msra.mxu0 0.0
    %2907 = vmatprep.subr.mxu0 0.0
    %2908 = vmatpush1.msra.mxu0 0.0
    %2909 = vmatprep.subr.mxu0 0.0
    %2910 = vmatpush1.msra.mxu0 0.0
    %2911 = vmatprep.subr.mxu0 0.0
    %2912 = vmatpush1.msra.mxu0 0.0
    %2913 = vmatprep.subr.mxu0 0.0
    %2914 = vmatpush1.msra.mxu0 0.0
    %2915 = vmatprep.mubr.f32.mxu0 0.0
    %2916 = vmatmul.mubr.f32.gmra.mrb[0].mxu0 %v2849
    %v2917 = vpop.f32.mrb[0].mxu0
    %v2918 = vadd.f32 0.0, %v2917
    %v2919 = vpop.f32.mrb[0].mxu0
    %2920 = vdwg.mxu0
    %v2922 = vrot.slane %v2918, 4
    %v2924 = vadd.f32 %v2641, %v2922
    %v2925 = vxor.u32 %v2924, 2147483648
    %v2926 = vmul.f32 %v2925, 1.442695
    %v2927 = vpow.pop %v2926
    %v2928 = vadd.f32 %v2927, 1.0
    %v2929 = vrcp.pop %v2928
    %v2930 = vmul.f32 1.0, %v2929
    %v2931 = vtanh.pop %v2924
    %v2933 = vrot.slane %v2838, 6
    %v2935 = vmul.f32 %v2930, %v2933
    %2937 = vrot.lane.b32.xlu0 %v2931, 64
    %v2938 = vpop.permute.xlu0 %2937
    %v2940 = vmul.f32 %v2930, %v2938
    %2942 = vrot.lane.b32.xlu0 %v2940, 32
    %v2943 = vpop.permute.xlu0 %2942
    %v2945 = vadd.f32 %v2935, %v2943
    %v2946 = vtanh.pop %v2945
    %2948 = vrot.lane.b32.xlu0 %v2946, 64
    %v2949 = vpop.permute.xlu0 %2948
    %v2951 = vmul.f32 %v2930, %v2949
    %v2953 = vrot.slane %v2951, 4
    %2954 = vrot.lane.b32.xlu0 %v2953, 32
    %v2955 = vpop.permute.xlu0 %2954
    %v2956 = vsel %vm137, %v2955, 0
    %2958 = vmatprep.subr.mxu0 0.0
    %2959 = vmatpush1.msra.mxu0 %v2560
    %2960 = vmatprep.subr.mxu0 0.0
    %2961 = vmatpush1.msra.mxu0 %v2561
    %2962 = vmatprep.subr.mxu0 0.0
    %2963 = vmatpush1.msra.mxu0 %v2562
    %2964 = vmatprep.subr.mxu0 0.0
    %2965 = vmatpush1.msra.mxu0 %v2563
    %2966 = vmatprep.subr.mxu0 0.0
    %2967 = vmatpush1.msra.mxu0 0.0
    %2968 = vmatprep.subr.mxu0 0.0
    %2969 = vmatpush1.msra.mxu0 0.0
    %2970 = vmatprep.subr.mxu0 0.0
    %2971 = vmatpush1.msra.mxu0 0.0
    %2972 = vmatprep.subr.mxu0 0.0
    %2973 = vmatpush1.msra.mxu0 0.0
    %2974 = vmatprep.subr.mxu0 0.0
    %2975 = vmatpush1.msra.mxu0 0.0
    %2976 = vmatprep.subr.mxu0 0.0
    %2977 = vmatpush1.msra.mxu0 0.0
    %2978 = vmatprep.subr.mxu0 0.0
    %2979 = vmatpush1.msra.mxu0 0.0
    %2980 = vmatprep.subr.mxu0 0.0
    %2981 = vmatpush1.msra.mxu0 0.0
    %2982 = vmatprep.subr.mxu0 0.0
    %2983 = vmatpush1.msra.mxu0 0.0
    %2984 = vmatprep.subr.mxu0 0.0
    %2985 = vmatpush1.msra.mxu0 0.0
    %2986 = vmatprep.subr.mxu0 0.0
    %2987 = vmatpush1.msra.mxu0 0.0
    %2988 = vmatprep.subr.mxu0 0.0
    %2989 = vmatpush1.msra.mxu0 0.0
    %2990 = vmatprep.subr.mxu0 0.0
    %2991 = vmatpush1.msra.mxu0 0.0
    %2992 = vmatprep.subr.mxu0 0.0
    %2993 = vmatpush1.msra.mxu0 0.0
    %2994 = vmatprep.subr.mxu0 0.0
    %2995 = vmatpush1.msra.mxu0 0.0
    %2996 = vmatprep.subr.mxu0 0.0
    %2997 = vmatpush1.msra.mxu0 0.0
    %2998 = vmatprep.subr.mxu0 0.0
    %2999 = vmatpush1.msra.mxu0 0.0
    %3000 = vmatprep.subr.mxu0 0.0
    %3001 = vmatpush1.msra.mxu0 0.0
    %3002 = vmatprep.subr.mxu0 0.0
    %3003 = vmatpush1.msra.mxu0 0.0
    %3004 = vmatprep.subr.mxu0 0.0
    %3005 = vmatpush1.msra.mxu0 0.0
    %3006 = vmatprep.subr.mxu0 0.0
    %3007 = vmatpush1.msra.mxu0 0.0
    %3008 = vmatprep.subr.mxu0 0.0
    %3009 = vmatpush1.msra.mxu0 0.0
    %3010 = vmatprep.subr.mxu0 0.0
    %3011 = vmatpush1.msra.mxu0 0.0
    %3012 = vmatprep.subr.mxu0 0.0
    %3013 = vmatpush1.msra.mxu0 0.0
    %3014 = vmatprep.subr.mxu0 0.0
    %3015 = vmatpush1.msra.mxu0 0.0
    %3016 = vmatprep.subr.mxu0 0.0
    %3017 = vmatpush1.msra.mxu0 0.0
    %3018 = vmatprep.subr.mxu0 0.0
    %3019 = vmatpush1.msra.mxu0 0.0
    %3020 = vmatprep.subr.mxu0 0.0
    %3021 = vmatpush1.msra.mxu0 0.0
    %3022 = vmatprep.mubr.f32.mxu0 0.0
    %3023 = vmatmul.mubr.f32.gmra.mrb[0].mxu0 %v2956
    %v3024 = vpop.f32.mrb[0].mxu0
    %v3025 = vadd.f32 0.0, %v3024
    %v3026 = vpop.f32.mrb[0].mxu0
    %3027 = vdwg.mxu0
    %v3029 = vrot.slane %v3025, 2
    %v3031 = vadd.f32 %v2641, %v3029
    %v3032 = vxor.u32 %v3031, 2147483648
    %v3033 = vmul.f32 %v3032, 1.442695
    %v3034 = vpow.pop %v3033
    %v3035 = vadd.f32 %v3034, 1.0
    %v3036 = vrcp.pop %v3035
    %v3037 = vmul.f32 1.0, %v3036
    %v3038 = vtanh.pop %v3031
    %v3040 = vrot.slane %v2945, 6
    %v3042 = vmul.f32 %v3037, %v3040
    %3044 = vrot.lane.b32.xlu0 %v3038, 64
    %v3045 = vpop.permute.xlu0 %3044
    %v3047 = vmul.f32 %v3037, %v3045
    %3049 = vrot.lane.b32.xlu0 %v3047, 32
    %v3050 = vpop.permute.xlu0 %3049
    %v3052 = vadd.f32 %v3042, %v3050
    %v3053 = vtanh.pop %v3052
    %3055 = vrot.lane.b32.xlu0 %v3053, 64
    %v3056 = vpop.permute.xlu0 %3055
    %v3058 = vmul.f32 %v3037, %v3056
    %3059 = vst.msk [vmem:[#allocation12 - $0x6] sm:$0xc0] %vm2553, %v2551
    %3061 = vrot.lane.b32.xlu0 %v2542, 96
    %v3062 = vpop.permute.xlu0 %3061
    %3064 = vst.msk [vmem:[#allocation13 - $0x6] sm:$0xc0] %vm2553, %v3062
    %3066 = vrot.lane.b32.xlu0 %v3058, 32
    %v3067 = vpop.permute.xlu0 %3066
    %3069 = vst.msk [vmem:[#allocation12 - $0x4] sm:$0xc0] %vm2553, %v3067
    %3071 = vrot.lane.b32.xlu0 %v3052, 96
    %v3072 = vpop.permute.xlu0 %3071
    %3074 = vst.msk [vmem:[#allocation13 - $0x4] sm:$0xc0] %vm2553, %v3072
    // Predicated region
    $region74: #{tpu_custom_call.1} parent=1 // pred_check
      _
    $region75: #{tpu_custom_call.1} parent=1 // pred_check_branch
      %3076 = sbr.rel (0) target = $region77
    $region76: #{tpu_custom_call.1} parent=1 // pred_region
      %s3078 = ssub.s32 64, 64
      %3079 = vsyncadd [#allocation5], %s3078
      %s3081 = sshll.u32 [#allocation12], 4
      %s3082 = int_to_ptr.vmem [resolvable:$true] %s3081
      %3084 = dma.vmem_to_hbm [thread:$0]  %s3082, 64, %s13, [#allocation5]
    $region77: #{tpu_custom_call.1} parent=1 // pred_fallthru
      _
    // Predicated region
    $region78: #{tpu_custom_call.1} parent=1 // pred_check
      _
    $region79: #{tpu_custom_call.1} parent=1 // pred_check_branch
      %3086 = sbr.rel (0) target = $region81
    $region80: #{tpu_custom_call.1} parent=1 // pred_region
      %s3088 = ssub.s32 64, 64
      %3089 = vsyncadd [#allocation14], %s3088
      %s3091 = sshll.u32 [#allocation13], 4
      %s3092 = int_to_ptr.vmem [resolvable:$true] %s3091
      %3094 = dma.vmem_to_hbm [thread:$0]  %s3092, 64, %s14, [#allocation14]
    $region81: #{tpu_custom_call.1} parent=1 // pred_fallthru
      _
    // Predicated region
    $region82: #{tpu_custom_call.1} parent=1 // pred_check
      _
    $region83: #{tpu_custom_call.1} parent=1 // pred_check_branch
      %3096 = sbr.rel (0) target = $region85
    $region84: #{tpu_custom_call.1} parent=1 // pred_region
      %3097 = dma.done [#allocation5], 64
    $region85: #{tpu_custom_call.1} parent=1 // pred_fallthru
      _
    // Predicated region
    $region86: #{tpu_custom_call.1} parent=1 // pred_check
      _
    $region87: #{tpu_custom_call.1} parent=1 // pred_check_branch
      %3099 = sbr.rel (0) target = $region89
    $region88: #{tpu_custom_call.1} parent=1 // pred_region
      %3100 = dma.done [#allocation14], 64
    $region89: #{tpu_custom_call.1} parent=1 // pred_fallthru
      _
    %3101 = vsyncpa [#allocation4], 1
    %3102 = vsyncpa [#allocation7], 1
    %3103 = vsyncpa [#allocation10], 1
    %3104 = vsyncpa [#allocation5], 1
    %3105 = vsyncpa [#allocation14], 1

</llo_original>
